<compile_context>
chip_gen: v6e
topology: v6e:2x2x1
jax: 0.10.0
libtpu: 0.0.40
codegen_flags: <defaults>
</compile_context>

<pallas_src>
import functools

import jax
import jax.numpy as jnp
from jax.experimental import pallas as pl
from jax.experimental.pallas import tpu as pltpu

_EPS = 1e-5


def _invert_block_kernel(
    xpad_ref,   # (H+2, W+2, Cn)  reflect-padded input (batch dim squeezed)
    w1_ref,     # (9*Cn, Cf)      conv1 weights, tap-major rows, BN1 scale folded in
    b1_ref,     # (1, Cf)         folded BN1 bias
    w2_ref,     # (9*Cf, Cn)      conv2 weights, BN2 scale folded in
    b2_ref,     # (1, Cn)         folded BN2 bias
    out_ref,    # (H, W, Cn)
    *,
    H, W, Cn, Cf, relu_out,
):
    # ---- conv1: im2col (H*W, 9*Cn) @ (9*Cn, Cf) as a single MXU matmul ----
    cols1 = jnp.concatenate(
        [xpad_ref[pl.ds(dy, H), pl.ds(dx, W), :]
         for dy in range(3) for dx in range(3)],
        axis=-1,
    ).reshape(H * W, 9 * Cn)
    h1 = jnp.dot(cols1, w1_ref[...], preferred_element_type=jnp.float32)
    h1 = jnp.maximum(h1 + b1_ref[...], 0.0).reshape(H, W, Cf)   # BN1 bias + ReLU

    # ---- reflect-pad h1 by 1 in registers (PyTorch 'reflect': edge excluded) ----
    h1 = jnp.concatenate([h1[1:2], h1, h1[H - 2:H - 1]], axis=0)        # rows
    h1 = jnp.concatenate([h1[:, 1:2], h1, h1[:, W - 2:W - 1]], axis=1)  # cols

    # ---- conv2: im2col (H*W, 9*Cf) @ (9*Cf, Cn) as a single MXU matmul ----
    cols2 = jnp.concatenate(
        [h1[dy:dy + H, dx:dx + W, :] for dy in range(3) for dx in range(3)],
        axis=-1,
    ).reshape(H * W, 9 * Cf)
    h2 = jnp.dot(cols2, w2_ref[...], preferred_element_type=jnp.float32)
    h2 = h2 + b2_ref[...]                                       # BN2 bias

    # ---- identity skip: interior of the reflect-padded input is exactly x ----
    skip = xpad_ref[pl.ds(1, H), pl.ds(1, W), :].reshape(H * W, Cn)
    out = h2 + skip
    if relu_out:
        out = jnp.maximum(out, 0.0)
    out_ref[...] = out.reshape(H, W, Cn).astype(out_ref.dtype)


def _fold_bn(bn):
    scale = bn["gamma"] * jax.lax.rsqrt(bn["var"] + _EPS)
    bias = bn["beta"] - bn["mean"] * scale
    return (scale.reshape(1, -1).astype(jnp.float32),
            bias.reshape(1, -1).astype(jnp.float32))


def invert_block_pallas(x_nchw, params, relu_out=True):
    """x_nchw: (N, Cn, H, W) float32. Returns (N, Cn, H, W)."""
    N, Cn, H, W = x_nchw.shape
    Cf = params["w1"].shape[0]

    x = jnp.transpose(x_nchw, (0, 2, 3, 1)).astype(jnp.float32)          # -> NHWC
    xpad = jnp.pad(x, ((0, 0), (1, 1), (1, 1), (0, 0)), mode="reflect")

    # Fold BN into per-output-channel (scale, bias); scale goes into the weights.
    s1, b1 = _fold_bn(params["bn1"])
    s2, b2 = _fold_bn(params["bn2"])
    # OIHW -> (ky, kx, I, O) -> (9*I, O), tap-major rows, channel-minor.
    w1 = jnp.transpose(params["w1"], (2, 3, 1, 0)).reshape(9 * Cn, Cf).astype(jnp.float32) * s1
    w2 = jnp.transpose(params["w2"], (2, 3, 1, 0)).reshape(9 * Cf, Cn).astype(jnp.float32) * s2

    kernel = functools.partial(
        _invert_block_kernel, H=H, W=W, Cn=Cn, Cf=Cf, relu_out=relu_out,
    )

    # TODO(synk): for production-size images add a spatial row-block grid axis
    #             (1-row halo in the index_map) so a tile fits v7x's 64 MiB VMEM.
    out = pl.pallas_call(
        kernel,
        out_shape=jax.ShapeDtypeStruct((N, H, W, Cn), jnp.float32),
        grid=(N,),
        in_specs=[
            pl.BlockSpec((None, H + 2, W + 2, Cn), lambda n: (n, 0, 0, 0)),
            pl.BlockSpec((9 * Cn, Cf), lambda n: (0, 0)),
            pl.BlockSpec((1, Cf), lambda n: (0, 0)),
            pl.BlockSpec((9 * Cf, Cn), lambda n: (0, 0)),
            pl.BlockSpec((1, Cn), lambda n: (0, 0)),
        ],
        out_specs=pl.BlockSpec((None, H, W, Cn), lambda n: (n, 0, 0, 0)),
        compiler_params=pltpu.CompilerParams(dimension_semantics=("parallel",)),
    )(xpad, w1, b1, w2, b2)

    return jnp.transpose(out, (0, 3, 1, 2))                              # -> NCHW


# ---------------- deterministic parameter init & pure-JAX reference ----------------
def _bn_init(key, c):
    k1, k2, k3, k4 = jax.random.split(key, 4)
    return dict(
        gamma=jax.random.uniform(k1, (c,), jnp.float32, 0.5, 1.5),
        beta=jax.random.normal(k2, (c,), jnp.float32) * 0.1,
        mean=jax.random.normal(k3, (c,), jnp.float32) * 0.1,
        var=jax.random.uniform(k4, (c,), jnp.float32, 0.5, 1.5),
    )


def make_params(key, n_channels, n_features, noise_level=0.1):
    ks = jax.random.split(key, 4)
    return {
        "w1": jax.random.normal(ks[0], (n_features, n_channels, 3, 3), jnp.float32) * noise_level,
        "bn1": _bn_init(ks[1], n_features),
        "w2": jax.random.normal(ks[2], (n_channels, n_features, 3, 3), jnp.float32) * noise_level,
        "bn2": _bn_init(ks[3], n_channels),
    }


def invert_block_reference(x, p, relu_out=True):
    def conv3x3_reflect(inp, w):
        inp_p = jnp.pad(inp, ((0, 0), (0, 0), (1, 1), (1, 1)), mode="reflect")
        return jax.lax.conv_general_dilated(
            inp_p, w, (1, 1), [(0, 0), (0, 0)],
            dimension_numbers=("NCHW", "OIHW", "NCHW"))

    def bn(inp, b):
        scale = b["gamma"] / jnp.sqrt(b["var"] + _EPS)
        bias = b["beta"] - b["mean"] * scale
        return inp * scale[None, :, None, None] + bias[None, :, None, None]

    y = x
    h = jax.nn.relu(bn(conv3x3_reflect(x, p["w1"]), p["bn1"]))
    h = bn(conv3x3_reflect(h, p["w2"]), p["bn2"])
    h = h + y
    return jax.nn.relu(h) if relu_out else h


if __name__ == "__main__":
    key = jax.random.PRNGKey(0)
    kx1, kp1, kx2, kp2 = jax.random.split(key, 4)

    configs = [
        # (batch, n_channels, n_features, H, W, relu_out)
        (2, 4, 8, 16, 16, True),
        (2, 8, 16, 16, 16, False),
    ]
    keys = [(kx1, kp1), (kx2, kp2)]

    ok = True
    for (N, Cn, Cf, H, W, relu_out), (kx, kp) in zip(configs, keys):
        x = jax.random.normal(kx, (N, Cn, H, W), jnp.float32)
        params = make_params(kp, Cn, Cf)

        out = jax.block_until_ready(invert_block_pallas(x, params, relu_out))
        ref = jax.block_until_ready(invert_block_reference(x, params, relu_out))

        if out.shape != ref.shape or not jnp.allclose(out, ref, rtol=2e-2, atol=3e-2):
            ok = False
            print("MISMATCH", out.shape, ref.shape,
                  float(jnp.max(jnp.abs(out - ref))))

    if ok:
        print("KERNEL_OK")
</pallas_src>

<mosaic_0001>
module attributes {stable_mosaic.version = 11 : i64} {
  func.func @_invert_block_kernel(%arg0: i32, %arg1: memref<1x18x18x4xf32, #tpu.memory_space<vmem>>, %arg2: memref<36x8xf32, #tpu.memory_space<vmem>>, %arg3: memref<1x8xf32, #tpu.memory_space<vmem>>, %arg4: memref<72x4xf32, #tpu.memory_space<vmem>>, %arg5: memref<1x4xf32, #tpu.memory_space<vmem>>, %arg6: memref<1x16x16x4xf32, #tpu.memory_space<vmem>>) attributes {dimension_semantics = [#tpu.dimension_semantics<parallel>], iteration_bounds = array<i64: 2>, scalar_prefetch = 0 : i64, scratch_operands = 0 : i64, tpu.core_type = #tpu.core_type<tc>, window_params = [{transform_indices = @transform_0, window_bounds = array<i64: 1, 18, 18, 4>}, {pipeline_mode = #tpu.pipeline_mode<synchronous>, transform_indices = @transform_1, window_bounds = array<i64: 36, 8>}, {pipeline_mode = #tpu.pipeline_mode<synchronous>, transform_indices = @transform_2, window_bounds = array<i64: 1, 8>}, {pipeline_mode = #tpu.pipeline_mode<synchronous>, transform_indices = @transform_3, window_bounds = array<i64: 72, 4>}, {pipeline_mode = #tpu.pipeline_mode<synchronous>, transform_indices = @transform_4, window_bounds = array<i64: 1, 4>}, {transform_indices = @transform_5, window_bounds = array<i64: 1, 16, 16, 4>}]} {
    %c0 = arith.constant 0 : index
    %c0_0 = arith.constant 0 : index
    %c0_1 = arith.constant 0 : index
    %c0_2 = arith.constant 0 : index
    %0 = vector.load %arg1[%c0, %c0_0, %c0_1, %c0_2] : memref<1x18x18x4xf32, #tpu.memory_space<vmem>>, vector<1x16x16x4xf32>
    %1 = vector.shape_cast %0 : vector<1x16x16x4xf32> to vector<16x16x4xf32>
    %c0_3 = arith.constant 0 : index
    %c0_4 = arith.constant 0 : index
    %c1 = arith.constant 1 : index
    %c0_5 = arith.constant 0 : index
    %2 = vector.load %arg1[%c0_3, %c0_4, %c1, %c0_5] : memref<1x18x18x4xf32, #tpu.memory_space<vmem>>, vector<1x16x16x4xf32>
    %3 = vector.shape_cast %2 : vector<1x16x16x4xf32> to vector<16x16x4xf32>
    %c0_6 = arith.constant 0 : index
    %c0_7 = arith.constant 0 : index
    %c2 = arith.constant 2 : index
    %c0_8 = arith.constant 0 : index
    %4 = vector.load %arg1[%c0_6, %c0_7, %c2, %c0_8] : memref<1x18x18x4xf32, #tpu.memory_space<vmem>>, vector<1x16x16x4xf32>
    %5 = vector.shape_cast %4 : vector<1x16x16x4xf32> to vector<16x16x4xf32>
    %c0_9 = arith.constant 0 : index
    %c1_10 = arith.constant 1 : index
    %c0_11 = arith.constant 0 : index
    %c0_12 = arith.constant 0 : index
    %6 = vector.load %arg1[%c0_9, %c1_10, %c0_11, %c0_12] : memref<1x18x18x4xf32, #tpu.memory_space<vmem>>, vector<1x16x16x4xf32>
    %7 = vector.shape_cast %6 : vector<1x16x16x4xf32> to vector<16x16x4xf32>
    %c0_13 = arith.constant 0 : index
    %c1_14 = arith.constant 1 : index
    %c1_15 = arith.constant 1 : index
    %c0_16 = arith.constant 0 : index
    %8 = vector.load %arg1[%c0_13, %c1_14, %c1_15, %c0_16] : memref<1x18x18x4xf32, #tpu.memory_space<vmem>>, vector<1x16x16x4xf32>
    %9 = vector.shape_cast %8 : vector<1x16x16x4xf32> to vector<16x16x4xf32>
    %c0_17 = arith.constant 0 : index
    %c1_18 = arith.constant 1 : index
    %c2_19 = arith.constant 2 : index
    %c0_20 = arith.constant 0 : index
    %10 = vector.load %arg1[%c0_17, %c1_18, %c2_19, %c0_20] : memref<1x18x18x4xf32, #tpu.memory_space<vmem>>, vector<1x16x16x4xf32>
    %11 = vector.shape_cast %10 : vector<1x16x16x4xf32> to vector<16x16x4xf32>
    %c0_21 = arith.constant 0 : index
    %c2_22 = arith.constant 2 : index
    %c0_23 = arith.constant 0 : index
    %c0_24 = arith.constant 0 : index
    %12 = vector.load %arg1[%c0_21, %c2_22, %c0_23, %c0_24] : memref<1x18x18x4xf32, #tpu.memory_space<vmem>>, vector<1x16x16x4xf32>
    %13 = vector.shape_cast %12 : vector<1x16x16x4xf32> to vector<16x16x4xf32>
    %c0_25 = arith.constant 0 : index
    %c2_26 = arith.constant 2 : index
    %c1_27 = arith.constant 1 : index
    %c0_28 = arith.constant 0 : index
    %14 = vector.load %arg1[%c0_25, %c2_26, %c1_27, %c0_28] : memref<1x18x18x4xf32, #tpu.memory_space<vmem>>, vector<1x16x16x4xf32>
    %15 = vector.shape_cast %14 : vector<1x16x16x4xf32> to vector<16x16x4xf32>
    %c0_29 = arith.constant 0 : index
    %c2_30 = arith.constant 2 : index
    %c2_31 = arith.constant 2 : index
    %c0_32 = arith.constant 0 : index
    %16 = vector.load %arg1[%c0_29, %c2_30, %c2_31, %c0_32] : memref<1x18x18x4xf32, #tpu.memory_space<vmem>>, vector<1x16x16x4xf32>
    %17 = vector.shape_cast %16 : vector<1x16x16x4xf32> to vector<16x16x4xf32>
    %18 = tpu.concatenate %1, %3, %5, %7, %9, %11, %13, %15, %17 in 2 : vector<16x16x4xf32>, vector<16x16x4xf32>, vector<16x16x4xf32>, vector<16x16x4xf32>, vector<16x16x4xf32>, vector<16x16x4xf32>, vector<16x16x4xf32>, vector<16x16x4xf32>, vector<16x16x4xf32> -> vector<16x16x36xf32>
    %19 = vector.shape_cast %18 : vector<16x16x36xf32> to vector<256x36xf32>
    %c0_33 = arith.constant 0 : index
    %c0_34 = arith.constant 0 : index
    %20 = vector.load %arg2[%c0_33, %c0_34] : memref<36x8xf32, #tpu.memory_space<vmem>>, vector<36x8xf32>
    %cst = arith.constant dense<0.000000e+00> : vector<256x8xf32>
    %21 = tpu.matmul %19, %20, %cst {dimension_numbers = #tpu.dot_dimension_numbers<[1], [0], [0], [1], [0, 0, 1, 1], [], []>} : vector<256x36xf32>, vector<36x8xf32>, vector<256x8xf32> -> vector<256x8xf32>
    %c0_35 = arith.constant 0 : index
    %c0_36 = arith.constant 0 : index
    %22 = vector.load %arg3[%c0_35, %c0_36] : memref<1x8xf32, #tpu.memory_space<vmem>>, vector<1x8xf32>
    %23 = vector.broadcast %22 : vector<1x8xf32> to vector<256x8xf32>
    %24 = arith.addf %21, %23 : vector<256x8xf32>
    %cst_37 = arith.constant 0.000000e+00 : f32
    %25 = vector.broadcast %cst_37 : f32 to vector<256x8xf32>
    %26 = arith.maximumf %24, %25 : vector<256x8xf32>
    %27 = vector.shape_cast %26 : vector<256x8xf32> to vector<16x16x8xf32>
    %28 = vector.extract_strided_slice %27 {offsets = [1, 0, 0], sizes = [1, 16, 8], strides = [1, 1, 1]} : vector<16x16x8xf32> to vector<1x16x8xf32>
    %29 = vector.extract_strided_slice %27 {offsets = [14, 0, 0], sizes = [1, 16, 8], strides = [1, 1, 1]} : vector<16x16x8xf32> to vector<1x16x8xf32>
    %30 = tpu.concatenate %28, %27, %29 in 0 : vector<1x16x8xf32>, vector<16x16x8xf32>, vector<1x16x8xf32> -> vector<18x16x8xf32>
    %31 = vector.extract_strided_slice %30 {offsets = [0, 1, 0], sizes = [18, 1, 8], strides = [1, 1, 1]} : vector<18x16x8xf32> to vector<18x1x8xf32>
    %32 = vector.extract_strided_slice %30 {offsets = [0, 14, 0], sizes = [18, 1, 8], strides = [1, 1, 1]} : vector<18x16x8xf32> to vector<18x1x8xf32>
    %33 = tpu.concatenate %31, %30, %32 in 1 : vector<18x1x8xf32>, vector<18x16x8xf32>, vector<18x1x8xf32> -> vector<18x18x8xf32>
    %34 = vector.extract_strided_slice %33 {offsets = [0, 0, 0], sizes = [16, 16, 8], strides = [1, 1, 1]} : vector<18x18x8xf32> to vector<16x16x8xf32>
    %35 = vector.extract_strided_slice %33 {offsets = [0, 1, 0], sizes = [16, 16, 8], strides = [1, 1, 1]} : vector<18x18x8xf32> to vector<16x16x8xf32>
    %36 = vector.extract_strided_slice %33 {offsets = [0, 2, 0], sizes = [16, 16, 8], strides = [1, 1, 1]} : vector<18x18x8xf32> to vector<16x16x8xf32>
    %37 = vector.extract_strided_slice %33 {offsets = [1, 0, 0], sizes = [16, 16, 8], strides = [1, 1, 1]} : vector<18x18x8xf32> to vector<16x16x8xf32>
    %38 = vector.extract_strided_slice %33 {offsets = [1, 1, 0], sizes = [16, 16, 8], strides = [1, 1, 1]} : vector<18x18x8xf32> to vector<16x16x8xf32>
    %39 = vector.extract_strided_slice %33 {offsets = [1, 2, 0], sizes = [16, 16, 8], strides = [1, 1, 1]} : vector<18x18x8xf32> to vector<16x16x8xf32>
    %40 = vector.extract_strided_slice %33 {offsets = [2, 0, 0], sizes = [16, 16, 8], strides = [1, 1, 1]} : vector<18x18x8xf32> to vector<16x16x8xf32>
    %41 = vector.extract_strided_slice %33 {offsets = [2, 1, 0], sizes = [16, 16, 8], strides = [1, 1, 1]} : vector<18x18x8xf32> to vector<16x16x8xf32>
    %42 = vector.extract_strided_slice %33 {offsets = [2, 2, 0], sizes = [16, 16, 8], strides = [1, 1, 1]} : vector<18x18x8xf32> to vector<16x16x8xf32>
    %43 = tpu.concatenate %34, %35, %36, %37, %38, %39, %40, %41, %42 in 2 : vector<16x16x8xf32>, vector<16x16x8xf32>, vector<16x16x8xf32>, vector<16x16x8xf32>, vector<16x16x8xf32>, vector<16x16x8xf32>, vector<16x16x8xf32>, vector<16x16x8xf32>, vector<16x16x8xf32> -> vector<16x16x72xf32>
    %44 = vector.shape_cast %43 : vector<16x16x72xf32> to vector<256x72xf32>
    %c0_38 = arith.constant 0 : index
    %c0_39 = arith.constant 0 : index
    %45 = vector.load %arg4[%c0_38, %c0_39] : memref<72x4xf32, #tpu.memory_space<vmem>>, vector<72x4xf32>
    %cst_40 = arith.constant dense<0.000000e+00> : vector<256x4xf32>
    %46 = tpu.matmul %44, %45, %cst_40 {dimension_numbers = #tpu.dot_dimension_numbers<[1], [0], [0], [1], [0, 0, 1, 1], [], []>} : vector<256x72xf32>, vector<72x4xf32>, vector<256x4xf32> -> vector<256x4xf32>
    %c0_41 = arith.constant 0 : index
    %c0_42 = arith.constant 0 : index
    %47 = vector.load %arg5[%c0_41, %c0_42] : memref<1x4xf32, #tpu.memory_space<vmem>>, vector<1x4xf32>
    %48 = vector.broadcast %47 : vector<1x4xf32> to vector<256x4xf32>
    %49 = arith.addf %46, %48 : vector<256x4xf32>
    %c0_43 = arith.constant 0 : index
    %c1_44 = arith.constant 1 : index
    %c1_45 = arith.constant 1 : index
    %c0_46 = arith.constant 0 : index
    %50 = vector.load %arg1[%c0_43, %c1_44, %c1_45, %c0_46] : memref<1x18x18x4xf32, #tpu.memory_space<vmem>>, vector<1x16x16x4xf32>
    %51 = vector.shape_cast %50 : vector<1x16x16x4xf32> to vector<16x16x4xf32>
    %52 = vector.shape_cast %51 : vector<16x16x4xf32> to vector<256x4xf32>
    %53 = arith.addf %49, %52 : vector<256x4xf32>
    %cst_47 = arith.constant 0.000000e+00 : f32
    %54 = vector.broadcast %cst_47 : f32 to vector<256x4xf32>
    %55 = arith.maximumf %53, %54 : vector<256x4xf32>
    %56 = vector.shape_cast %55 : vector<256x4xf32> to vector<16x16x4xf32>
    %c0_48 = arith.constant 0 : index
    %c0_49 = arith.constant 0 : index
    %c0_50 = arith.constant 0 : index
    %c0_51 = arith.constant 0 : index
    %57 = vector.load %arg6[%c0_48, %c0_49, %c0_50, %c0_51] : memref<1x16x16x4xf32, #tpu.memory_space<vmem>>, vector<1x16x16x4xf32>
    %58 = vector.shape_cast %57 : vector<1x16x16x4xf32> to vector<16x16x4xf32>
    %59 = vector.shape_cast %56 : vector<16x16x4xf32> to vector<1x16x16x4xf32>
    tpu.vector_store %arg6[%c0_48, %c0_49, %c0_50, %c0_51], %59 {strides = array<i32>} : memref<1x16x16x4xf32, #tpu.memory_space<vmem>>, vector<1x16x16x4xf32>,
    return
  }
  func.func @transform_0(%arg0: i32) -> (i32, i32, i32, i32) {
    %c0_i32 = arith.constant 0 : i32
    %c0_i32_0 = arith.constant 0 : i32
    %c0_i32_1 = arith.constant 0 : i32
    %c0_i32_2 = arith.constant 0 : i32
    return %arg0, %c0_i32, %c0_i32_0, %c0_i32_1 : i32, i32, i32, i32
  }
  func.func @transform_1(%arg0: i32) -> (i32, i32) {
    %c0_i32 = arith.constant 0 : i32
    %c0_i32_0 = arith.constant 0 : i32
    %c0_i32_1 = arith.constant 0 : i32
    return %c0_i32, %c0_i32_0 : i32, i32
  }
  func.func @transform_2(%arg0: i32) -> (i32, i32) {
    %c0_i32 = arith.constant 0 : i32
    %c0_i32_0 = arith.constant 0 : i32
    %c0_i32_1 = arith.constant 0 : i32
    return %c0_i32, %c0_i32_0 : i32, i32
  }
  func.func @transform_3(%arg0: i32) -> (i32, i32) {
    %c0_i32 = arith.constant 0 : i32
    %c0_i32_0 = arith.constant 0 : i32
    %c0_i32_1 = arith.constant 0 : i32
    return %c0_i32, %c0_i32_0 : i32, i32
  }
  func.func @transform_4(%arg0: i32) -> (i32, i32) {
    %c0_i32 = arith.constant 0 : i32
    %c0_i32_0 = arith.constant 0 : i32
    %c0_i32_1 = arith.constant 0 : i32
    return %c0_i32, %c0_i32_0 : i32, i32
  }
  func.func @transform_5(%arg0: i32) -> (i32, i32, i32, i32) {
    %c0_i32 = arith.constant 0 : i32
    %c0_i32_0 = arith.constant 0 : i32
    %c0_i32_1 = arith.constant 0 : i32
    %c0_i32_2 = arith.constant 0 : i32
    return %arg0, %c0_i32, %c0_i32_0, %c0_i32_1 : i32, i32, i32, i32
  }
}

</mosaic_0001>

<llo_original>
// kernel: tpu_custom_call.1
$region0: #{tpu_custom_call.1}
  #allocation0 [shape = 'u32[]', space=smem, size = 0x4, offset = 0x4, fixed_abs, tag = 'smem constant byte address 0x4 - core index']
  #allocation1 [shape = 'u32[144,128]{1,0:T(1,128)}', space=vmem, size = 0x12000, scoped, tag = 'internal scratch']
  %s0 = inlined_call_operand.vmem [shape: f32[2,18,18,4], index: 0, kind: input, shape index: {}]
  %s1 = inlined_call_operand.vmem [shape: f32[36,8], index: 1, kind: input, shape index: {}]
  %s2 = inlined_call_operand.vmem [shape: f32[1,8], index: 2, kind: input, shape index: {}]
  %s3 = inlined_call_operand.vmem [shape: f32[72,4], index: 3, kind: input, shape index: {}]
  %s4 = inlined_call_operand.vmem [shape: f32[1,4], index: 4, kind: input, shape index: {}]
  %s5 = inlined_call_operand.vmem [shape: f32[2,16,16,4], index: 5, kind: output, shape index: {}]
  %s6 = sld [smem:[#allocation0]]
  $region53: #{tpu_custom_call.1} parent=0
    _
  %s8 = ssub.s32 1, %s6
  %s9 = scalar_select 0, %s8, %s6
  loop: start=0, step=1, limit=4
  $region2: #{tpu_custom_call.1} parent=0 // loop_pre_header
    _
  $region3: #{tpu_custom_call.1} parent=0 // loop_header
    %s11 = sphi 0, %s15
    %p12 = scmp.ge.s32.totalorder %s11, 4
    %s21 = sphi 0, %s23
    %s24 = sphi 0, %s21
    %s25 = sphi 0, %s24
    %s41 = sphi 0, %s25
    %s45 = sphi 0, %s45
    %s47 = sphi 0, %s45
    %s48 = sphi 0, %s47
    %s62 = sphi 0, %s48
    %s66 = sphi 0, %s66
    %s68 = sphi 0, %s66
    %s69 = sphi 0, %s68
    %s83 = sphi 0, %s69
    %s87 = sphi 0, %s87
    %s89 = sphi 0, %s87
    %s90 = sphi 0, %s89
    %s104 = sphi 0, %s90
    %s108 = sphi 0, %s108
    %s110 = sphi 0, %s108
    %s111 = sphi 0, %s110
    %s125 = sphi 0, %s111
    %s131 = sphi 0, %s133
    %s134 = sphi 0, %s131
    %s135 = sphi 0, %s134
    %s151 = sphi 0, %s135
  $region4: #{tpu_custom_call.1} parent=0 // loop_header_branch
    %14 = sbr.rel (%p12) target = $region8
  $region5: #{tpu_custom_call.1} parent=0 // loop_body
    %s16 = ssub.s32 %s11, 1
    %s17 = ssub.s32 %s11, 2
    %s18 = sadd.s32 %s11, 1
    %s19 = ssub.s32 %s11, %s18
    %p20 = scmp.eq.s32.totalorder %s19, 0
    %s22 = sadd.s32 %s21, 1
    %s23 = scalar_select %p20, %s21, %s22
    %p26 = pneg %p20
    %p27 = scmp.eq.s32.totalorder %s11, 1
    %p28 = por %p26, %p27
    %p29 = scmp.ne.s32.totalorder %s21, %s24
    %p30 = scmp.eq.s32.totalorder %s11, 0
    %p31 = por %p29, %p30
    %p32 = scmp.ne.s32.totalorder %s21, %s24
    %p33 = scmp.eq.s32.totalorder %s16, 1
    %p34 = por %p32, %p33
    %p35 = scmp.ne.s32.totalorder %s24, %s25
    %p36 = scmp.eq.s32.totalorder %s16, 0
    %p37 = por %p35, %p36
    %p38 = scmp.ne.s32.totalorder %s24, %s25
    %p39 = scmp.eq.s32.totalorder %s17, 1
    %p40 = por %p38, %p39
    %p42 = scmp.ne.s32.totalorder %s25, %s41
    %p43 = scmp.eq.s32.totalorder %s17, 0
    %p44 = por %p42, %p43
    %s46 = sadd.s32 %s45, 1
    %p49 = scmp.eq.s32.totalorder %s11, 1
    %p50 = scmp.ne.s32.totalorder %s45, %s47
    %p51 = scmp.eq.s32.totalorder %s11, 0
    %p52 = por %p50, %p51
    %p53 = scmp.ne.s32.totalorder %s45, %s47
    %p54 = scmp.eq.s32.totalorder %s16, 1
    %p55 = por %p53, %p54
    %p56 = scmp.ne.s32.totalorder %s47, %s48
    %p57 = scmp.eq.s32.totalorder %s16, 0
    %p58 = por %p56, %p57
    %p59 = scmp.ne.s32.totalorder %s47, %s48
    %p60 = scmp.eq.s32.totalorder %s17, 1
    %p61 = por %p59, %p60
    %p63 = scmp.ne.s32.totalorder %s48, %s62
    %p64 = scmp.eq.s32.totalorder %s17, 0
    %p65 = por %p63, %p64
    %s67 = sadd.s32 %s66, 1
    %p70 = scmp.eq.s32.totalorder %s11, 1
    %p71 = scmp.ne.s32.totalorder %s66, %s68
    %p72 = scmp.eq.s32.totalorder %s11, 0
    %p73 = por %p71, %p72
    %p74 = scmp.ne.s32.totalorder %s66, %s68
    %p75 = scmp.eq.s32.totalorder %s16, 1
    %p76 = por %p74, %p75
    %p77 = scmp.ne.s32.totalorder %s68, %s69
    %p78 = scmp.eq.s32.totalorder %s16, 0
    %p79 = por %p77, %p78
    %p80 = scmp.ne.s32.totalorder %s68, %s69
    %p81 = scmp.eq.s32.totalorder %s17, 1
    %p82 = por %p80, %p81
    %p84 = scmp.ne.s32.totalorder %s69, %s83
    %p85 = scmp.eq.s32.totalorder %s17, 0
    %p86 = por %p84, %p85
    %s88 = sadd.s32 %s87, 1
    %p91 = scmp.eq.s32.totalorder %s11, 1
    %p92 = scmp.ne.s32.totalorder %s87, %s89
    %p93 = scmp.eq.s32.totalorder %s11, 0
    %p94 = por %p92, %p93
    %p95 = scmp.ne.s32.totalorder %s87, %s89
    %p96 = scmp.eq.s32.totalorder %s16, 1
    %p97 = por %p95, %p96
    %p98 = scmp.ne.s32.totalorder %s89, %s90
    %p99 = scmp.eq.s32.totalorder %s16, 0
    %p100 = por %p98, %p99
    %p101 = scmp.ne.s32.totalorder %s89, %s90
    %p102 = scmp.eq.s32.totalorder %s17, 1
    %p103 = por %p101, %p102
    %p105 = scmp.ne.s32.totalorder %s90, %s104
    %p106 = scmp.eq.s32.totalorder %s17, 0
    %p107 = por %p105, %p106
    %s109 = sadd.s32 %s108, 1
    %p112 = scmp.eq.s32.totalorder %s11, 1
    %p113 = scmp.ne.s32.totalorder %s108, %s110
    %p114 = scmp.eq.s32.totalorder %s11, 0
    %p115 = por %p113, %p114
    %p116 = scmp.ne.s32.totalorder %s108, %s110
    %p117 = scmp.eq.s32.totalorder %s16, 1
    %p118 = por %p116, %p117
    %p119 = scmp.ne.s32.totalorder %s110, %s111
    %p120 = scmp.eq.s32.totalorder %s16, 0
    %p121 = por %p119, %p120
    %p122 = scmp.ne.s32.totalorder %s110, %s111
    %p123 = scmp.eq.s32.totalorder %s17, 1
    %p124 = por %p122, %p123
    %p126 = scmp.ne.s32.totalorder %s111, %s125
    %p127 = scmp.eq.s32.totalorder %s17, 0
    %p128 = por %p126, %p127
    %s129 = ssub.s32 %s11, %s18
    %p130 = scmp.eq.s32.totalorder %s129, 0
    %s132 = sadd.s32 %s131, 1
    %s133 = scalar_select %p130, %s131, %s132
    %p136 = pneg %p130
    %p137 = scmp.eq.s32.totalorder %s11, 1
    %p138 = por %p136, %p137
    %p139 = scmp.ne.s32.totalorder %s131, %s134
    %p140 = scmp.eq.s32.totalorder %s11, 0
    %p141 = por %p139, %p140
    %p142 = scmp.ne.s32.totalorder %s131, %s134
    %p143 = scmp.eq.s32.totalorder %s16, 1
    %p144 = por %p142, %p143
    %p145 = scmp.ne.s32.totalorder %s134, %s135
    %p146 = scmp.eq.s32.totalorder %s16, 0
    %p147 = por %p145, %p146
    %p148 = scmp.ne.s32.totalorder %s134, %s135
    %p149 = scmp.eq.s32.totalorder %s17, 1
    %p150 = por %p148, %p149
    %p152 = scmp.ne.s32.totalorder %s135, %s151
    %p153 = scmp.eq.s32.totalorder %s17, 0
    %p154 = por %p152, %p153
    %p155 = scmp.le.s32.totalorder 1, %s11
    %p156 = scmp.lt.s32.totalorder %s11, 3
    %p157 = pnand %p155, %p156
    %p158 = pneg %p157
    // Predicated region
    $region9: #{tpu_custom_call.1} parent=5 // pred_check
      _
    $region10: #{tpu_custom_call.1} parent=5 // pred_check_branch
      %160 = sbr.rel (%p157) target = $region12
    $region11: #{tpu_custom_call.1} parent=5 // pred_region
      %s161 = ssub.s32 %s11, 1
      // Predicated region
      $region13: #{tpu_custom_call.1} parent=11 // pred_check
        %p162 = pneg %p58
      $region14: #{tpu_custom_call.1} parent=11 // pred_check_branch
        %164 = sbr.rel (%p162) target = $region16
      $region15: #{tpu_custom_call.1} parent=11 // pred_region
        _
      $region16: #{tpu_custom_call.1} parent=11 // pred_fallthru
        _
      // Predicated region
      $region17: #{tpu_custom_call.1} parent=11 // pred_check
        %p165 = pneg %p79
      $region18: #{tpu_custom_call.1} parent=11 // pred_check_branch
        %167 = sbr.rel (%p165) target = $region20
      $region19: #{tpu_custom_call.1} parent=11 // pred_region
        _
      $region20: #{tpu_custom_call.1} parent=11 // pred_fallthru
        _
      // Predicated region
      $region21: #{tpu_custom_call.1} parent=11 // pred_check
        %p168 = pneg %p100
      $region22: #{tpu_custom_call.1} parent=11 // pred_check_branch
        %170 = sbr.rel (%p168) target = $region24
      $region23: #{tpu_custom_call.1} parent=11 // pred_region
        _
      $region24: #{tpu_custom_call.1} parent=11 // pred_fallthru
        _
      // Predicated region
      $region25: #{tpu_custom_call.1} parent=11 // pred_check
        %p171 = pneg %p121
      $region26: #{tpu_custom_call.1} parent=11 // pred_check_branch
        %173 = sbr.rel (%p171) target = $region28
      $region27: #{tpu_custom_call.1} parent=11 // pred_region
        _
      $region28: #{tpu_custom_call.1} parent=11 // pred_fallthru
        _
    $region12: #{tpu_custom_call.1} parent=5 // pred_fallthru
      _
    %p174 = scmp.lt.s32.totalorder %s11, 2
    // Predicated region
    $region29: #{tpu_custom_call.1} parent=5 // pred_check
      %p175 = pneg %p174
    $region30: #{tpu_custom_call.1} parent=5 // pred_check_branch
      %177 = sbr.rel (%p175) target = $region32
    $region31: #{tpu_custom_call.1} parent=5 // pred_region
      // Predicated region
      $region33: #{tpu_custom_call.1} parent=31 // pred_check
        %p178 = pneg %p31
      $region34: #{tpu_custom_call.1} parent=31 // pred_check_branch
        %180 = sbr.rel (%p178) target = $region36
      $region35: #{tpu_custom_call.1} parent=31 // pred_region
        %p181 = scmp.lt.s32.totalorder %s11, 1
        %s182 = scalar_select %p181, %s11, 1
        %s183 = smul.addr %s182, 54
        %s184 = smul.addr %s183, 8
        %s185 = scalar_lea.vmem %s0, %s184
      $region36: #{tpu_custom_call.1} parent=31 // pred_fallthru
        _
    $region32: #{tpu_custom_call.1} parent=5 // pred_fallthru
      _
    %p186 = scmp.le.s32.totalorder 1, %s11
    %p187 = scmp.lt.s32.totalorder %s11, 3
    %p188 = pnand %p186, %p187
    %p189 = pneg %p188
    // Predicated region
    $region37: #{tpu_custom_call.1} parent=5 // pred_check
      _
    $region38: #{tpu_custom_call.1} parent=5 // pred_check_branch
      %191 = sbr.rel (%p188) target = $region40
    $region39: #{tpu_custom_call.1} parent=5 // pred_region
      %s192 = ssub.s32 %s11, 1
      %p193 = scmp.lt.s32.totalorder %s16, 1
      %s194 = scalar_select %p193, %s16, 1
      %s195 = smul.addr %s194, 54
      %s196 = smul.addr %s195, 8
      %s197 = scalar_lea.vmem %s0, %s196
      %p198 = pneg %p37
      %p199 = pneg %p34
      %p200 = pneg %p58
      %p201 = pneg %p55
      %p202 = pneg %p79
      %p203 = pneg %p76
      %p204 = pneg %p100
      %p205 = pneg %p97
      %p206 = pneg %p121
      %p207 = pneg %p118
      %p208 = pneg %p147
      %p209 = pneg %p144
      %p210 = scmp.lt.s32.totalorder %s16, 1
      %s211 = scalar_select %p210, %s16, 1
      %s212 = smul.addr %s211, 32
      %s213 = smul.addr %s212, 8
      %s214 = scalar_lea.vmem %s5, %s213
      %p215 = scmp.lt.s32.totalorder %s16, 1
      %s216 = scalar_select %p215, %s16, 1
      %s217 = smul.addr %s216, 54
      %s218 = smul.addr %s217, 8
      %s219 = scalar_lea.vmem %s0, %s218
      %p220 = scmp.lt.s32.totalorder %s16, 1
      %s221 = scalar_select %p220, %s16, 1
      %s222 = smul.addr %s221, 32
      %s223 = smul.addr %s222, 8
      %s224 = scalar_lea.vmem %s5, %s223
      %v225 = vld [vmem:[%s219] sm:$0xff]
      %v226 = vld [vmem:[%s219 + $0x8] sm:$0xff]
      %v227 = vld [vmem:[%s219 + $0x18] sm:$0xff]
      %v228 = vld [vmem:[%s219 + $0x20] sm:$0xff]
      %v229 = vld [vmem:[%s219 + $0x30] sm:$0xff]
      %v230 = vld [vmem:[%s219 + $0x38] sm:$0xff]
      %v231 = vld [vmem:[%s219 + $0x48] sm:$0xff]
      %v232 = vld [vmem:[%s219 + $0x50] sm:$0xff]
      %v233 = vld [vmem:[%s219 + $0x60] sm:$0xff]
      %v234 = vld [vmem:[%s219 + $0x68] sm:$0xff]
      %v235 = vld [vmem:[%s219 + $0x78] sm:$0xff]
      %v236 = vld [vmem:[%s219 + $0x80] sm:$0xff]
      %v237 = vld [vmem:[%s219 + $0x90] sm:$0xff]
      %v238 = vld [vmem:[%s219 + $0x98] sm:$0xff]
      %v239 = vld [vmem:[%s219 + $0xa8] sm:$0xff]
      %v240 = vld [vmem:[%s219 + $0xb0] sm:$0xff]
      %v241 = vld [vmem:[%s219 + $0xc0] sm:$0xff]
      %v242 = vld [vmem:[%s219 + $0xc8] sm:$0xff]
      %v243 = vld [vmem:[%s219 + $0xd8] sm:$0xff]
      %v244 = vld [vmem:[%s219 + $0xe0] sm:$0xff]
      %v245 = vld [vmem:[%s219 + $0xf0] sm:$0xff]
      %v246 = vld [vmem:[%s219 + $0xf8] sm:$0xff]
      %v247 = vld [vmem:[%s219 + $0x108] sm:$0xff]
      %v248 = vld [vmem:[%s219 + $0x110] sm:$0xff]
      %v249 = vld [vmem:[%s219 + $0x120] sm:$0xff]
      %v250 = vld [vmem:[%s219 + $0x128] sm:$0xff]
      %v251 = vld [vmem:[%s219 + $0x138] sm:$0xff]
      %v252 = vld [vmem:[%s219 + $0x140] sm:$0xff]
      %v253 = vld [vmem:[%s219 + $0x150] sm:$0xff]
      %v254 = vld [vmem:[%s219 + $0x158] sm:$0xff]
      %v255 = vld [vmem:[%s219 + $0x168] sm:$0xff]
      %v256 = vld [vmem:[%s219 + $0x170] sm:$0xff]
      %v257 = vld [vmem:[%s219 + $0x1] sm:$0xff]
      %v258 = vld [vmem:[%s219 + $0x9] sm:$0xff]
      %v259 = vld [vmem:[%s219 + $0x19] sm:$0xff]
      %v260 = vld [vmem:[%s219 + $0x21] sm:$0xff]
      %v261 = vld [vmem:[%s219 + $0x31] sm:$0xff]
      %v262 = vld [vmem:[%s219 + $0x39] sm:$0xff]
      %v263 = vld [vmem:[%s219 + $0x49] sm:$0xff]
      %v264 = vld [vmem:[%s219 + $0x51] sm:$0xff]
      %v265 = vld [vmem:[%s219 + $0x61] sm:$0xff]
      %v266 = vld [vmem:[%s219 + $0x69] sm:$0xff]
      %v267 = vld [vmem:[%s219 + $0x79] sm:$0xff]
      %v268 = vld [vmem:[%s219 + $0x81] sm:$0xff]
      %v269 = vld [vmem:[%s219 + $0x91] sm:$0xff]
      %v270 = vld [vmem:[%s219 + $0x99] sm:$0xff]
      %v271 = vld [vmem:[%s219 + $0xa9] sm:$0xff]
      %v272 = vld [vmem:[%s219 + $0xb1] sm:$0xff]
      %v273 = vld [vmem:[%s219 + $0xc1] sm:$0xff]
      %v274 = vld [vmem:[%s219 + $0xc9] sm:$0xff]
      %v275 = vld [vmem:[%s219 + $0xd9] sm:$0xff]
      %v276 = vld [vmem:[%s219 + $0xe1] sm:$0xff]
      %v277 = vld [vmem:[%s219 + $0xf1] sm:$0xff]
      %v278 = vld [vmem:[%s219 + $0xf9] sm:$0xff]
      %v279 = vld [vmem:[%s219 + $0x109] sm:$0xff]
      %v280 = vld [vmem:[%s219 + $0x111] sm:$0xff]
      %v281 = vld [vmem:[%s219 + $0x121] sm:$0xff]
      %v282 = vld [vmem:[%s219 + $0x129] sm:$0xff]
      %v283 = vld [vmem:[%s219 + $0x139] sm:$0xff]
      %v284 = vld [vmem:[%s219 + $0x141] sm:$0xff]
      %v285 = vld [vmem:[%s219 + $0x151] sm:$0xff]
      %v286 = vld [vmem:[%s219 + $0x159] sm:$0xff]
      %v287 = vld [vmem:[%s219 + $0x169] sm:$0xff]
      %v288 = vld [vmem:[%s219 + $0x171] sm:$0xff]
      %v289 = vld [vmem:[%s219 + $0x2] sm:$0xff]
      %v290 = vld [vmem:[%s219 + $0xa] sm:$0xff]
      %v291 = vld [vmem:[%s219 + $0x1a] sm:$0xff]
      %v292 = vld [vmem:[%s219 + $0x22] sm:$0xff]
      %v293 = vld [vmem:[%s219 + $0x32] sm:$0xff]
      %v294 = vld [vmem:[%s219 + $0x3a] sm:$0xff]
      %v295 = vld [vmem:[%s219 + $0x4a] sm:$0xff]
      %v296 = vld [vmem:[%s219 + $0x52] sm:$0xff]
      %v297 = vld [vmem:[%s219 + $0x62] sm:$0xff]
      %v298 = vld [vmem:[%s219 + $0x6a] sm:$0xff]
      %v299 = vld [vmem:[%s219 + $0x7a] sm:$0xff]
      %v300 = vld [vmem:[%s219 + $0x82] sm:$0xff]
      %v301 = vld [vmem:[%s219 + $0x92] sm:$0xff]
      %v302 = vld [vmem:[%s219 + $0x9a] sm:$0xff]
      %v303 = vld [vmem:[%s219 + $0xaa] sm:$0xff]
      %v304 = vld [vmem:[%s219 + $0xb2] sm:$0xff]
      %v305 = vld [vmem:[%s219 + $0xc2] sm:$0xff]
      %v306 = vld [vmem:[%s219 + $0xca] sm:$0xff]
      %v307 = vld [vmem:[%s219 + $0xda] sm:$0xff]
      %v308 = vld [vmem:[%s219 + $0xe2] sm:$0xff]
      %v309 = vld [vmem:[%s219 + $0xf2] sm:$0xff]
      %v310 = vld [vmem:[%s219 + $0xfa] sm:$0xff]
      %v311 = vld [vmem:[%s219 + $0x10a] sm:$0xff]
      %v312 = vld [vmem:[%s219 + $0x112] sm:$0xff]
      %v313 = vld [vmem:[%s219 + $0x122] sm:$0xff]
      %v314 = vld [vmem:[%s219 + $0x12a] sm:$0xff]
      %v315 = vld [vmem:[%s219 + $0x13a] sm:$0xff]
      %v316 = vld [vmem:[%s219 + $0x142] sm:$0xff]
      %v317 = vld [vmem:[%s219 + $0x152] sm:$0xff]
      %v318 = vld [vmem:[%s219 + $0x15a] sm:$0xff]
      %v319 = vld [vmem:[%s219 + $0x16a] sm:$0xff]
      %v320 = vld [vmem:[%s219 + $0x172] sm:$0xff]
      %s321 = scalar_lea.vmem %s219, 24
      %v322 = vld [vmem:[%s321] sm:$0xff]
      %v323 = vld [vmem:[%s321 + $0x8] sm:$0xff]
      %v324 = vld [vmem:[%s321 + $0x18] sm:$0xff]
      %v325 = vld [vmem:[%s321 + $0x20] sm:$0xff]
      %v326 = vld [vmem:[%s321 + $0x30] sm:$0xff]
      %v327 = vld [vmem:[%s321 + $0x38] sm:$0xff]
      %v328 = vld [vmem:[%s321 + $0x48] sm:$0xff]
      %v329 = vld [vmem:[%s321 + $0x50] sm:$0xff]
      %v330 = vld [vmem:[%s321 + $0x60] sm:$0xff]
      %v331 = vld [vmem:[%s321 + $0x68] sm:$0xff]
      %v332 = vld [vmem:[%s321 + $0x78] sm:$0xff]
      %v333 = vld [vmem:[%s321 + $0x80] sm:$0xff]
      %v334 = vld [vmem:[%s321 + $0x90] sm:$0xff]
      %v335 = vld [vmem:[%s321 + $0x98] sm:$0xff]
      %v336 = vld [vmem:[%s321 + $0xa8] sm:$0xff]
      %v337 = vld [vmem:[%s321 + $0xb0] sm:$0xff]
      %v338 = vld [vmem:[%s321 + $0xc0] sm:$0xff]
      %v339 = vld [vmem:[%s321 + $0xc8] sm:$0xff]
      %v340 = vld [vmem:[%s321 + $0xd8] sm:$0xff]
      %v341 = vld [vmem:[%s321 + $0xe0] sm:$0xff]
      %v342 = vld [vmem:[%s321 + $0xf0] sm:$0xff]
      %v343 = vld [vmem:[%s321 + $0xf8] sm:$0xff]
      %v344 = vld [vmem:[%s321 + $0x108] sm:$0xff]
      %v345 = vld [vmem:[%s321 + $0x110] sm:$0xff]
      %v346 = vld [vmem:[%s321 + $0x120] sm:$0xff]
      %v347 = vld [vmem:[%s321 + $0x128] sm:$0xff]
      %v348 = vld [vmem:[%s321 + $0x138] sm:$0xff]
      %v349 = vld [vmem:[%s321 + $0x140] sm:$0xff]
      %v350 = vld [vmem:[%s321 + $0x150] sm:$0xff]
      %v351 = vld [vmem:[%s321 + $0x158] sm:$0xff]
      %v352 = vld [vmem:[%s321 + $0x168] sm:$0xff]
      %v353 = vld [vmem:[%s321 + $0x170] sm:$0xff]
      %v354 = vld [vmem:[%s321 + $0x1] sm:$0xff]
      %v355 = vld [vmem:[%s321 + $0x9] sm:$0xff]
      %v356 = vld [vmem:[%s321 + $0x19] sm:$0xff]
      %v357 = vld [vmem:[%s321 + $0x21] sm:$0xff]
      %v358 = vld [vmem:[%s321 + $0x31] sm:$0xff]
      %v359 = vld [vmem:[%s321 + $0x39] sm:$0xff]
      %v360 = vld [vmem:[%s321 + $0x49] sm:$0xff]
      %v361 = vld [vmem:[%s321 + $0x51] sm:$0xff]
      %v362 = vld [vmem:[%s321 + $0x61] sm:$0xff]
      %v363 = vld [vmem:[%s321 + $0x69] sm:$0xff]
      %v364 = vld [vmem:[%s321 + $0x79] sm:$0xff]
      %v365 = vld [vmem:[%s321 + $0x81] sm:$0xff]
      %v366 = vld [vmem:[%s321 + $0x91] sm:$0xff]
      %v367 = vld [vmem:[%s321 + $0x99] sm:$0xff]
      %v368 = vld [vmem:[%s321 + $0xa9] sm:$0xff]
      %v369 = vld [vmem:[%s321 + $0xb1] sm:$0xff]
      %v370 = vld [vmem:[%s321 + $0xc1] sm:$0xff]
      %v371 = vld [vmem:[%s321 + $0xc9] sm:$0xff]
      %v372 = vld [vmem:[%s321 + $0xd9] sm:$0xff]
      %v373 = vld [vmem:[%s321 + $0xe1] sm:$0xff]
      %v374 = vld [vmem:[%s321 + $0xf1] sm:$0xff]
      %v375 = vld [vmem:[%s321 + $0xf9] sm:$0xff]
      %v376 = vld [vmem:[%s321 + $0x109] sm:$0xff]
      %v377 = vld [vmem:[%s321 + $0x111] sm:$0xff]
      %v378 = vld [vmem:[%s321 + $0x121] sm:$0xff]
      %v379 = vld [vmem:[%s321 + $0x129] sm:$0xff]
      %v380 = vld [vmem:[%s321 + $0x139] sm:$0xff]
      %v381 = vld [vmem:[%s321 + $0x141] sm:$0xff]
      %v382 = vld [vmem:[%s321 + $0x151] sm:$0xff]
      %v383 = vld [vmem:[%s321 + $0x159] sm:$0xff]
      %v384 = vld [vmem:[%s321 + $0x169] sm:$0xff]
      %v385 = vld [vmem:[%s321 + $0x171] sm:$0xff]
      %v386 = vld [vmem:[%s321 + $0x2] sm:$0xff]
      %v387 = vld [vmem:[%s321 + $0xa] sm:$0xff]
      %v388 = vld [vmem:[%s321 + $0x1a] sm:$0xff]
      %v389 = vld [vmem:[%s321 + $0x22] sm:$0xff]
      %v390 = vld [vmem:[%s321 + $0x32] sm:$0xff]
      %v391 = vld [vmem:[%s321 + $0x3a] sm:$0xff]
      %v392 = vld [vmem:[%s321 + $0x4a] sm:$0xff]
      %v393 = vld [vmem:[%s321 + $0x52] sm:$0xff]
      %v394 = vld [vmem:[%s321 + $0x62] sm:$0xff]
      %v395 = vld [vmem:[%s321 + $0x6a] sm:$0xff]
      %v396 = vld [vmem:[%s321 + $0x7a] sm:$0xff]
      %v397 = vld [vmem:[%s321 + $0x82] sm:$0xff]
      %v398 = vld [vmem:[%s321 + $0x92] sm:$0xff]
      %v399 = vld [vmem:[%s321 + $0x9a] sm:$0xff]
      %v400 = vld [vmem:[%s321 + $0xaa] sm:$0xff]
      %v401 = vld [vmem:[%s321 + $0xb2] sm:$0xff]
      %v402 = vld [vmem:[%s321 + $0xc2] sm:$0xff]
      %v403 = vld [vmem:[%s321 + $0xca] sm:$0xff]
      %v404 = vld [vmem:[%s321 + $0xda] sm:$0xff]
      %v405 = vld [vmem:[%s321 + $0xe2] sm:$0xff]
      %v406 = vld [vmem:[%s321 + $0xf2] sm:$0xff]
      %v407 = vld [vmem:[%s321 + $0xfa] sm:$0xff]
      %v408 = vld [vmem:[%s321 + $0x10a] sm:$0xff]
      %v409 = vld [vmem:[%s321 + $0x112] sm:$0xff]
      %v410 = vld [vmem:[%s321 + $0x122] sm:$0xff]
      %v411 = vld [vmem:[%s321 + $0x12a] sm:$0xff]
      %v412 = vld [vmem:[%s321 + $0x13a] sm:$0xff]
      %v413 = vld [vmem:[%s321 + $0x142] sm:$0xff]
      %v414 = vld [vmem:[%s321 + $0x152] sm:$0xff]
      %v415 = vld [vmem:[%s321 + $0x15a] sm:$0xff]
      %v416 = vld [vmem:[%s321 + $0x16a] sm:$0xff]
      %v417 = vld [vmem:[%s321 + $0x172] sm:$0xff]
      %s418 = scalar_lea.vmem %s219, 48
      %v419 = vld [vmem:[%s418] sm:$0xff]
      %v420 = vld [vmem:[%s418 + $0x8] sm:$0xff]
      %v421 = vld [vmem:[%s418 + $0x18] sm:$0xff]
      %v422 = vld [vmem:[%s418 + $0x20] sm:$0xff]
      %v423 = vld [vmem:[%s418 + $0x30] sm:$0xff]
      %v424 = vld [vmem:[%s418 + $0x38] sm:$0xff]
      %v425 = vld [vmem:[%s418 + $0x48] sm:$0xff]
      %v426 = vld [vmem:[%s418 + $0x50] sm:$0xff]
      %v427 = vld [vmem:[%s418 + $0x60] sm:$0xff]
      %v428 = vld [vmem:[%s418 + $0x68] sm:$0xff]
      %v429 = vld [vmem:[%s418 + $0x78] sm:$0xff]
      %v430 = vld [vmem:[%s418 + $0x80] sm:$0xff]
      %v431 = vld [vmem:[%s418 + $0x90] sm:$0xff]
      %v432 = vld [vmem:[%s418 + $0x98] sm:$0xff]
      %v433 = vld [vmem:[%s418 + $0xa8] sm:$0xff]
      %v434 = vld [vmem:[%s418 + $0xb0] sm:$0xff]
      %v435 = vld [vmem:[%s418 + $0xc0] sm:$0xff]
      %v436 = vld [vmem:[%s418 + $0xc8] sm:$0xff]
      %v437 = vld [vmem:[%s418 + $0xd8] sm:$0xff]
      %v438 = vld [vmem:[%s418 + $0xe0] sm:$0xff]
      %v439 = vld [vmem:[%s418 + $0xf0] sm:$0xff]
      %v440 = vld [vmem:[%s418 + $0xf8] sm:$0xff]
      %v441 = vld [vmem:[%s418 + $0x108] sm:$0xff]
      %v442 = vld [vmem:[%s418 + $0x110] sm:$0xff]
      %v443 = vld [vmem:[%s418 + $0x120] sm:$0xff]
      %v444 = vld [vmem:[%s418 + $0x128] sm:$0xff]
      %v445 = vld [vmem:[%s418 + $0x138] sm:$0xff]
      %v446 = vld [vmem:[%s418 + $0x140] sm:$0xff]
      %v447 = vld [vmem:[%s418 + $0x150] sm:$0xff]
      %v448 = vld [vmem:[%s418 + $0x158] sm:$0xff]
      %v449 = vld [vmem:[%s418 + $0x168] sm:$0xff]
      %v450 = vld [vmem:[%s418 + $0x170] sm:$0xff]
      %v451 = vld [vmem:[%s418 + $0x1] sm:$0xff]
      %v452 = vld [vmem:[%s418 + $0x9] sm:$0xff]
      %v453 = vld [vmem:[%s418 + $0x19] sm:$0xff]
      %v454 = vld [vmem:[%s418 + $0x21] sm:$0xff]
      %v455 = vld [vmem:[%s418 + $0x31] sm:$0xff]
      %v456 = vld [vmem:[%s418 + $0x39] sm:$0xff]
      %v457 = vld [vmem:[%s418 + $0x49] sm:$0xff]
      %v458 = vld [vmem:[%s418 + $0x51] sm:$0xff]
      %v459 = vld [vmem:[%s418 + $0x61] sm:$0xff]
      %v460 = vld [vmem:[%s418 + $0x69] sm:$0xff]
      %v461 = vld [vmem:[%s418 + $0x79] sm:$0xff]
      %v462 = vld [vmem:[%s418 + $0x81] sm:$0xff]
      %v463 = vld [vmem:[%s418 + $0x91] sm:$0xff]
      %v464 = vld [vmem:[%s418 + $0x99] sm:$0xff]
      %v465 = vld [vmem:[%s418 + $0xa9] sm:$0xff]
      %v466 = vld [vmem:[%s418 + $0xb1] sm:$0xff]
      %v467 = vld [vmem:[%s418 + $0xc1] sm:$0xff]
      %v468 = vld [vmem:[%s418 + $0xc9] sm:$0xff]
      %v469 = vld [vmem:[%s418 + $0xd9] sm:$0xff]
      %v470 = vld [vmem:[%s418 + $0xe1] sm:$0xff]
      %v471 = vld [vmem:[%s418 + $0xf1] sm:$0xff]
      %v472 = vld [vmem:[%s418 + $0xf9] sm:$0xff]
      %v473 = vld [vmem:[%s418 + $0x109] sm:$0xff]
      %v474 = vld [vmem:[%s418 + $0x111] sm:$0xff]
      %v475 = vld [vmem:[%s418 + $0x121] sm:$0xff]
      %v476 = vld [vmem:[%s418 + $0x129] sm:$0xff]
      %v477 = vld [vmem:[%s418 + $0x139] sm:$0xff]
      %v478 = vld [vmem:[%s418 + $0x141] sm:$0xff]
      %v479 = vld [vmem:[%s418 + $0x151] sm:$0xff]
      %v480 = vld [vmem:[%s418 + $0x159] sm:$0xff]
      %v481 = vld [vmem:[%s418 + $0x169] sm:$0xff]
      %v482 = vld [vmem:[%s418 + $0x171] sm:$0xff]
      %v483 = vld [vmem:[%s418 + $0x2] sm:$0xff]
      %v484 = vld [vmem:[%s418 + $0xa] sm:$0xff]
      %v485 = vld [vmem:[%s418 + $0x1a] sm:$0xff]
      %v486 = vld [vmem:[%s418 + $0x22] sm:$0xff]
      %v487 = vld [vmem:[%s418 + $0x32] sm:$0xff]
      %v488 = vld [vmem:[%s418 + $0x3a] sm:$0xff]
      %v489 = vld [vmem:[%s418 + $0x4a] sm:$0xff]
      %v490 = vld [vmem:[%s418 + $0x52] sm:$0xff]
      %v491 = vld [vmem:[%s418 + $0x62] sm:$0xff]
      %v492 = vld [vmem:[%s418 + $0x6a] sm:$0xff]
      %v493 = vld [vmem:[%s418 + $0x7a] sm:$0xff]
      %v494 = vld [vmem:[%s418 + $0x82] sm:$0xff]
      %v495 = vld [vmem:[%s418 + $0x92] sm:$0xff]
      %v496 = vld [vmem:[%s418 + $0x9a] sm:$0xff]
      %v497 = vld [vmem:[%s418 + $0xaa] sm:$0xff]
      %v498 = vld [vmem:[%s418 + $0xb2] sm:$0xff]
      %v499 = vld [vmem:[%s418 + $0xc2] sm:$0xff]
      %v500 = vld [vmem:[%s418 + $0xca] sm:$0xff]
      %v501 = vld [vmem:[%s418 + $0xda] sm:$0xff]
      %v502 = vld [vmem:[%s418 + $0xe2] sm:$0xff]
      %v503 = vld [vmem:[%s418 + $0xf2] sm:$0xff]
      %v504 = vld [vmem:[%s418 + $0xfa] sm:$0xff]
      %v505 = vld [vmem:[%s418 + $0x10a] sm:$0xff]
      %v506 = vld [vmem:[%s418 + $0x112] sm:$0xff]
      %v507 = vld [vmem:[%s418 + $0x122] sm:$0xff]
      %v508 = vld [vmem:[%s418 + $0x12a] sm:$0xff]
      %v509 = vld [vmem:[%s418 + $0x13a] sm:$0xff]
      %v510 = vld [vmem:[%s418 + $0x142] sm:$0xff]
      %v511 = vld [vmem:[%s418 + $0x152] sm:$0xff]
      %v512 = vld [vmem:[%s418 + $0x15a] sm:$0xff]
      %v513 = vld [vmem:[%s418 + $0x16a] sm:$0xff]
      %v514 = vld [vmem:[%s418 + $0x172] sm:$0xff]
      %547 = vrot.lane.b32.xlu0 %v257, 4
      %v548 = vpop.permute.xlu0 %547
      %549 = vrot.lane.b32.xlu0 %v258, 4
      %v550 = vpop.permute.xlu0 %549
      %551 = vrot.lane.b32.xlu0 %v259, 4
      %v552 = vpop.permute.xlu0 %551
      %553 = vrot.lane.b32.xlu0 %v260, 4
      %v554 = vpop.permute.xlu0 %553
      %555 = vrot.lane.b32.xlu0 %v261, 4
      %v556 = vpop.permute.xlu0 %555
      %557 = vrot.lane.b32.xlu0 %v262, 4
      %v558 = vpop.permute.xlu0 %557
      %559 = vrot.lane.b32.xlu0 %v263, 4
      %v560 = vpop.permute.xlu0 %559
      %561 = vrot.lane.b32.xlu0 %v264, 4
      %v562 = vpop.permute.xlu0 %561
      %563 = vrot.lane.b32.xlu0 %v265, 4
      %v564 = vpop.permute.xlu0 %563
      %565 = vrot.lane.b32.xlu0 %v266, 4
      %v566 = vpop.permute.xlu0 %565
      %567 = vrot.lane.b32.xlu0 %v267, 4
      %v568 = vpop.permute.xlu0 %567
      %569 = vrot.lane.b32.xlu0 %v268, 4
      %v570 = vpop.permute.xlu0 %569
      %571 = vrot.lane.b32.xlu0 %v269, 4
      %v572 = vpop.permute.xlu0 %571
      %573 = vrot.lane.b32.xlu0 %v270, 4
      %v574 = vpop.permute.xlu0 %573
      %575 = vrot.lane.b32.xlu0 %v271, 4
      %v576 = vpop.permute.xlu0 %575
      %577 = vrot.lane.b32.xlu0 %v272, 4
      %v578 = vpop.permute.xlu0 %577
      %579 = vrot.lane.b32.xlu0 %v273, 4
      %v580 = vpop.permute.xlu0 %579
      %581 = vrot.lane.b32.xlu0 %v274, 4
      %v582 = vpop.permute.xlu0 %581
      %583 = vrot.lane.b32.xlu0 %v275, 4
      %v584 = vpop.permute.xlu0 %583
      %585 = vrot.lane.b32.xlu0 %v276, 4
      %v586 = vpop.permute.xlu0 %585
      %587 = vrot.lane.b32.xlu0 %v277, 4
      %v588 = vpop.permute.xlu0 %587
      %589 = vrot.lane.b32.xlu0 %v278, 4
      %v590 = vpop.permute.xlu0 %589
      %591 = vrot.lane.b32.xlu0 %v279, 4
      %v592 = vpop.permute.xlu0 %591
      %593 = vrot.lane.b32.xlu0 %v280, 4
      %v594 = vpop.permute.xlu0 %593
      %595 = vrot.lane.b32.xlu0 %v281, 4
      %v596 = vpop.permute.xlu0 %595
      %597 = vrot.lane.b32.xlu0 %v282, 4
      %v598 = vpop.permute.xlu0 %597
      %599 = vrot.lane.b32.xlu0 %v283, 4
      %v600 = vpop.permute.xlu0 %599
      %601 = vrot.lane.b32.xlu0 %v284, 4
      %v602 = vpop.permute.xlu0 %601
      %603 = vrot.lane.b32.xlu0 %v285, 4
      %v604 = vpop.permute.xlu0 %603
      %605 = vrot.lane.b32.xlu0 %v286, 4
      %v606 = vpop.permute.xlu0 %605
      %607 = vrot.lane.b32.xlu0 %v287, 4
      %v608 = vpop.permute.xlu0 %607
      %609 = vrot.lane.b32.xlu0 %v288, 4
      %v610 = vpop.permute.xlu0 %609
      %675 = vrot.lane.b32.xlu0 %v289, 8
      %v676 = vpop.permute.xlu0 %675
      %677 = vrot.lane.b32.xlu0 %v290, 8
      %v678 = vpop.permute.xlu0 %677
      %679 = vrot.lane.b32.xlu0 %v291, 8
      %v680 = vpop.permute.xlu0 %679
      %681 = vrot.lane.b32.xlu0 %v292, 8
      %v682 = vpop.permute.xlu0 %681
      %683 = vrot.lane.b32.xlu0 %v293, 8
      %v684 = vpop.permute.xlu0 %683
      %685 = vrot.lane.b32.xlu0 %v294, 8
      %v686 = vpop.permute.xlu0 %685
      %687 = vrot.lane.b32.xlu0 %v295, 8
      %v688 = vpop.permute.xlu0 %687
      %689 = vrot.lane.b32.xlu0 %v296, 8
      %v690 = vpop.permute.xlu0 %689
      %691 = vrot.lane.b32.xlu0 %v297, 8
      %v692 = vpop.permute.xlu0 %691
      %693 = vrot.lane.b32.xlu0 %v298, 8
      %v694 = vpop.permute.xlu0 %693
      %695 = vrot.lane.b32.xlu0 %v299, 8
      %v696 = vpop.permute.xlu0 %695
      %697 = vrot.lane.b32.xlu0 %v300, 8
      %v698 = vpop.permute.xlu0 %697
      %699 = vrot.lane.b32.xlu0 %v301, 8
      %v700 = vpop.permute.xlu0 %699
      %701 = vrot.lane.b32.xlu0 %v302, 8
      %v702 = vpop.permute.xlu0 %701
      %703 = vrot.lane.b32.xlu0 %v303, 8
      %v704 = vpop.permute.xlu0 %703
      %705 = vrot.lane.b32.xlu0 %v304, 8
      %v706 = vpop.permute.xlu0 %705
      %707 = vrot.lane.b32.xlu0 %v305, 8
      %v708 = vpop.permute.xlu0 %707
      %709 = vrot.lane.b32.xlu0 %v306, 8
      %v710 = vpop.permute.xlu0 %709
      %711 = vrot.lane.b32.xlu0 %v307, 8
      %v712 = vpop.permute.xlu0 %711
      %713 = vrot.lane.b32.xlu0 %v308, 8
      %v714 = vpop.permute.xlu0 %713
      %715 = vrot.lane.b32.xlu0 %v309, 8
      %v716 = vpop.permute.xlu0 %715
      %717 = vrot.lane.b32.xlu0 %v310, 8
      %v718 = vpop.permute.xlu0 %717
      %719 = vrot.lane.b32.xlu0 %v311, 8
      %v720 = vpop.permute.xlu0 %719
      %721 = vrot.lane.b32.xlu0 %v312, 8
      %v722 = vpop.permute.xlu0 %721
      %723 = vrot.lane.b32.xlu0 %v313, 8
      %v724 = vpop.permute.xlu0 %723
      %725 = vrot.lane.b32.xlu0 %v314, 8
      %v726 = vpop.permute.xlu0 %725
      %727 = vrot.lane.b32.xlu0 %v315, 8
      %v728 = vpop.permute.xlu0 %727
      %729 = vrot.lane.b32.xlu0 %v316, 8
      %v730 = vpop.permute.xlu0 %729
      %731 = vrot.lane.b32.xlu0 %v317, 8
      %v732 = vpop.permute.xlu0 %731
      %733 = vrot.lane.b32.xlu0 %v318, 8
      %v734 = vpop.permute.xlu0 %733
      %735 = vrot.lane.b32.xlu0 %v319, 8
      %v736 = vpop.permute.xlu0 %735
      %737 = vrot.lane.b32.xlu0 %v320, 8
      %v738 = vpop.permute.xlu0 %737
      %803 = vrot.lane.b32.xlu0 %v322, 12
      %v804 = vpop.permute.xlu0 %803
      %805 = vrot.lane.b32.xlu0 %v323, 12
      %v806 = vpop.permute.xlu0 %805
      %807 = vrot.lane.b32.xlu0 %v324, 12
      %v808 = vpop.permute.xlu0 %807
      %809 = vrot.lane.b32.xlu0 %v325, 12
      %v810 = vpop.permute.xlu0 %809
      %811 = vrot.lane.b32.xlu0 %v326, 12
      %v812 = vpop.permute.xlu0 %811
      %813 = vrot.lane.b32.xlu0 %v327, 12
      %v814 = vpop.permute.xlu0 %813
      %815 = vrot.lane.b32.xlu0 %v328, 12
      %v816 = vpop.permute.xlu0 %815
      %817 = vrot.lane.b32.xlu0 %v329, 12
      %v818 = vpop.permute.xlu0 %817
      %819 = vrot.lane.b32.xlu0 %v330, 12
      %v820 = vpop.permute.xlu0 %819
      %821 = vrot.lane.b32.xlu0 %v331, 12
      %v822 = vpop.permute.xlu0 %821
      %823 = vrot.lane.b32.xlu0 %v332, 12
      %v824 = vpop.permute.xlu0 %823
      %825 = vrot.lane.b32.xlu0 %v333, 12
      %v826 = vpop.permute.xlu0 %825
      %827 = vrot.lane.b32.xlu0 %v334, 12
      %v828 = vpop.permute.xlu0 %827
      %829 = vrot.lane.b32.xlu0 %v335, 12
      %v830 = vpop.permute.xlu0 %829
      %831 = vrot.lane.b32.xlu0 %v336, 12
      %v832 = vpop.permute.xlu0 %831
      %833 = vrot.lane.b32.xlu0 %v337, 12
      %v834 = vpop.permute.xlu0 %833
      %835 = vrot.lane.b32.xlu0 %v338, 12
      %v836 = vpop.permute.xlu0 %835
      %837 = vrot.lane.b32.xlu0 %v339, 12
      %v838 = vpop.permute.xlu0 %837
      %839 = vrot.lane.b32.xlu0 %v340, 12
      %v840 = vpop.permute.xlu0 %839
      %841 = vrot.lane.b32.xlu0 %v341, 12
      %v842 = vpop.permute.xlu0 %841
      %843 = vrot.lane.b32.xlu0 %v342, 12
      %v844 = vpop.permute.xlu0 %843
      %845 = vrot.lane.b32.xlu0 %v343, 12
      %v846 = vpop.permute.xlu0 %845
      %847 = vrot.lane.b32.xlu0 %v344, 12
      %v848 = vpop.permute.xlu0 %847
      %849 = vrot.lane.b32.xlu0 %v345, 12
      %v850 = vpop.permute.xlu0 %849
      %851 = vrot.lane.b32.xlu0 %v346, 12
      %v852 = vpop.permute.xlu0 %851
      %853 = vrot.lane.b32.xlu0 %v347, 12
      %v854 = vpop.permute.xlu0 %853
      %855 = vrot.lane.b32.xlu0 %v348, 12
      %v856 = vpop.permute.xlu0 %855
      %857 = vrot.lane.b32.xlu0 %v349, 12
      %v858 = vpop.permute.xlu0 %857
      %859 = vrot.lane.b32.xlu0 %v350, 12
      %v860 = vpop.permute.xlu0 %859
      %861 = vrot.lane.b32.xlu0 %v351, 12
      %v862 = vpop.permute.xlu0 %861
      %863 = vrot.lane.b32.xlu0 %v352, 12
      %v864 = vpop.permute.xlu0 %863
      %865 = vrot.lane.b32.xlu0 %v353, 12
      %v866 = vpop.permute.xlu0 %865
      %931 = vrot.lane.b32.xlu0 %v354, 16
      %v932 = vpop.permute.xlu0 %931
      %933 = vrot.lane.b32.xlu0 %v355, 16
      %v934 = vpop.permute.xlu0 %933
      %935 = vrot.lane.b32.xlu0 %v356, 16
      %v936 = vpop.permute.xlu0 %935
      %937 = vrot.lane.b32.xlu0 %v357, 16
      %v938 = vpop.permute.xlu0 %937
      %939 = vrot.lane.b32.xlu0 %v358, 16
      %v940 = vpop.permute.xlu0 %939
      %941 = vrot.lane.b32.xlu0 %v359, 16
      %v942 = vpop.permute.xlu0 %941
      %943 = vrot.lane.b32.xlu0 %v360, 16
      %v944 = vpop.permute.xlu0 %943
      %945 = vrot.lane.b32.xlu0 %v361, 16
      %v946 = vpop.permute.xlu0 %945
      %947 = vrot.lane.b32.xlu0 %v362, 16
      %v948 = vpop.permute.xlu0 %947
      %949 = vrot.lane.b32.xlu0 %v363, 16
      %v950 = vpop.permute.xlu0 %949
      %951 = vrot.lane.b32.xlu0 %v364, 16
      %v952 = vpop.permute.xlu0 %951
      %953 = vrot.lane.b32.xlu0 %v365, 16
      %v954 = vpop.permute.xlu0 %953
      %955 = vrot.lane.b32.xlu0 %v366, 16
      %v956 = vpop.permute.xlu0 %955
      %957 = vrot.lane.b32.xlu0 %v367, 16
      %v958 = vpop.permute.xlu0 %957
      %959 = vrot.lane.b32.xlu0 %v368, 16
      %v960 = vpop.permute.xlu0 %959
      %961 = vrot.lane.b32.xlu0 %v369, 16
      %v962 = vpop.permute.xlu0 %961
      %963 = vrot.lane.b32.xlu0 %v370, 16
      %v964 = vpop.permute.xlu0 %963
      %965 = vrot.lane.b32.xlu0 %v371, 16
      %v966 = vpop.permute.xlu0 %965
      %967 = vrot.lane.b32.xlu0 %v372, 16
      %v968 = vpop.permute.xlu0 %967
      %969 = vrot.lane.b32.xlu0 %v373, 16
      %v970 = vpop.permute.xlu0 %969
      %971 = vrot.lane.b32.xlu0 %v374, 16
      %v972 = vpop.permute.xlu0 %971
      %973 = vrot.lane.b32.xlu0 %v375, 16
      %v974 = vpop.permute.xlu0 %973
      %975 = vrot.lane.b32.xlu0 %v376, 16
      %v976 = vpop.permute.xlu0 %975
      %977 = vrot.lane.b32.xlu0 %v377, 16
      %v978 = vpop.permute.xlu0 %977
      %979 = vrot.lane.b32.xlu0 %v378, 16
      %v980 = vpop.permute.xlu0 %979
      %981 = vrot.lane.b32.xlu0 %v379, 16
      %v982 = vpop.permute.xlu0 %981
      %983 = vrot.lane.b32.xlu0 %v380, 16
      %v984 = vpop.permute.xlu0 %983
      %985 = vrot.lane.b32.xlu0 %v381, 16
      %v986 = vpop.permute.xlu0 %985
      %987 = vrot.lane.b32.xlu0 %v382, 16
      %v988 = vpop.permute.xlu0 %987
      %989 = vrot.lane.b32.xlu0 %v383, 16
      %v990 = vpop.permute.xlu0 %989
      %991 = vrot.lane.b32.xlu0 %v384, 16
      %v992 = vpop.permute.xlu0 %991
      %993 = vrot.lane.b32.xlu0 %v385, 16
      %v994 = vpop.permute.xlu0 %993
      %1059 = vrot.lane.b32.xlu0 %v386, 20
      %v1060 = vpop.permute.xlu0 %1059
      %1061 = vrot.lane.b32.xlu0 %v387, 20
      %v1062 = vpop.permute.xlu0 %1061
      %1063 = vrot.lane.b32.xlu0 %v388, 20
      %v1064 = vpop.permute.xlu0 %1063
      %1065 = vrot.lane.b32.xlu0 %v389, 20
      %v1066 = vpop.permute.xlu0 %1065
      %1067 = vrot.lane.b32.xlu0 %v390, 20
      %v1068 = vpop.permute.xlu0 %1067
      %1069 = vrot.lane.b32.xlu0 %v391, 20
      %v1070 = vpop.permute.xlu0 %1069
      %1071 = vrot.lane.b32.xlu0 %v392, 20
      %v1072 = vpop.permute.xlu0 %1071
      %1073 = vrot.lane.b32.xlu0 %v393, 20
      %v1074 = vpop.permute.xlu0 %1073
      %1075 = vrot.lane.b32.xlu0 %v394, 20
      %v1076 = vpop.permute.xlu0 %1075
      %1077 = vrot.lane.b32.xlu0 %v395, 20
      %v1078 = vpop.permute.xlu0 %1077
      %1079 = vrot.lane.b32.xlu0 %v396, 20
      %v1080 = vpop.permute.xlu0 %1079
      %1081 = vrot.lane.b32.xlu0 %v397, 20
      %v1082 = vpop.permute.xlu0 %1081
      %1083 = vrot.lane.b32.xlu0 %v398, 20
      %v1084 = vpop.permute.xlu0 %1083
      %1085 = vrot.lane.b32.xlu0 %v399, 20
      %v1086 = vpop.permute.xlu0 %1085
      %1087 = vrot.lane.b32.xlu0 %v400, 20
      %v1088 = vpop.permute.xlu0 %1087
      %1089 = vrot.lane.b32.xlu0 %v401, 20
      %v1090 = vpop.permute.xlu0 %1089
      %1091 = vrot.lane.b32.xlu0 %v402, 20
      %v1092 = vpop.permute.xlu0 %1091
      %1093 = vrot.lane.b32.xlu0 %v403, 20
      %v1094 = vpop.permute.xlu0 %1093
      %1095 = vrot.lane.b32.xlu0 %v404, 20
      %v1096 = vpop.permute.xlu0 %1095
      %1097 = vrot.lane.b32.xlu0 %v405, 20
      %v1098 = vpop.permute.xlu0 %1097
      %1099 = vrot.lane.b32.xlu0 %v406, 20
      %v1100 = vpop.permute.xlu0 %1099
      %1101 = vrot.lane.b32.xlu0 %v407, 20
      %v1102 = vpop.permute.xlu0 %1101
      %1103 = vrot.lane.b32.xlu0 %v408, 20
      %v1104 = vpop.permute.xlu0 %1103
      %1105 = vrot.lane.b32.xlu0 %v409, 20
      %v1106 = vpop.permute.xlu0 %1105
      %1107 = vrot.lane.b32.xlu0 %v410, 20
      %v1108 = vpop.permute.xlu0 %1107
      %1109 = vrot.lane.b32.xlu0 %v411, 20
      %v1110 = vpop.permute.xlu0 %1109
      %1111 = vrot.lane.b32.xlu0 %v412, 20
      %v1112 = vpop.permute.xlu0 %1111
      %1113 = vrot.lane.b32.xlu0 %v413, 20
      %v1114 = vpop.permute.xlu0 %1113
      %1115 = vrot.lane.b32.xlu0 %v414, 20
      %v1116 = vpop.permute.xlu0 %1115
      %1117 = vrot.lane.b32.xlu0 %v415, 20
      %v1118 = vpop.permute.xlu0 %1117
      %1119 = vrot.lane.b32.xlu0 %v416, 20
      %v1120 = vpop.permute.xlu0 %1119
      %1121 = vrot.lane.b32.xlu0 %v417, 20
      %v1122 = vpop.permute.xlu0 %1121
      %1187 = vrot.lane.b32.xlu0 %v419, 24
      %v1188 = vpop.permute.xlu0 %1187
      %1189 = vrot.lane.b32.xlu0 %v420, 24
      %v1190 = vpop.permute.xlu0 %1189
      %1191 = vrot.lane.b32.xlu0 %v421, 24
      %v1192 = vpop.permute.xlu0 %1191
      %1193 = vrot.lane.b32.xlu0 %v422, 24
      %v1194 = vpop.permute.xlu0 %1193
      %1195 = vrot.lane.b32.xlu0 %v423, 24
      %v1196 = vpop.permute.xlu0 %1195
      %1197 = vrot.lane.b32.xlu0 %v424, 24
      %v1198 = vpop.permute.xlu0 %1197
      %1199 = vrot.lane.b32.xlu0 %v425, 24
      %v1200 = vpop.permute.xlu0 %1199
      %1201 = vrot.lane.b32.xlu0 %v426, 24
      %v1202 = vpop.permute.xlu0 %1201
      %1203 = vrot.lane.b32.xlu0 %v427, 24
      %v1204 = vpop.permute.xlu0 %1203
      %1205 = vrot.lane.b32.xlu0 %v428, 24
      %v1206 = vpop.permute.xlu0 %1205
      %1207 = vrot.lane.b32.xlu0 %v429, 24
      %v1208 = vpop.permute.xlu0 %1207
      %1209 = vrot.lane.b32.xlu0 %v430, 24
      %v1210 = vpop.permute.xlu0 %1209
      %1211 = vrot.lane.b32.xlu0 %v431, 24
      %v1212 = vpop.permute.xlu0 %1211
      %1213 = vrot.lane.b32.xlu0 %v432, 24
      %v1214 = vpop.permute.xlu0 %1213
      %1215 = vrot.lane.b32.xlu0 %v433, 24
      %v1216 = vpop.permute.xlu0 %1215
      %1217 = vrot.lane.b32.xlu0 %v434, 24
      %v1218 = vpop.permute.xlu0 %1217
      %1219 = vrot.lane.b32.xlu0 %v435, 24
      %v1220 = vpop.permute.xlu0 %1219
      %1221 = vrot.lane.b32.xlu0 %v436, 24
      %v1222 = vpop.permute.xlu0 %1221
      %1223 = vrot.lane.b32.xlu0 %v437, 24
      %v1224 = vpop.permute.xlu0 %1223
      %1225 = vrot.lane.b32.xlu0 %v438, 24
      %v1226 = vpop.permute.xlu0 %1225
      %1227 = vrot.lane.b32.xlu0 %v439, 24
      %v1228 = vpop.permute.xlu0 %1227
      %1229 = vrot.lane.b32.xlu0 %v440, 24
      %v1230 = vpop.permute.xlu0 %1229
      %1231 = vrot.lane.b32.xlu0 %v441, 24
      %v1232 = vpop.permute.xlu0 %1231
      %1233 = vrot.lane.b32.xlu0 %v442, 24
      %v1234 = vpop.permute.xlu0 %1233
      %1235 = vrot.lane.b32.xlu0 %v443, 24
      %v1236 = vpop.permute.xlu0 %1235
      %1237 = vrot.lane.b32.xlu0 %v444, 24
      %v1238 = vpop.permute.xlu0 %1237
      %1239 = vrot.lane.b32.xlu0 %v445, 24
      %v1240 = vpop.permute.xlu0 %1239
      %1241 = vrot.lane.b32.xlu0 %v446, 24
      %v1242 = vpop.permute.xlu0 %1241
      %1243 = vrot.lane.b32.xlu0 %v447, 24
      %v1244 = vpop.permute.xlu0 %1243
      %1245 = vrot.lane.b32.xlu0 %v448, 24
      %v1246 = vpop.permute.xlu0 %1245
      %1247 = vrot.lane.b32.xlu0 %v449, 24
      %v1248 = vpop.permute.xlu0 %1247
      %1249 = vrot.lane.b32.xlu0 %v450, 24
      %v1250 = vpop.permute.xlu0 %1249
      %1315 = vrot.lane.b32.xlu0 %v451, 28
      %v1316 = vpop.permute.xlu0 %1315
      %1317 = vrot.lane.b32.xlu0 %v452, 28
      %v1318 = vpop.permute.xlu0 %1317
      %1319 = vrot.lane.b32.xlu0 %v453, 28
      %v1320 = vpop.permute.xlu0 %1319
      %1321 = vrot.lane.b32.xlu0 %v454, 28
      %v1322 = vpop.permute.xlu0 %1321
      %1323 = vrot.lane.b32.xlu0 %v455, 28
      %v1324 = vpop.permute.xlu0 %1323
      %1325 = vrot.lane.b32.xlu0 %v456, 28
      %v1326 = vpop.permute.xlu0 %1325
      %1327 = vrot.lane.b32.xlu0 %v457, 28
      %v1328 = vpop.permute.xlu0 %1327
      %1329 = vrot.lane.b32.xlu0 %v458, 28
      %v1330 = vpop.permute.xlu0 %1329
      %1331 = vrot.lane.b32.xlu0 %v459, 28
      %v1332 = vpop.permute.xlu0 %1331
      %1333 = vrot.lane.b32.xlu0 %v460, 28
      %v1334 = vpop.permute.xlu0 %1333
      %1335 = vrot.lane.b32.xlu0 %v461, 28
      %v1336 = vpop.permute.xlu0 %1335
      %1337 = vrot.lane.b32.xlu0 %v462, 28
      %v1338 = vpop.permute.xlu0 %1337
      %1339 = vrot.lane.b32.xlu0 %v463, 28
      %v1340 = vpop.permute.xlu0 %1339
      %1341 = vrot.lane.b32.xlu0 %v464, 28
      %v1342 = vpop.permute.xlu0 %1341
      %1343 = vrot.lane.b32.xlu0 %v465, 28
      %v1344 = vpop.permute.xlu0 %1343
      %1345 = vrot.lane.b32.xlu0 %v466, 28
      %v1346 = vpop.permute.xlu0 %1345
      %1347 = vrot.lane.b32.xlu0 %v467, 28
      %v1348 = vpop.permute.xlu0 %1347
      %1349 = vrot.lane.b32.xlu0 %v468, 28
      %v1350 = vpop.permute.xlu0 %1349
      %1351 = vrot.lane.b32.xlu0 %v469, 28
      %v1352 = vpop.permute.xlu0 %1351
      %1353 = vrot.lane.b32.xlu0 %v470, 28
      %v1354 = vpop.permute.xlu0 %1353
      %1355 = vrot.lane.b32.xlu0 %v471, 28
      %v1356 = vpop.permute.xlu0 %1355
      %1357 = vrot.lane.b32.xlu0 %v472, 28
      %v1358 = vpop.permute.xlu0 %1357
      %1359 = vrot.lane.b32.xlu0 %v473, 28
      %v1360 = vpop.permute.xlu0 %1359
      %1361 = vrot.lane.b32.xlu0 %v474, 28
      %v1362 = vpop.permute.xlu0 %1361
      %1363 = vrot.lane.b32.xlu0 %v475, 28
      %v1364 = vpop.permute.xlu0 %1363
      %1365 = vrot.lane.b32.xlu0 %v476, 28
      %v1366 = vpop.permute.xlu0 %1365
      %1367 = vrot.lane.b32.xlu0 %v477, 28
      %v1368 = vpop.permute.xlu0 %1367
      %1369 = vrot.lane.b32.xlu0 %v478, 28
      %v1370 = vpop.permute.xlu0 %1369
      %1371 = vrot.lane.b32.xlu0 %v479, 28
      %v1372 = vpop.permute.xlu0 %1371
      %1373 = vrot.lane.b32.xlu0 %v480, 28
      %v1374 = vpop.permute.xlu0 %1373
      %1375 = vrot.lane.b32.xlu0 %v481, 28
      %v1376 = vpop.permute.xlu0 %1375
      %1377 = vrot.lane.b32.xlu0 %v482, 28
      %v1378 = vpop.permute.xlu0 %1377
      %1443 = vrot.lane.b32.xlu0 %v483, 32
      %v1444 = vpop.permute.xlu0 %1443
      %1445 = vrot.lane.b32.xlu0 %v484, 32
      %v1446 = vpop.permute.xlu0 %1445
      %1447 = vrot.lane.b32.xlu0 %v485, 32
      %v1448 = vpop.permute.xlu0 %1447
      %1449 = vrot.lane.b32.xlu0 %v486, 32
      %v1450 = vpop.permute.xlu0 %1449
      %1451 = vrot.lane.b32.xlu0 %v487, 32
      %v1452 = vpop.permute.xlu0 %1451
      %1453 = vrot.lane.b32.xlu0 %v488, 32
      %v1454 = vpop.permute.xlu0 %1453
      %1455 = vrot.lane.b32.xlu0 %v489, 32
      %v1456 = vpop.permute.xlu0 %1455
      %1457 = vrot.lane.b32.xlu0 %v490, 32
      %v1458 = vpop.permute.xlu0 %1457
      %1459 = vrot.lane.b32.xlu0 %v491, 32
      %v1460 = vpop.permute.xlu0 %1459
      %1461 = vrot.lane.b32.xlu0 %v492, 32
      %v1462 = vpop.permute.xlu0 %1461
      %1463 = vrot.lane.b32.xlu0 %v493, 32
      %v1464 = vpop.permute.xlu0 %1463
      %1465 = vrot.lane.b32.xlu0 %v494, 32
      %v1466 = vpop.permute.xlu0 %1465
      %1467 = vrot.lane.b32.xlu0 %v495, 32
      %v1468 = vpop.permute.xlu0 %1467
      %1469 = vrot.lane.b32.xlu0 %v496, 32
      %v1470 = vpop.permute.xlu0 %1469
      %1471 = vrot.lane.b32.xlu0 %v497, 32
      %v1472 = vpop.permute.xlu0 %1471
      %1473 = vrot.lane.b32.xlu0 %v498, 32
      %v1474 = vpop.permute.xlu0 %1473
      %1475 = vrot.lane.b32.xlu0 %v499, 32
      %v1476 = vpop.permute.xlu0 %1475
      %1477 = vrot.lane.b32.xlu0 %v500, 32
      %v1478 = vpop.permute.xlu0 %1477
      %1479 = vrot.lane.b32.xlu0 %v501, 32
      %v1480 = vpop.permute.xlu0 %1479
      %1481 = vrot.lane.b32.xlu0 %v502, 32
      %v1482 = vpop.permute.xlu0 %1481
      %1483 = vrot.lane.b32.xlu0 %v503, 32
      %v1484 = vpop.permute.xlu0 %1483
      %1485 = vrot.lane.b32.xlu0 %v504, 32
      %v1486 = vpop.permute.xlu0 %1485
      %1487 = vrot.lane.b32.xlu0 %v505, 32
      %v1488 = vpop.permute.xlu0 %1487
      %1489 = vrot.lane.b32.xlu0 %v506, 32
      %v1490 = vpop.permute.xlu0 %1489
      %1491 = vrot.lane.b32.xlu0 %v507, 32
      %v1492 = vpop.permute.xlu0 %1491
      %1493 = vrot.lane.b32.xlu0 %v508, 32
      %v1494 = vpop.permute.xlu0 %1493
      %1495 = vrot.lane.b32.xlu0 %v509, 32
      %v1496 = vpop.permute.xlu0 %1495
      %1497 = vrot.lane.b32.xlu0 %v510, 32
      %v1498 = vpop.permute.xlu0 %1497
      %1499 = vrot.lane.b32.xlu0 %v511, 32
      %v1500 = vpop.permute.xlu0 %1499
      %1501 = vrot.lane.b32.xlu0 %v512, 32
      %v1502 = vpop.permute.xlu0 %1501
      %1503 = vrot.lane.b32.xlu0 %v513, 32
      %v1504 = vpop.permute.xlu0 %1503
      %1505 = vrot.lane.b32.xlu0 %v514, 32
      %v1506 = vpop.permute.xlu0 %1505
      %vm1539 = vcmask 31744
      %v1540 = vsel %vm1539, %v225, %v548
      %v1541 = vsel %vm1539, %v226, %v550
      %v1542 = vsel %vm1539, %v227, %v552
      %v1543 = vsel %vm1539, %v228, %v554
      %v1544 = vsel %vm1539, %v229, %v556
      %v1545 = vsel %vm1539, %v230, %v558
      %v1546 = vsel %vm1539, %v231, %v560
      %v1547 = vsel %vm1539, %v232, %v562
      %v1548 = vsel %vm1539, %v233, %v564
      %v1549 = vsel %vm1539, %v234, %v566
      %v1550 = vsel %vm1539, %v235, %v568
      %v1551 = vsel %vm1539, %v236, %v570
      %v1552 = vsel %vm1539, %v237, %v572
      %v1553 = vsel %vm1539, %v238, %v574
      %v1554 = vsel %vm1539, %v239, %v576
      %v1555 = vsel %vm1539, %v240, %v578
      %v1556 = vsel %vm1539, %v241, %v580
      %v1557 = vsel %vm1539, %v242, %v582
      %v1558 = vsel %vm1539, %v243, %v584
      %v1559 = vsel %vm1539, %v244, %v586
      %v1560 = vsel %vm1539, %v245, %v588
      %v1561 = vsel %vm1539, %v246, %v590
      %v1562 = vsel %vm1539, %v247, %v592
      %v1563 = vsel %vm1539, %v248, %v594
      %v1564 = vsel %vm1539, %v249, %v596
      %v1565 = vsel %vm1539, %v250, %v598
      %v1566 = vsel %vm1539, %v251, %v600
      %v1567 = vsel %vm1539, %v252, %v602
      %v1568 = vsel %vm1539, %v253, %v604
      %v1569 = vsel %vm1539, %v254, %v606
      %v1570 = vsel %vm1539, %v255, %v608
      %v1571 = vsel %vm1539, %v256, %v610
      %vm1572 = vcmask 64512
      %v1573 = vsel %vm1572, %v1540, %v676
      %v1574 = vsel %vm1572, %v1541, %v678
      %v1575 = vsel %vm1572, %v1542, %v680
      %v1576 = vsel %vm1572, %v1543, %v682
      %v1577 = vsel %vm1572, %v1544, %v684
      %v1578 = vsel %vm1572, %v1545, %v686
      %v1579 = vsel %vm1572, %v1546, %v688
      %v1580 = vsel %vm1572, %v1547, %v690
      %v1581 = vsel %vm1572, %v1548, %v692
      %v1582 = vsel %vm1572, %v1549, %v694
      %v1583 = vsel %vm1572, %v1550, %v696
      %v1584 = vsel %vm1572, %v1551, %v698
      %v1585 = vsel %vm1572, %v1552, %v700
      %v1586 = vsel %vm1572, %v1553, %v702
      %v1587 = vsel %vm1572, %v1554, %v704
      %v1588 = vsel %vm1572, %v1555, %v706
      %v1589 = vsel %vm1572, %v1556, %v708
      %v1590 = vsel %vm1572, %v1557, %v710
      %v1591 = vsel %vm1572, %v1558, %v712
      %v1592 = vsel %vm1572, %v1559, %v714
      %v1593 = vsel %vm1572, %v1560, %v716
      %v1594 = vsel %vm1572, %v1561, %v718
      %v1595 = vsel %vm1572, %v1562, %v720
      %v1596 = vsel %vm1572, %v1563, %v722
      %v1597 = vsel %vm1572, %v1564, %v724
      %v1598 = vsel %vm1572, %v1565, %v726
      %v1599 = vsel %vm1572, %v1566, %v728
      %v1600 = vsel %vm1572, %v1567, %v730
      %v1601 = vsel %vm1572, %v1568, %v732
      %v1602 = vsel %vm1572, %v1569, %v734
      %v1603 = vsel %vm1572, %v1570, %v736
      %v1604 = vsel %vm1572, %v1571, %v738
      %vm1605 = vcmask 97280
      %v1606 = vsel %vm1605, %v1573, %v804
      %v1607 = vsel %vm1605, %v1574, %v806
      %v1608 = vsel %vm1605, %v1575, %v808
      %v1609 = vsel %vm1605, %v1576, %v810
      %v1610 = vsel %vm1605, %v1577, %v812
      %v1611 = vsel %vm1605, %v1578, %v814
      %v1612 = vsel %vm1605, %v1579, %v816
      %v1613 = vsel %vm1605, %v1580, %v818
      %v1614 = vsel %vm1605, %v1581, %v820
      %v1615 = vsel %vm1605, %v1582, %v822
      %v1616 = vsel %vm1605, %v1583, %v824
      %v1617 = vsel %vm1605, %v1584, %v826
      %v1618 = vsel %vm1605, %v1585, %v828
      %v1619 = vsel %vm1605, %v1586, %v830
      %v1620 = vsel %vm1605, %v1587, %v832
      %v1621 = vsel %vm1605, %v1588, %v834
      %v1622 = vsel %vm1605, %v1589, %v836
      %v1623 = vsel %vm1605, %v1590, %v838
      %v1624 = vsel %vm1605, %v1591, %v840
      %v1625 = vsel %vm1605, %v1592, %v842
      %v1626 = vsel %vm1605, %v1593, %v844
      %v1627 = vsel %vm1605, %v1594, %v846
      %v1628 = vsel %vm1605, %v1595, %v848
      %v1629 = vsel %vm1605, %v1596, %v850
      %v1630 = vsel %vm1605, %v1597, %v852
      %v1631 = vsel %vm1605, %v1598, %v854
      %v1632 = vsel %vm1605, %v1599, %v856
      %v1633 = vsel %vm1605, %v1600, %v858
      %v1634 = vsel %vm1605, %v1601, %v860
      %v1635 = vsel %vm1605, %v1602, %v862
      %v1636 = vsel %vm1605, %v1603, %v864
      %v1637 = vsel %vm1605, %v1604, %v866
      %vm1638 = vcmask 130048
      %v1639 = vsel %vm1638, %v1606, %v932
      %v1640 = vsel %vm1638, %v1607, %v934
      %v1641 = vsel %vm1638, %v1608, %v936
      %v1642 = vsel %vm1638, %v1609, %v938
      %v1643 = vsel %vm1638, %v1610, %v940
      %v1644 = vsel %vm1638, %v1611, %v942
      %v1645 = vsel %vm1638, %v1612, %v944
      %v1646 = vsel %vm1638, %v1613, %v946
      %v1647 = vsel %vm1638, %v1614, %v948
      %v1648 = vsel %vm1638, %v1615, %v950
      %v1649 = vsel %vm1638, %v1616, %v952
      %v1650 = vsel %vm1638, %v1617, %v954
      %v1651 = vsel %vm1638, %v1618, %v956
      %v1652 = vsel %vm1638, %v1619, %v958
      %v1653 = vsel %vm1638, %v1620, %v960
      %v1654 = vsel %vm1638, %v1621, %v962
      %v1655 = vsel %vm1638, %v1622, %v964
      %v1656 = vsel %vm1638, %v1623, %v966
      %v1657 = vsel %vm1638, %v1624, %v968
      %v1658 = vsel %vm1638, %v1625, %v970
      %v1659 = vsel %vm1638, %v1626, %v972
      %v1660 = vsel %vm1638, %v1627, %v974
      %v1661 = vsel %vm1638, %v1628, %v976
      %v1662 = vsel %vm1638, %v1629, %v978
      %v1663 = vsel %vm1638, %v1630, %v980
      %v1664 = vsel %vm1638, %v1631, %v982
      %v1665 = vsel %vm1638, %v1632, %v984
      %v1666 = vsel %vm1638, %v1633, %v986
      %v1667 = vsel %vm1638, %v1634, %v988
      %v1668 = vsel %vm1638, %v1635, %v990
      %v1669 = vsel %vm1638, %v1636, %v992
      %v1670 = vsel %vm1638, %v1637, %v994
      %vm1671 = vcmask 162816
      %v1672 = vsel %vm1671, %v1639, %v1060
      %v1673 = vsel %vm1671, %v1640, %v1062
      %v1674 = vsel %vm1671, %v1641, %v1064
      %v1675 = vsel %vm1671, %v1642, %v1066
      %v1676 = vsel %vm1671, %v1643, %v1068
      %v1677 = vsel %vm1671, %v1644, %v1070
      %v1678 = vsel %vm1671, %v1645, %v1072
      %v1679 = vsel %vm1671, %v1646, %v1074
      %v1680 = vsel %vm1671, %v1647, %v1076
      %v1681 = vsel %vm1671, %v1648, %v1078
      %v1682 = vsel %vm1671, %v1649, %v1080
      %v1683 = vsel %vm1671, %v1650, %v1082
      %v1684 = vsel %vm1671, %v1651, %v1084
      %v1685 = vsel %vm1671, %v1652, %v1086
      %v1686 = vsel %vm1671, %v1653, %v1088
      %v1687 = vsel %vm1671, %v1654, %v1090
      %v1688 = vsel %vm1671, %v1655, %v1092
      %v1689 = vsel %vm1671, %v1656, %v1094
      %v1690 = vsel %vm1671, %v1657, %v1096
      %v1691 = vsel %vm1671, %v1658, %v1098
      %v1692 = vsel %vm1671, %v1659, %v1100
      %v1693 = vsel %vm1671, %v1660, %v1102
      %v1694 = vsel %vm1671, %v1661, %v1104
      %v1695 = vsel %vm1671, %v1662, %v1106
      %v1696 = vsel %vm1671, %v1663, %v1108
      %v1697 = vsel %vm1671, %v1664, %v1110
      %v1698 = vsel %vm1671, %v1665, %v1112
      %v1699 = vsel %vm1671, %v1666, %v1114
      %v1700 = vsel %vm1671, %v1667, %v1116
      %v1701 = vsel %vm1671, %v1668, %v1118
      %v1702 = vsel %vm1671, %v1669, %v1120
      %v1703 = vsel %vm1671, %v1670, %v1122
      %vm1704 = vcmask 195584
      %v1705 = vsel %vm1704, %v1672, %v1188
      %v1706 = vsel %vm1704, %v1673, %v1190
      %v1707 = vsel %vm1704, %v1674, %v1192
      %v1708 = vsel %vm1704, %v1675, %v1194
      %v1709 = vsel %vm1704, %v1676, %v1196
      %v1710 = vsel %vm1704, %v1677, %v1198
      %v1711 = vsel %vm1704, %v1678, %v1200
      %v1712 = vsel %vm1704, %v1679, %v1202
      %v1713 = vsel %vm1704, %v1680, %v1204
      %v1714 = vsel %vm1704, %v1681, %v1206
      %v1715 = vsel %vm1704, %v1682, %v1208
      %v1716 = vsel %vm1704, %v1683, %v1210
      %v1717 = vsel %vm1704, %v1684, %v1212
      %v1718 = vsel %vm1704, %v1685, %v1214
      %v1719 = vsel %vm1704, %v1686, %v1216
      %v1720 = vsel %vm1704, %v1687, %v1218
      %v1721 = vsel %vm1704, %v1688, %v1220
      %v1722 = vsel %vm1704, %v1689, %v1222
      %v1723 = vsel %vm1704, %v1690, %v1224
      %v1724 = vsel %vm1704, %v1691, %v1226
      %v1725 = vsel %vm1704, %v1692, %v1228
      %v1726 = vsel %vm1704, %v1693, %v1230
      %v1727 = vsel %vm1704, %v1694, %v1232
      %v1728 = vsel %vm1704, %v1695, %v1234
      %v1729 = vsel %vm1704, %v1696, %v1236
      %v1730 = vsel %vm1704, %v1697, %v1238
      %v1731 = vsel %vm1704, %v1698, %v1240
      %v1732 = vsel %vm1704, %v1699, %v1242
      %v1733 = vsel %vm1704, %v1700, %v1244
      %v1734 = vsel %vm1704, %v1701, %v1246
      %v1735 = vsel %vm1704, %v1702, %v1248
      %v1736 = vsel %vm1704, %v1703, %v1250
      %vm1737 = vcmask 228352
      %v1738 = vsel %vm1737, %v1705, %v1316
      %v1739 = vsel %vm1737, %v1706, %v1318
      %v1740 = vsel %vm1737, %v1707, %v1320
      %v1741 = vsel %vm1737, %v1708, %v1322
      %v1742 = vsel %vm1737, %v1709, %v1324
      %v1743 = vsel %vm1737, %v1710, %v1326
      %v1744 = vsel %vm1737, %v1711, %v1328
      %v1745 = vsel %vm1737, %v1712, %v1330
      %v1746 = vsel %vm1737, %v1713, %v1332
      %v1747 = vsel %vm1737, %v1714, %v1334
      %v1748 = vsel %vm1737, %v1715, %v1336
      %v1749 = vsel %vm1737, %v1716, %v1338
      %v1750 = vsel %vm1737, %v1717, %v1340
      %v1751 = vsel %vm1737, %v1718, %v1342
      %v1752 = vsel %vm1737, %v1719, %v1344
      %v1753 = vsel %vm1737, %v1720, %v1346
      %v1754 = vsel %vm1737, %v1721, %v1348
      %v1755 = vsel %vm1737, %v1722, %v1350
      %v1756 = vsel %vm1737, %v1723, %v1352
      %v1757 = vsel %vm1737, %v1724, %v1354
      %v1758 = vsel %vm1737, %v1725, %v1356
      %v1759 = vsel %vm1737, %v1726, %v1358
      %v1760 = vsel %vm1737, %v1727, %v1360
      %v1761 = vsel %vm1737, %v1728, %v1362
      %v1762 = vsel %vm1737, %v1729, %v1364
      %v1763 = vsel %vm1737, %v1730, %v1366
      %v1764 = vsel %vm1737, %v1731, %v1368
      %v1765 = vsel %vm1737, %v1732, %v1370
      %v1766 = vsel %vm1737, %v1733, %v1372
      %v1767 = vsel %vm1737, %v1734, %v1374
      %v1768 = vsel %vm1737, %v1735, %v1376
      %v1769 = vsel %vm1737, %v1736, %v1378
      %vm1770 = vcmask 261120
      %v1771 = vsel %vm1770, %v1738, %v1444
      %v1772 = vsel %vm1770, %v1739, %v1446
      %v1773 = vsel %vm1770, %v1740, %v1448
      %v1774 = vsel %vm1770, %v1741, %v1450
      %v1775 = vsel %vm1770, %v1742, %v1452
      %v1776 = vsel %vm1770, %v1743, %v1454
      %v1777 = vsel %vm1770, %v1744, %v1456
      %v1778 = vsel %vm1770, %v1745, %v1458
      %v1779 = vsel %vm1770, %v1746, %v1460
      %v1780 = vsel %vm1770, %v1747, %v1462
      %v1781 = vsel %vm1770, %v1748, %v1464
      %v1782 = vsel %vm1770, %v1749, %v1466
      %v1783 = vsel %vm1770, %v1750, %v1468
      %v1784 = vsel %vm1770, %v1751, %v1470
      %v1785 = vsel %vm1770, %v1752, %v1472
      %v1786 = vsel %vm1770, %v1753, %v1474
      %v1787 = vsel %vm1770, %v1754, %v1476
      %v1788 = vsel %vm1770, %v1755, %v1478
      %v1789 = vsel %vm1770, %v1756, %v1480
      %v1790 = vsel %vm1770, %v1757, %v1482
      %v1791 = vsel %vm1770, %v1758, %v1484
      %v1792 = vsel %vm1770, %v1759, %v1486
      %v1793 = vsel %vm1770, %v1760, %v1488
      %v1794 = vsel %vm1770, %v1761, %v1490
      %v1795 = vsel %vm1770, %v1762, %v1492
      %v1796 = vsel %vm1770, %v1763, %v1494
      %v1797 = vsel %vm1770, %v1764, %v1496
      %v1798 = vsel %vm1770, %v1765, %v1498
      %v1799 = vsel %vm1770, %v1766, %v1500
      %v1800 = vsel %vm1770, %v1767, %v1502
      %v1801 = vsel %vm1770, %v1768, %v1504
      %v1802 = vsel %vm1770, %v1769, %v1506
      %v1803 = vld [vmem:[%s1] sm:$0xff]
      %v1804 = vld [vmem:[%s1 + $0x8] sm:$0xff]
      %v1805 = vld [vmem:[%s1 + $0x10] sm:$0xff]
      %v1806 = vld [vmem:[%s1 + $0x18] sm:$0xff]
      %v1807 = vld [vmem:[%s1 + $0x20] sm:$0xf]
      %v1808 = vld [vmem:[%s2] sm:$0x1]
      %v1810 = vlaneseq
      %v1811 = vshrl.u32 %v1810, 7
      %v1812 = vsub.s32 0, %v1811
      %v1813 = vrot.slane %v1808, %v1812
      %vm1815 = vcmask 293888
      %v1817 = vsel %vm1815, %v1771, 0
      %v1820 = vsel %vm1815, %v1772, 0
      %v1823 = vsel %vm1815, %v1773, 0
      %v1826 = vsel %vm1815, %v1774, 0
      %v1829 = vsel %vm1815, %v1775, 0
      %v1832 = vsel %vm1815, %v1776, 0
      %v1835 = vsel %vm1815, %v1777, 0
      %v1838 = vsel %vm1815, %v1778, 0
      %v1841 = vsel %vm1815, %v1779, 0
      %v1844 = vsel %vm1815, %v1780, 0
      %v1847 = vsel %vm1815, %v1781, 0
      %v1850 = vsel %vm1815, %v1782, 0
      %v1853 = vsel %vm1815, %v1783, 0
      %v1856 = vsel %vm1815, %v1784, 0
      %v1859 = vsel %vm1815, %v1785, 0
      %v1862 = vsel %vm1815, %v1786, 0
      %v1865 = vsel %vm1815, %v1787, 0
      %v1868 = vsel %vm1815, %v1788, 0
      %v1871 = vsel %vm1815, %v1789, 0
      %v1874 = vsel %vm1815, %v1790, 0
      %v1877 = vsel %vm1815, %v1791, 0
      %v1880 = vsel %vm1815, %v1792, 0
      %v1883 = vsel %vm1815, %v1793, 0
      %v1886 = vsel %vm1815, %v1794, 0
      %v1889 = vsel %vm1815, %v1795, 0
      %v1892 = vsel %vm1815, %v1796, 0
      %v1895 = vsel %vm1815, %v1797, 0
      %v1898 = vsel %vm1815, %v1798, 0
      %v1901 = vsel %vm1815, %v1799, 0
      %v1904 = vsel %vm1815, %v1800, 0
      %v1907 = vsel %vm1815, %v1801, 0
      %v1910 = vsel %vm1815, %v1802, 0
      %vm1912 = vcmask 1043456
      %v1914 = vsel %vm1912, %v1807, 0
      %1916 = vmatprep.subr.mxu0 0.0
      %1917 = vmatpush1.msra.mxu0 0.0
      %1918 = vmatprep.subr.mxu0 0.0
      %1919 = vmatpush1.msra.mxu0 0.0
      %1920 = vmatprep.subr.mxu0 0.0
      %1921 = vmatpush1.msra.mxu0 0.0
      %1922 = vmatprep.subr.mxu0 0.0
      %1923 = vmatpush1.msra.mxu0 0.0
      %1924 = vmatprep.subr.mxu0 0.0
      %1925 = vmatpush1.msra.mxu0 0.0
      %1926 = vmatprep.subr.mxu0 0.0
      %1927 = vmatpush1.msra.mxu0 0.0
      %1928 = vmatprep.subr.mxu0 0.0
      %1929 = vmatpush1.msra.mxu0 0.0
      %1930 = vmatprep.subr.mxu0 0.0
      %1931 = vmatpush1.msra.mxu0 0.0
      %1932 = vmatprep.subr.mxu0 0.0
      %1933 = vmatpush1.msra.mxu0 0.0
      %1934 = vmatprep.subr.mxu0 0.0
      %1935 = vmatpush1.msra.mxu0 0.0
      %1936 = vmatprep.subr.mxu0 0.0
      %1937 = vmatpush1.msra.mxu0 0.0
      %1938 = vmatprep.subr.mxu0 0.0
      %1939 = vmatpush1.msra.mxu0 %v1914
      %1940 = vmatprep.subr.mxu0 0.0
      %1941 = vmatpush1.msra.mxu0 %v1806
      %1942 = vmatprep.subr.mxu0 0.0
      %1943 = vmatpush1.msra.mxu0 %v1805
      %1944 = vmatprep.subr.mxu0 0.0
      %1945 = vmatpush1.msra.mxu0 %v1804
      %1946 = vmatprep.subr.mxu0 0.0
      %1947 = vmatpush1.msra.mxu0 %v1803
      %1948 = vmatprep.subr.mxu0 0.0
      %1949 = vmatpush2.msra.mxu0 0.0
      %1950 = vmatprep.subr.mxu0 0.0
      %1951 = vmatpush2.msra.mxu0 0.0
      %1952 = vmatprep.subr.mxu0 0.0
      %1953 = vmatpush2.msra.mxu0 0.0
      %1954 = vmatprep.subr.mxu0 0.0
      %1955 = vmatpush2.msra.mxu0 0.0
      %1956 = vmatprep.subr.mxu0 0.0
      %1957 = vmatpush2.msra.mxu0 0.0
      %1958 = vmatprep.subr.mxu0 0.0
      %1959 = vmatpush2.msra.mxu0 0.0
      %1960 = vmatprep.subr.mxu0 0.0
      %1961 = vmatpush2.msra.mxu0 0.0
      %1962 = vmatprep.subr.mxu0 0.0
      %1963 = vmatpush2.msra.mxu0 0.0
      %1964 = vmatprep.subr.mxu0 0.0
      %1965 = vmatpush2.msra.mxu0 0.0
      %1966 = vmatprep.subr.mxu0 0.0
      %1967 = vmatpush2.msra.mxu0 0.0
      %1968 = vmatprep.subr.mxu0 0.0
      %1969 = vmatpush2.msra.mxu0 0.0
      %1970 = vmatprep.subr.mxu0 0.0
      %1971 = vmatpush2.msra.mxu0 0.0
      %1972 = vmatprep.subr.mxu0 0.0
      %1973 = vmatpush2.msra.mxu0 0.0
      %1974 = vmatprep.subr.mxu0 0.0
      %1975 = vmatpush2.msra.mxu0 0.0
      %1976 = vmatprep.subr.mxu0 0.0
      %1977 = vmatpush2.msra.mxu0 0.0
      %1978 = vmatprep.subr.mxu0 0.0
      %1979 = vmatpush2.msra.mxu0 0.0
      %1980 = vmatprep.mubr.f32.mxu0 0.0
      %1981 = vmatmul.mubr.f32.gmra.mxu0 %v1817
      %v1982 = vpop.f32.mrf.mxu0
      %v1983 = vadd.f32 %v1813, %v1982
      %v1984 = vpop.f32.mrf.mxu0
      %1985 = vmatprep.mubr.f32.mxu0 0.0
      %1986 = vmatmul.mubr.f32.gmra.mxu0 %v1820
      %v1987 = vpop.f32.mrf.mxu0
      %v1988 = vadd.f32 %v1813, %v1987
      %v1989 = vpop.f32.mrf.mxu0
      %1990 = vmatprep.mubr.f32.mxu0 0.0
      %1991 = vmatmul.mubr.f32.gmra.mxu0 %v1823
      %v1992 = vpop.f32.mrf.mxu0
      %v1993 = vadd.f32 %v1813, %v1992
      %v1994 = vpop.f32.mrf.mxu0
      %1995 = vmatprep.mubr.f32.mxu0 0.0
      %1996 = vmatmul.mubr.f32.gmra.mxu0 %v1826
      %v1997 = vpop.f32.mrf.mxu0
      %v1998 = vadd.f32 %v1813, %v1997
      %v1999 = vpop.f32.mrf.mxu0
      %2000 = vmatprep.mubr.f32.mxu0 0.0
      %2001 = vmatmul.mubr.f32.gmra.mxu0 %v1829
      %v2002 = vpop.f32.mrf.mxu0
      %v2003 = vadd.f32 %v1813, %v2002
      %v2004 = vpop.f32.mrf.mxu0
      %2005 = vmatprep.mubr.f32.mxu0 0.0
      %2006 = vmatmul.mubr.f32.gmra.mxu0 %v1832
      %v2007 = vpop.f32.mrf.mxu0
      %v2008 = vadd.f32 %v1813, %v2007
      %v2009 = vpop.f32.mrf.mxu0
      %2010 = vmatprep.mubr.f32.mxu0 0.0
      %2011 = vmatmul.mubr.f32.gmra.mxu0 %v1835
      %v2012 = vpop.f32.mrf.mxu0
      %v2013 = vadd.f32 %v1813, %v2012
      %v2014 = vpop.f32.mrf.mxu0
      %2015 = vmatprep.mubr.f32.mxu0 0.0
      %2016 = vmatmul.mubr.f32.gmra.mxu0 %v1838
      %v2017 = vpop.f32.mrf.mxu0
      %v2018 = vadd.f32 %v1813, %v2017
      %v2019 = vpop.f32.mrf.mxu0
      %2020 = vmatprep.mubr.f32.mxu0 0.0
      %2021 = vmatmul.mubr.f32.gmra.mxu0 %v1841
      %v2022 = vpop.f32.mrf.mxu0
      %v2023 = vadd.f32 %v1813, %v2022
      %v2024 = vpop.f32.mrf.mxu0
      %2025 = vmatprep.mubr.f32.mxu0 0.0
      %2026 = vmatmul.mubr.f32.gmra.mxu0 %v1844
      %v2027 = vpop.f32.mrf.mxu0
      %v2028 = vadd.f32 %v1813, %v2027
      %v2029 = vpop.f32.mrf.mxu0
      %2030 = vmatprep.mubr.f32.mxu0 0.0
      %2031 = vmatmul.mubr.f32.gmra.mxu0 %v1847
      %v2032 = vpop.f32.mrf.mxu0
      %v2033 = vadd.f32 %v1813, %v2032
      %v2034 = vpop.f32.mrf.mxu0
      %2035 = vmatprep.mubr.f32.mxu0 0.0
      %2036 = vmatmul.mubr.f32.gmra.mxu0 %v1850
      %v2037 = vpop.f32.mrf.mxu0
      %v2038 = vadd.f32 %v1813, %v2037
      %v2039 = vpop.f32.mrf.mxu0
      %2040 = vmatprep.mubr.f32.mxu0 0.0
      %2041 = vmatmul.mubr.f32.gmra.mxu0 %v1853
      %v2042 = vpop.f32.mrf.mxu0
      %v2043 = vadd.f32 %v1813, %v2042
      %v2044 = vpop.f32.mrf.mxu0
      %2045 = vmatprep.mubr.f32.mxu0 0.0
      %2046 = vmatmul.mubr.f32.gmra.mxu0 %v1856
      %v2047 = vpop.f32.mrf.mxu0
      %v2048 = vadd.f32 %v1813, %v2047
      %v2049 = vpop.f32.mrf.mxu0
      %2050 = vmatprep.mubr.f32.mxu0 0.0
      %2051 = vmatmul.mubr.f32.gmra.mxu0 %v1859
      %v2052 = vpop.f32.mrf.mxu0
      %v2053 = vadd.f32 %v1813, %v2052
      %v2054 = vpop.f32.mrf.mxu0
      %2055 = vmatprep.mubr.f32.mxu0 0.0
      %2056 = vmatmul.mubr.f32.gmra.mxu0 %v1862
      %v2057 = vpop.f32.mrf.mxu0
      %v2058 = vadd.f32 %v1813, %v2057
      %v2059 = vpop.f32.mrf.mxu0
      %2060 = vmatprep.mubr.f32.mxu0 0.0
      %2061 = vmatmul.mubr.f32.gmra.mxu0 %v1865
      %v2062 = vpop.f32.mrf.mxu0
      %v2063 = vadd.f32 %v1813, %v2062
      %v2064 = vpop.f32.mrf.mxu0
      %2065 = vmatprep.mubr.f32.mxu0 0.0
      %2066 = vmatmul.mubr.f32.gmra.mxu0 %v1868
      %v2067 = vpop.f32.mrf.mxu0
      %v2068 = vadd.f32 %v1813, %v2067
      %v2069 = vpop.f32.mrf.mxu0
      %2070 = vmatprep.mubr.f32.mxu0 0.0
      %2071 = vmatmul.mubr.f32.gmra.mxu0 %v1871
      %v2072 = vpop.f32.mrf.mxu0
      %v2073 = vadd.f32 %v1813, %v2072
      %v2074 = vpop.f32.mrf.mxu0
      %2075 = vmatprep.mubr.f32.mxu0 0.0
      %2076 = vmatmul.mubr.f32.gmra.mxu0 %v1874
      %v2077 = vpop.f32.mrf.mxu0
      %v2078 = vadd.f32 %v1813, %v2077
      %v2079 = vpop.f32.mrf.mxu0
      %2080 = vmatprep.mubr.f32.mxu0 0.0
      %2081 = vmatmul.mubr.f32.gmra.mxu0 %v1877
      %v2082 = vpop.f32.mrf.mxu0
      %v2083 = vadd.f32 %v1813, %v2082
      %v2084 = vpop.f32.mrf.mxu0
      %2085 = vmatprep.mubr.f32.mxu0 0.0
      %2086 = vmatmul.mubr.f32.gmra.mxu0 %v1880
      %v2087 = vpop.f32.mrf.mxu0
      %v2088 = vadd.f32 %v1813, %v2087
      %v2089 = vpop.f32.mrf.mxu0
      %2090 = vmatprep.mubr.f32.mxu0 0.0
      %2091 = vmatmul.mubr.f32.gmra.mxu0 %v1883
      %v2092 = vpop.f32.mrf.mxu0
      %v2093 = vadd.f32 %v1813, %v2092
      %v2094 = vpop.f32.mrf.mxu0
      %2095 = vmatprep.mubr.f32.mxu0 0.0
      %2096 = vmatmul.mubr.f32.gmra.mxu0 %v1886
      %v2097 = vpop.f32.mrf.mxu0
      %v2098 = vadd.f32 %v1813, %v2097
      %v2099 = vpop.f32.mrf.mxu0
      %2100 = vmatprep.mubr.f32.mxu0 0.0
      %2101 = vmatmul.mubr.f32.gmra.mxu0 %v1889
      %v2102 = vpop.f32.mrf.mxu0
      %v2103 = vadd.f32 %v1813, %v2102
      %v2104 = vpop.f32.mrf.mxu0
      %2105 = vmatprep.mubr.f32.mxu0 0.0
      %2106 = vmatmul.mubr.f32.gmra.mxu0 %v1892
      %v2107 = vpop.f32.mrf.mxu0
      %v2108 = vadd.f32 %v1813, %v2107
      %v2109 = vpop.f32.mrf.mxu0
      %2110 = vmatprep.mubr.f32.mxu0 0.0
      %2111 = vmatmul.mubr.f32.gmra.mxu0 %v1895
      %v2112 = vpop.f32.mrf.mxu0
      %v2113 = vadd.f32 %v1813, %v2112
      %v2114 = vpop.f32.mrf.mxu0
      %2115 = vmatprep.mubr.f32.mxu0 0.0
      %2116 = vmatmul.mubr.f32.gmra.mxu0 %v1898
      %v2117 = vpop.f32.mrf.mxu0
      %v2118 = vadd.f32 %v1813, %v2117
      %v2119 = vpop.f32.mrf.mxu0
      %2120 = vmatprep.mubr.f32.mxu0 0.0
      %2121 = vmatmul.mubr.f32.gmra.mxu0 %v1901
      %v2122 = vpop.f32.mrf.mxu0
      %v2123 = vadd.f32 %v1813, %v2122
      %v2124 = vpop.f32.mrf.mxu0
      %2125 = vmatprep.mubr.f32.mxu0 0.0
      %2126 = vmatmul.mubr.f32.gmra.mxu0 %v1904
      %v2127 = vpop.f32.mrf.mxu0
      %v2128 = vadd.f32 %v1813, %v2127
      %v2129 = vpop.f32.mrf.mxu0
      %2130 = vmatprep.mubr.f32.mxu0 0.0
      %2131 = vmatmul.mubr.f32.gmra.mxu0 %v1907
      %v2132 = vpop.f32.mrf.mxu0
      %v2133 = vadd.f32 %v1813, %v2132
      %v2134 = vpop.f32.mrf.mxu0
      %2135 = vmatprep.mubr.f32.mxu0 0.0
      %2136 = vmatmul.mubr.f32.gmra.mxu0 %v1910
      %v2137 = vpop.f32.mrf.mxu0
      %v2138 = vadd.f32 %v1813, %v2137
      %v2139 = vpop.f32.mrf.mxu0
      %2140 = vdwg.mxu0
      %v2141 = vmax.f32 %v1983, 0.0
      %v2142 = vmax.f32 %v1988, 0.0
      %v2143 = vmax.f32 %v1993, 0.0
      %v2144 = vmax.f32 %v1998, 0.0
      %v2145 = vmax.f32 %v2003, 0.0
      %v2146 = vmax.f32 %v2008, 0.0
      %v2147 = vmax.f32 %v2013, 0.0
      %v2148 = vmax.f32 %v2018, 0.0
      %v2149 = vmax.f32 %v2023, 0.0
      %v2150 = vmax.f32 %v2028, 0.0
      %v2151 = vmax.f32 %v2033, 0.0
      %v2152 = vmax.f32 %v2038, 0.0
      %v2153 = vmax.f32 %v2043, 0.0
      %v2154 = vmax.f32 %v2048, 0.0
      %v2155 = vmax.f32 %v2053, 0.0
      %v2156 = vmax.f32 %v2058, 0.0
      %v2157 = vmax.f32 %v2063, 0.0
      %v2158 = vmax.f32 %v2068, 0.0
      %v2159 = vmax.f32 %v2073, 0.0
      %v2160 = vmax.f32 %v2078, 0.0
      %v2161 = vmax.f32 %v2083, 0.0
      %v2162 = vmax.f32 %v2088, 0.0
      %v2163 = vmax.f32 %v2093, 0.0
      %v2164 = vmax.f32 %v2098, 0.0
      %v2165 = vmax.f32 %v2103, 0.0
      %v2166 = vmax.f32 %v2108, 0.0
      %v2167 = vmax.f32 %v2113, 0.0
      %v2168 = vmax.f32 %v2118, 0.0
      %v2169 = vmax.f32 %v2123, 0.0
      %v2170 = vmax.f32 %v2128, 0.0
      %v2171 = vmax.f32 %v2133, 0.0
      %v2172 = vmax.f32 %v2138, 0.0
      %v2189 = vrot.slane %v2143, 1
      %v2190 = vrot.slane %v2141, 1
      %v2191 = vrot.slane %v2145, 1
      %v2192 = vrot.slane %v2147, 1
      %v2193 = vrot.slane %v2149, 1
      %v2194 = vrot.slane %v2151, 1
      %v2195 = vrot.slane %v2153, 1
      %v2196 = vrot.slane %v2155, 1
      %v2197 = vrot.slane %v2157, 1
      %v2198 = vrot.slane %v2159, 1
      %v2199 = vrot.slane %v2161, 1
      %v2200 = vrot.slane %v2163, 1
      %v2201 = vrot.slane %v2165, 1
      %v2202 = vrot.slane %v2167, 1
      %v2203 = vrot.slane %v2169, 1
      %v2204 = vrot.slane %v2171, 1
      %vm2237 = vcmask 1040384
      %v2238 = vrot.slane %v2143, 7
      %v2239 = vrot.slane %v2144, 7
      %v2240 = vsel %vm2237, %v2238, %v2239
      %v2241 = vrot.slane %v2141, 7
      %v2242 = vrot.slane %v2142, 7
      %v2243 = vsel %vm2237, %v2241, %v2242
      %v2244 = vrot.slane %v2145, 7
      %v2245 = vrot.slane %v2146, 7
      %v2246 = vsel %vm2237, %v2244, %v2245
      %v2247 = vrot.slane %v2147, 7
      %v2248 = vrot.slane %v2148, 7
      %v2249 = vsel %vm2237, %v2247, %v2248
      %v2250 = vrot.slane %v2149, 7
      %v2251 = vrot.slane %v2150, 7
      %v2252 = vsel %vm2237, %v2250, %v2251
      %v2253 = vrot.slane %v2151, 7
      %v2254 = vrot.slane %v2152, 7
      %v2255 = vsel %vm2237, %v2253, %v2254
      %v2256 = vrot.slane %v2153, 7
      %v2257 = vrot.slane %v2154, 7
      %v2258 = vsel %vm2237, %v2256, %v2257
      %v2259 = vrot.slane %v2155, 7
      %v2260 = vrot.slane %v2156, 7
      %v2261 = vsel %vm2237, %v2259, %v2260
      %v2262 = vrot.slane %v2157, 7
      %v2263 = vrot.slane %v2158, 7
      %v2264 = vsel %vm2237, %v2262, %v2263
      %v2265 = vrot.slane %v2159, 7
      %v2266 = vrot.slane %v2160, 7
      %v2267 = vsel %vm2237, %v2265, %v2266
      %v2268 = vrot.slane %v2161, 7
      %v2269 = vrot.slane %v2162, 7
      %v2270 = vsel %vm2237, %v2268, %v2269
      %v2271 = vrot.slane %v2163, 7
      %v2272 = vrot.slane %v2164, 7
      %v2273 = vsel %vm2237, %v2271, %v2272
      %v2274 = vrot.slane %v2165, 7
      %v2275 = vrot.slane %v2166, 7
      %v2276 = vsel %vm2237, %v2274, %v2275
      %v2277 = vrot.slane %v2167, 7
      %v2278 = vrot.slane %v2168, 7
      %v2279 = vsel %vm2237, %v2277, %v2278
      %v2280 = vrot.slane %v2169, 7
      %v2281 = vrot.slane %v2170, 7
      %v2282 = vsel %vm2237, %v2280, %v2281
      %v2283 = vrot.slane %v2171, 7
      %v2284 = vrot.slane %v2172, 7
      %v2285 = vsel %vm2237, %v2283, %v2284
      %v2333 = vrot.slane %v2144, 5
      %v2334 = vrot.slane %v2142, 5
      %v2335 = vrot.slane %v2146, 5
      %v2336 = vrot.slane %v2148, 5
      %v2337 = vrot.slane %v2150, 5
      %v2338 = vrot.slane %v2152, 5
      %v2339 = vrot.slane %v2154, 5
      %v2340 = vrot.slane %v2156, 5
      %v2341 = vrot.slane %v2158, 5
      %v2342 = vrot.slane %v2160, 5
      %v2343 = vrot.slane %v2162, 5
      %v2344 = vrot.slane %v2164, 5
      %v2345 = vrot.slane %v2166, 5
      %v2346 = vrot.slane %v2168, 5
      %v2347 = vrot.slane %v2170, 5
      %v2348 = vrot.slane %v2172, 5
      %v2365 = vsel %vm2237, %v2189, %v2238
      %v2366 = vsel %vm2237, %v2190, %v2241
      %v2367 = vsel %vm2237, %v2191, %v2244
      %v2368 = vsel %vm2237, %v2192, %v2247
      %v2369 = vsel %vm2237, %v2193, %v2250
      %v2370 = vsel %vm2237, %v2194, %v2253
      %v2371 = vsel %vm2237, %v2195, %v2256
      %v2372 = vsel %vm2237, %v2196, %v2259
      %v2373 = vsel %vm2237, %v2197, %v2262
      %v2374 = vsel %vm2237, %v2198, %v2265
      %v2375 = vsel %vm2237, %v2199, %v2268
      %v2376 = vsel %vm2237, %v2200, %v2271
      %v2377 = vsel %vm2237, %v2201, %v2274
      %v2378 = vsel %vm2237, %v2202, %v2277
      %v2379 = vsel %vm2237, %v2203, %v2280
      %v2380 = vsel %vm2237, %v2204, %v2283
      %v2381 = vsel %vm2237, %v2239, %v2333
      %v2382 = vsel %vm2237, %v2242, %v2334
      %v2383 = vsel %vm2237, %v2245, %v2335
      %v2384 = vsel %vm2237, %v2248, %v2336
      %v2385 = vsel %vm2237, %v2251, %v2337
      %v2386 = vsel %vm2237, %v2254, %v2338
      %v2387 = vsel %vm2237, %v2257, %v2339
      %v2388 = vsel %vm2237, %v2260, %v2340
      %v2389 = vsel %vm2237, %v2263, %v2341
      %v2390 = vsel %vm2237, %v2266, %v2342
      %v2391 = vsel %vm2237, %v2269, %v2343
      %v2392 = vsel %vm2237, %v2272, %v2344
      %v2393 = vsel %vm2237, %v2275, %v2345
      %v2394 = vsel %vm2237, %v2278, %v2346
      %v2395 = vsel %vm2237, %v2281, %v2347
      %v2396 = vsel %vm2237, %v2284, %v2348
      %vm2427 = vcmask 1046528
      %v2428 = vrot.slane %v2365, 1
      %v2429 = vrot.slane %v2240, 1
      %v2430 = vsel %vm2427, %v2428, %v2429
      %v2431 = vrot.slane %v2381, 1
      %v2432 = vsel %vm2427, %v2429, %v2431
      %v2433 = vrot.slane %v2366, 1
      %v2434 = vrot.slane %v2243, 1
      %v2435 = vsel %vm2427, %v2433, %v2434
      %v2436 = vrot.slane %v2382, 1
      %v2437 = vsel %vm2427, %v2434, %v2436
      %v2438 = vrot.slane %v2367, 1
      %v2439 = vrot.slane %v2246, 1
      %v2440 = vsel %vm2427, %v2438, %v2439
      %v2441 = vrot.slane %v2383, 1
      %v2442 = vsel %vm2427, %v2439, %v2441
      %v2443 = vrot.slane %v2368, 1
      %v2444 = vrot.slane %v2249, 1
      %v2445 = vsel %vm2427, %v2443, %v2444
      %v2446 = vrot.slane %v2384, 1
      %v2447 = vsel %vm2427, %v2444, %v2446
      %v2448 = vrot.slane %v2369, 1
      %v2449 = vrot.slane %v2252, 1
      %v2450 = vsel %vm2427, %v2448, %v2449
      %v2451 = vrot.slane %v2385, 1
      %v2452 = vsel %vm2427, %v2449, %v2451
      %v2453 = vrot.slane %v2370, 1
      %v2454 = vrot.slane %v2255, 1
      %v2455 = vsel %vm2427, %v2453, %v2454
      %v2456 = vrot.slane %v2386, 1
      %v2457 = vsel %vm2427, %v2454, %v2456
      %v2458 = vrot.slane %v2371, 1
      %v2459 = vrot.slane %v2258, 1
      %v2460 = vsel %vm2427, %v2458, %v2459
      %v2461 = vrot.slane %v2387, 1
      %v2462 = vsel %vm2427, %v2459, %v2461
      %v2463 = vrot.slane %v2372, 1
      %v2464 = vrot.slane %v2261, 1
      %v2465 = vsel %vm2427, %v2463, %v2464
      %v2466 = vrot.slane %v2388, 1
      %v2467 = vsel %vm2427, %v2464, %v2466
      %v2468 = vrot.slane %v2373, 1
      %v2469 = vrot.slane %v2264, 1
      %v2470 = vsel %vm2427, %v2468, %v2469
      %v2471 = vrot.slane %v2389, 1
      %v2472 = vsel %vm2427, %v2469, %v2471
      %v2473 = vrot.slane %v2374, 1
      %v2474 = vrot.slane %v2267, 1
      %v2475 = vsel %vm2427, %v2473, %v2474
      %v2476 = vrot.slane %v2390, 1
      %v2477 = vsel %vm2427, %v2474, %v2476
      %v2478 = vrot.slane %v2375, 1
      %v2479 = vrot.slane %v2270, 1
      %v2480 = vsel %vm2427, %v2478, %v2479
      %v2481 = vrot.slane %v2391, 1
      %v2482 = vsel %vm2427, %v2479, %v2481
      %v2483 = vrot.slane %v2376, 1
      %v2484 = vrot.slane %v2273, 1
      %v2485 = vsel %vm2427, %v2483, %v2484
      %v2486 = vrot.slane %v2392, 1
      %v2487 = vsel %vm2427, %v2484, %v2486
      %v2488 = vrot.slane %v2377, 1
      %v2489 = vrot.slane %v2276, 1
      %v2490 = vsel %vm2427, %v2488, %v2489
      %v2491 = vrot.slane %v2393, 1
      %v2492 = vsel %vm2427, %v2489, %v2491
      %v2493 = vrot.slane %v2378, 1
      %v2494 = vrot.slane %v2279, 1
      %v2495 = vsel %vm2427, %v2493, %v2494
      %v2496 = vrot.slane %v2394, 1
      %v2497 = vsel %vm2427, %v2494, %v2496
      %v2498 = vrot.slane %v2379, 1
      %v2499 = vrot.slane %v2282, 1
      %v2500 = vsel %vm2427, %v2498, %v2499
      %v2501 = vrot.slane %v2395, 1
      %v2502 = vsel %vm2427, %v2499, %v2501
      %2503 = vrot.lane.b32.xlu0 %v2430, 8
      %v2504 = vpop.permute.xlu0 %2503
      %2505 = vrot.lane.b32.xlu0 %v2432, 8
      %v2506 = vpop.permute.xlu0 %2505
      %2507 = vrot.lane.b32.xlu0 %v2435, 8
      %v2508 = vpop.permute.xlu0 %2507
      %2509 = vrot.lane.b32.xlu0 %v2437, 8
      %v2510 = vpop.permute.xlu0 %2509
      %2511 = vrot.lane.b32.xlu0 %v2440, 8
      %v2512 = vpop.permute.xlu0 %2511
      %2513 = vrot.lane.b32.xlu0 %v2442, 8
      %v2514 = vpop.permute.xlu0 %2513
      %2515 = vrot.lane.b32.xlu0 %v2445, 8
      %v2516 = vpop.permute.xlu0 %2515
      %2517 = vrot.lane.b32.xlu0 %v2447, 8
      %v2518 = vpop.permute.xlu0 %2517
      %2519 = vrot.lane.b32.xlu0 %v2450, 8
      %v2520 = vpop.permute.xlu0 %2519
      %2521 = vrot.lane.b32.xlu0 %v2452, 8
      %v2522 = vpop.permute.xlu0 %2521
      %2523 = vrot.lane.b32.xlu0 %v2455, 8
      %v2524 = vpop.permute.xlu0 %2523
      %2525 = vrot.lane.b32.xlu0 %v2457, 8
      %v2526 = vpop.permute.xlu0 %2525
      %2527 = vrot.lane.b32.xlu0 %v2460, 8
      %v2528 = vpop.permute.xlu0 %2527
      %2529 = vrot.lane.b32.xlu0 %v2462, 8
      %v2530 = vpop.permute.xlu0 %2529
      %2531 = vrot.lane.b32.xlu0 %v2465, 8
      %v2532 = vpop.permute.xlu0 %2531
      %2533 = vrot.lane.b32.xlu0 %v2467, 8
      %v2534 = vpop.permute.xlu0 %2533
      %2535 = vrot.lane.b32.xlu0 %v2470, 8
      %v2536 = vpop.permute.xlu0 %2535
      %2537 = vrot.lane.b32.xlu0 %v2472, 8
      %v2538 = vpop.permute.xlu0 %2537
      %2539 = vrot.lane.b32.xlu0 %v2475, 8
      %v2540 = vpop.permute.xlu0 %2539
      %2541 = vrot.lane.b32.xlu0 %v2477, 8
      %v2542 = vpop.permute.xlu0 %2541
      %2543 = vrot.lane.b32.xlu0 %v2480, 8
      %v2544 = vpop.permute.xlu0 %2543
      %2545 = vrot.lane.b32.xlu0 %v2482, 8
      %v2546 = vpop.permute.xlu0 %2545
      %2547 = vrot.lane.b32.xlu0 %v2485, 8
      %v2548 = vpop.permute.xlu0 %2547
      %2549 = vrot.lane.b32.xlu0 %v2487, 8
      %v2550 = vpop.permute.xlu0 %2549
      %2551 = vrot.lane.b32.xlu0 %v2490, 8
      %v2552 = vpop.permute.xlu0 %2551
      %2553 = vrot.lane.b32.xlu0 %v2492, 8
      %v2554 = vpop.permute.xlu0 %2553
      %2555 = vrot.lane.b32.xlu0 %v2495, 8
      %v2556 = vpop.permute.xlu0 %2555
      %2557 = vrot.lane.b32.xlu0 %v2497, 8
      %v2558 = vpop.permute.xlu0 %2557
      %2559 = vrot.lane.b32.xlu0 %v2500, 8
      %v2560 = vpop.permute.xlu0 %2559
      %2561 = vrot.lane.b32.xlu0 %v2502, 8
      %v2562 = vpop.permute.xlu0 %2561
      %vm2593 = vcmask 1045504
      %v2594 = vrot.slane %v2365, 2
      %v2595 = vrot.slane %v2240, 2
      %v2596 = vsel %vm2593, %v2594, %v2595
      %v2597 = vrot.slane %v2381, 2
      %v2598 = vsel %vm2593, %v2595, %v2597
      %v2599 = vrot.slane %v2366, 2
      %v2600 = vrot.slane %v2243, 2
      %v2601 = vsel %vm2593, %v2599, %v2600
      %v2602 = vrot.slane %v2382, 2
      %v2603 = vsel %vm2593, %v2600, %v2602
      %v2604 = vrot.slane %v2367, 2
      %v2605 = vrot.slane %v2246, 2
      %v2606 = vsel %vm2593, %v2604, %v2605
      %v2607 = vrot.slane %v2383, 2
      %v2608 = vsel %vm2593, %v2605, %v2607
      %v2609 = vrot.slane %v2368, 2
      %v2610 = vrot.slane %v2249, 2
      %v2611 = vsel %vm2593, %v2609, %v2610
      %v2612 = vrot.slane %v2384, 2
      %v2613 = vsel %vm2593, %v2610, %v2612
      %v2614 = vrot.slane %v2369, 2
      %v2615 = vrot.slane %v2252, 2
      %v2616 = vsel %vm2593, %v2614, %v2615
      %v2617 = vrot.slane %v2385, 2
      %v2618 = vsel %vm2593, %v2615, %v2617
      %v2619 = vrot.slane %v2370, 2
      %v2620 = vrot.slane %v2255, 2
      %v2621 = vsel %vm2593, %v2619, %v2620
      %v2622 = vrot.slane %v2386, 2
      %v2623 = vsel %vm2593, %v2620, %v2622
      %v2624 = vrot.slane %v2371, 2
      %v2625 = vrot.slane %v2258, 2
      %v2626 = vsel %vm2593, %v2624, %v2625
      %v2627 = vrot.slane %v2387, 2
      %v2628 = vsel %vm2593, %v2625, %v2627
      %v2629 = vrot.slane %v2372, 2
      %v2630 = vrot.slane %v2261, 2
      %v2631 = vsel %vm2593, %v2629, %v2630
      %v2632 = vrot.slane %v2388, 2
      %v2633 = vsel %vm2593, %v2630, %v2632
      %v2634 = vrot.slane %v2373, 2
      %v2635 = vrot.slane %v2264, 2
      %v2636 = vsel %vm2593, %v2634, %v2635
      %v2637 = vrot.slane %v2389, 2
      %v2638 = vsel %vm2593, %v2635, %v2637
      %v2639 = vrot.slane %v2374, 2
      %v2640 = vrot.slane %v2267, 2
      %v2641 = vsel %vm2593, %v2639, %v2640
      %v2642 = vrot.slane %v2390, 2
      %v2643 = vsel %vm2593, %v2640, %v2642
      %v2644 = vrot.slane %v2375, 2
      %v2645 = vrot.slane %v2270, 2
      %v2646 = vsel %vm2593, %v2644, %v2645
      %v2647 = vrot.slane %v2391, 2
      %v2648 = vsel %vm2593, %v2645, %v2647
      %v2649 = vrot.slane %v2376, 2
      %v2650 = vrot.slane %v2273, 2
      %v2651 = vsel %vm2593, %v2649, %v2650
      %v2652 = vrot.slane %v2392, 2
      %v2653 = vsel %vm2593, %v2650, %v2652
      %v2654 = vrot.slane %v2377, 2
      %v2655 = vrot.slane %v2276, 2
      %v2656 = vsel %vm2593, %v2654, %v2655
      %v2657 = vrot.slane %v2393, 2
      %v2658 = vsel %vm2593, %v2655, %v2657
      %v2659 = vrot.slane %v2378, 2
      %v2660 = vrot.slane %v2279, 2
      %v2661 = vsel %vm2593, %v2659, %v2660
      %v2662 = vrot.slane %v2394, 2
      %v2663 = vsel %vm2593, %v2660, %v2662
      %v2664 = vrot.slane %v2379, 2
      %v2665 = vrot.slane %v2282, 2
      %v2666 = vsel %vm2593, %v2664, %v2665
      %v2667 = vrot.slane %v2395, 2
      %v2668 = vsel %vm2593, %v2665, %v2667
      %2669 = vrot.lane.b32.xlu0 %v2596, 16
      %v2670 = vpop.permute.xlu0 %2669
      %2671 = vrot.lane.b32.xlu0 %v2598, 16
      %v2672 = vpop.permute.xlu0 %2671
      %2673 = vrot.lane.b32.xlu0 %v2601, 16
      %v2674 = vpop.permute.xlu0 %2673
      %2675 = vrot.lane.b32.xlu0 %v2603, 16
      %v2676 = vpop.permute.xlu0 %2675
      %2677 = vrot.lane.b32.xlu0 %v2606, 16
      %v2678 = vpop.permute.xlu0 %2677
      %2679 = vrot.lane.b32.xlu0 %v2608, 16
      %v2680 = vpop.permute.xlu0 %2679
      %2681 = vrot.lane.b32.xlu0 %v2611, 16
      %v2682 = vpop.permute.xlu0 %2681
      %2683 = vrot.lane.b32.xlu0 %v2613, 16
      %v2684 = vpop.permute.xlu0 %2683
      %2685 = vrot.lane.b32.xlu0 %v2616, 16
      %v2686 = vpop.permute.xlu0 %2685
      %2687 = vrot.lane.b32.xlu0 %v2618, 16
      %v2688 = vpop.permute.xlu0 %2687
      %2689 = vrot.lane.b32.xlu0 %v2621, 16
      %v2690 = vpop.permute.xlu0 %2689
      %2691 = vrot.lane.b32.xlu0 %v2623, 16
      %v2692 = vpop.permute.xlu0 %2691
      %2693 = vrot.lane.b32.xlu0 %v2626, 16
      %v2694 = vpop.permute.xlu0 %2693
      %2695 = vrot.lane.b32.xlu0 %v2628, 16
      %v2696 = vpop.permute.xlu0 %2695
      %2697 = vrot.lane.b32.xlu0 %v2631, 16
      %v2698 = vpop.permute.xlu0 %2697
      %2699 = vrot.lane.b32.xlu0 %v2633, 16
      %v2700 = vpop.permute.xlu0 %2699
      %2701 = vrot.lane.b32.xlu0 %v2636, 16
      %v2702 = vpop.permute.xlu0 %2701
      %2703 = vrot.lane.b32.xlu0 %v2638, 16
      %v2704 = vpop.permute.xlu0 %2703
      %2705 = vrot.lane.b32.xlu0 %v2641, 16
      %v2706 = vpop.permute.xlu0 %2705
      %2707 = vrot.lane.b32.xlu0 %v2643, 16
      %v2708 = vpop.permute.xlu0 %2707
      %2709 = vrot.lane.b32.xlu0 %v2646, 16
      %v2710 = vpop.permute.xlu0 %2709
      %2711 = vrot.lane.b32.xlu0 %v2648, 16
      %v2712 = vpop.permute.xlu0 %2711
      %2713 = vrot.lane.b32.xlu0 %v2651, 16
      %v2714 = vpop.permute.xlu0 %2713
      %2715 = vrot.lane.b32.xlu0 %v2653, 16
      %v2716 = vpop.permute.xlu0 %2715
      %2717 = vrot.lane.b32.xlu0 %v2656, 16
      %v2718 = vpop.permute.xlu0 %2717
      %2719 = vrot.lane.b32.xlu0 %v2658, 16
      %v2720 = vpop.permute.xlu0 %2719
      %2721 = vrot.lane.b32.xlu0 %v2661, 16
      %v2722 = vpop.permute.xlu0 %2721
      %2723 = vrot.lane.b32.xlu0 %v2663, 16
      %v2724 = vpop.permute.xlu0 %2723
      %2725 = vrot.lane.b32.xlu0 %v2666, 16
      %v2726 = vpop.permute.xlu0 %2725
      %2727 = vrot.lane.b32.xlu0 %v2668, 16
      %v2728 = vpop.permute.xlu0 %2727
      %2760 = vrot.lane.b32.xlu0 %v2366, 24
      %v2761 = vpop.permute.xlu0 %2760
      %2762 = vrot.lane.b32.xlu0 %v2243, 24
      %v2763 = vpop.permute.xlu0 %2762
      %2764 = vrot.lane.b32.xlu0 %v2365, 24
      %v2765 = vpop.permute.xlu0 %2764
      %2766 = vrot.lane.b32.xlu0 %v2240, 24
      %v2767 = vpop.permute.xlu0 %2766
      %2768 = vrot.lane.b32.xlu0 %v2367, 24
      %v2769 = vpop.permute.xlu0 %2768
      %2770 = vrot.lane.b32.xlu0 %v2246, 24
      %v2771 = vpop.permute.xlu0 %2770
      %2772 = vrot.lane.b32.xlu0 %v2368, 24
      %v2773 = vpop.permute.xlu0 %2772
      %2774 = vrot.lane.b32.xlu0 %v2249, 24
      %v2775 = vpop.permute.xlu0 %2774
      %2776 = vrot.lane.b32.xlu0 %v2369, 24
      %v2777 = vpop.permute.xlu0 %2776
      %2778 = vrot.lane.b32.xlu0 %v2252, 24
      %v2779 = vpop.permute.xlu0 %2778
      %2780 = vrot.lane.b32.xlu0 %v2370, 24
      %v2781 = vpop.permute.xlu0 %2780
      %2782 = vrot.lane.b32.xlu0 %v2255, 24
      %v2783 = vpop.permute.xlu0 %2782
      %2784 = vrot.lane.b32.xlu0 %v2371, 24
      %v2785 = vpop.permute.xlu0 %2784
      %2786 = vrot.lane.b32.xlu0 %v2258, 24
      %v2787 = vpop.permute.xlu0 %2786
      %2788 = vrot.lane.b32.xlu0 %v2372, 24
      %v2789 = vpop.permute.xlu0 %2788
      %2790 = vrot.lane.b32.xlu0 %v2261, 24
      %v2791 = vpop.permute.xlu0 %2790
      %2792 = vrot.lane.b32.xlu0 %v2373, 24
      %v2793 = vpop.permute.xlu0 %2792
      %2794 = vrot.lane.b32.xlu0 %v2264, 24
      %v2795 = vpop.permute.xlu0 %2794
      %2796 = vrot.lane.b32.xlu0 %v2374, 24
      %v2797 = vpop.permute.xlu0 %2796
      %2798 = vrot.lane.b32.xlu0 %v2267, 24
      %v2799 = vpop.permute.xlu0 %2798
      %2800 = vrot.lane.b32.xlu0 %v2375, 24
      %v2801 = vpop.permute.xlu0 %2800
      %2802 = vrot.lane.b32.xlu0 %v2270, 24
      %v2803 = vpop.permute.xlu0 %2802
      %2804 = vrot.lane.b32.xlu0 %v2376, 24
      %v2805 = vpop.permute.xlu0 %2804
      %2806 = vrot.lane.b32.xlu0 %v2273, 24
      %v2807 = vpop.permute.xlu0 %2806
      %2808 = vrot.lane.b32.xlu0 %v2377, 24
      %v2809 = vpop.permute.xlu0 %2808
      %2810 = vrot.lane.b32.xlu0 %v2276, 24
      %v2811 = vpop.permute.xlu0 %2810
      %2812 = vrot.lane.b32.xlu0 %v2378, 24
      %v2813 = vpop.permute.xlu0 %2812
      %2814 = vrot.lane.b32.xlu0 %v2279, 24
      %v2815 = vpop.permute.xlu0 %2814
      %2816 = vrot.lane.b32.xlu0 %v2379, 24
      %v2817 = vpop.permute.xlu0 %2816
      %2818 = vrot.lane.b32.xlu0 %v2282, 24
      %v2819 = vpop.permute.xlu0 %2818
      %2820 = vrot.lane.b32.xlu0 %v2380, 24
      %v2821 = vpop.permute.xlu0 %2820
      %2822 = vrot.lane.b32.xlu0 %v2285, 24
      %v2823 = vpop.permute.xlu0 %2822
      %v2857 = vrot.slane %v2380, 1
      %v2858 = vrot.slane %v2285, 1
      %v2859 = vsel %vm2427, %v2857, %v2858
      %v2860 = vrot.slane %v2396, 1
      %v2861 = vsel %vm2427, %v2858, %v2860
      %2862 = vrot.lane.b32.xlu0 %v2435, 32
      %v2863 = vpop.permute.xlu0 %2862
      %2864 = vrot.lane.b32.xlu0 %v2437, 32
      %v2865 = vpop.permute.xlu0 %2864
      %2866 = vrot.lane.b32.xlu0 %v2430, 32
      %v2867 = vpop.permute.xlu0 %2866
      %2868 = vrot.lane.b32.xlu0 %v2432, 32
      %v2869 = vpop.permute.xlu0 %2868
      %2870 = vrot.lane.b32.xlu0 %v2440, 32
      %v2871 = vpop.permute.xlu0 %2870
      %2872 = vrot.lane.b32.xlu0 %v2442, 32
      %v2873 = vpop.permute.xlu0 %2872
      %2874 = vrot.lane.b32.xlu0 %v2445, 32
      %v2875 = vpop.permute.xlu0 %2874
      %2876 = vrot.lane.b32.xlu0 %v2447, 32
      %v2877 = vpop.permute.xlu0 %2876
      %2878 = vrot.lane.b32.xlu0 %v2450, 32
      %v2879 = vpop.permute.xlu0 %2878
      %2880 = vrot.lane.b32.xlu0 %v2452, 32
      %v2881 = vpop.permute.xlu0 %2880
      %2882 = vrot.lane.b32.xlu0 %v2455, 32
      %v2883 = vpop.permute.xlu0 %2882
      %2884 = vrot.lane.b32.xlu0 %v2457, 32
      %v2885 = vpop.permute.xlu0 %2884
      %2886 = vrot.lane.b32.xlu0 %v2460, 32
      %v2887 = vpop.permute.xlu0 %2886
      %2888 = vrot.lane.b32.xlu0 %v2462, 32
      %v2889 = vpop.permute.xlu0 %2888
      %2890 = vrot.lane.b32.xlu0 %v2465, 32
      %v2891 = vpop.permute.xlu0 %2890
      %2892 = vrot.lane.b32.xlu0 %v2467, 32
      %v2893 = vpop.permute.xlu0 %2892
      %2894 = vrot.lane.b32.xlu0 %v2470, 32
      %v2895 = vpop.permute.xlu0 %2894
      %2896 = vrot.lane.b32.xlu0 %v2472, 32
      %v2897 = vpop.permute.xlu0 %2896
      %2898 = vrot.lane.b32.xlu0 %v2475, 32
      %v2899 = vpop.permute.xlu0 %2898
      %2900 = vrot.lane.b32.xlu0 %v2477, 32
      %v2901 = vpop.permute.xlu0 %2900
      %2902 = vrot.lane.b32.xlu0 %v2480, 32
      %v2903 = vpop.permute.xlu0 %2902
      %2904 = vrot.lane.b32.xlu0 %v2482, 32
      %v2905 = vpop.permute.xlu0 %2904
      %2906 = vrot.lane.b32.xlu0 %v2485, 32
      %v2907 = vpop.permute.xlu0 %2906
      %2908 = vrot.lane.b32.xlu0 %v2487, 32
      %v2909 = vpop.permute.xlu0 %2908
      %2910 = vrot.lane.b32.xlu0 %v2490, 32
      %v2911 = vpop.permute.xlu0 %2910
      %2912 = vrot.lane.b32.xlu0 %v2492, 32
      %v2913 = vpop.permute.xlu0 %2912
      %2914 = vrot.lane.b32.xlu0 %v2495, 32
      %v2915 = vpop.permute.xlu0 %2914
      %2916 = vrot.lane.b32.xlu0 %v2497, 32
      %v2917 = vpop.permute.xlu0 %2916
      %2918 = vrot.lane.b32.xlu0 %v2500, 32
      %v2919 = vpop.permute.xlu0 %2918
      %2920 = vrot.lane.b32.xlu0 %v2502, 32
      %v2921 = vpop.permute.xlu0 %2920
      %2922 = vrot.lane.b32.xlu0 %v2859, 32
      %v2923 = vpop.permute.xlu0 %2922
      %2924 = vrot.lane.b32.xlu0 %v2861, 32
      %v2925 = vpop.permute.xlu0 %2924
      %v2958 = vrot.slane %v2380, 2
      %v2959 = vrot.slane %v2285, 2
      %v2960 = vsel %vm2593, %v2958, %v2959
      %v2961 = vrot.slane %v2396, 2
      %v2962 = vsel %vm2593, %v2959, %v2961
      %2963 = vrot.lane.b32.xlu0 %v2601, 40
      %v2964 = vpop.permute.xlu0 %2963
      %2965 = vrot.lane.b32.xlu0 %v2603, 40
      %v2966 = vpop.permute.xlu0 %2965
      %2967 = vrot.lane.b32.xlu0 %v2596, 40
      %v2968 = vpop.permute.xlu0 %2967
      %2969 = vrot.lane.b32.xlu0 %v2598, 40
      %v2970 = vpop.permute.xlu0 %2969
      %2971 = vrot.lane.b32.xlu0 %v2606, 40
      %v2972 = vpop.permute.xlu0 %2971
      %2973 = vrot.lane.b32.xlu0 %v2608, 40
      %v2974 = vpop.permute.xlu0 %2973
      %2975 = vrot.lane.b32.xlu0 %v2611, 40
      %v2976 = vpop.permute.xlu0 %2975
      %2977 = vrot.lane.b32.xlu0 %v2613, 40
      %v2978 = vpop.permute.xlu0 %2977
      %2979 = vrot.lane.b32.xlu0 %v2616, 40
      %v2980 = vpop.permute.xlu0 %2979
      %2981 = vrot.lane.b32.xlu0 %v2618, 40
      %v2982 = vpop.permute.xlu0 %2981
      %2983 = vrot.lane.b32.xlu0 %v2621, 40
      %v2984 = vpop.permute.xlu0 %2983
      %2985 = vrot.lane.b32.xlu0 %v2623, 40
      %v2986 = vpop.permute.xlu0 %2985
      %2987 = vrot.lane.b32.xlu0 %v2626, 40
      %v2988 = vpop.permute.xlu0 %2987
      %2989 = vrot.lane.b32.xlu0 %v2628, 40
      %v2990 = vpop.permute.xlu0 %2989
      %2991 = vrot.lane.b32.xlu0 %v2631, 40
      %v2992 = vpop.permute.xlu0 %2991
      %2993 = vrot.lane.b32.xlu0 %v2633, 40
      %v2994 = vpop.permute.xlu0 %2993
      %2995 = vrot.lane.b32.xlu0 %v2636, 40
      %v2996 = vpop.permute.xlu0 %2995
      %2997 = vrot.lane.b32.xlu0 %v2638, 40
      %v2998 = vpop.permute.xlu0 %2997
      %2999 = vrot.lane.b32.xlu0 %v2641, 40
      %v3000 = vpop.permute.xlu0 %2999
      %3001 = vrot.lane.b32.xlu0 %v2643, 40
      %v3002 = vpop.permute.xlu0 %3001
      %3003 = vrot.lane.b32.xlu0 %v2646, 40
      %v3004 = vpop.permute.xlu0 %3003
      %3005 = vrot.lane.b32.xlu0 %v2648, 40
      %v3006 = vpop.permute.xlu0 %3005
      %3007 = vrot.lane.b32.xlu0 %v2651, 40
      %v3008 = vpop.permute.xlu0 %3007
      %3009 = vrot.lane.b32.xlu0 %v2653, 40
      %v3010 = vpop.permute.xlu0 %3009
      %3011 = vrot.lane.b32.xlu0 %v2656, 40
      %v3012 = vpop.permute.xlu0 %3011
      %3013 = vrot.lane.b32.xlu0 %v2658, 40
      %v3014 = vpop.permute.xlu0 %3013
      %3015 = vrot.lane.b32.xlu0 %v2661, 40
      %v3016 = vpop.permute.xlu0 %3015
      %3017 = vrot.lane.b32.xlu0 %v2663, 40
      %v3018 = vpop.permute.xlu0 %3017
      %3019 = vrot.lane.b32.xlu0 %v2666, 40
      %v3020 = vpop.permute.xlu0 %3019
      %3021 = vrot.lane.b32.xlu0 %v2668, 40
      %v3022 = vpop.permute.xlu0 %3021
      %3023 = vrot.lane.b32.xlu0 %v2960, 40
      %v3024 = vpop.permute.xlu0 %3023
      %3025 = vrot.lane.b32.xlu0 %v2962, 40
      %v3026 = vpop.permute.xlu0 %3025
      %3059 = vrot.lane.b32.xlu0 %v2365, 48
      %v3060 = vpop.permute.xlu0 %3059
      %3061 = vrot.lane.b32.xlu0 %v2240, 48
      %v3062 = vpop.permute.xlu0 %3061
      %3063 = vrot.lane.b32.xlu0 %v2367, 48
      %v3064 = vpop.permute.xlu0 %3063
      %3065 = vrot.lane.b32.xlu0 %v2246, 48
      %v3066 = vpop.permute.xlu0 %3065
      %3067 = vrot.lane.b32.xlu0 %v2368, 48
      %v3068 = vpop.permute.xlu0 %3067
      %3069 = vrot.lane.b32.xlu0 %v2249, 48
      %v3070 = vpop.permute.xlu0 %3069
      %3071 = vrot.lane.b32.xlu0 %v2369, 48
      %v3072 = vpop.permute.xlu0 %3071
      %3073 = vrot.lane.b32.xlu0 %v2252, 48
      %v3074 = vpop.permute.xlu0 %3073
      %3075 = vrot.lane.b32.xlu0 %v2370, 48
      %v3076 = vpop.permute.xlu0 %3075
      %3077 = vrot.lane.b32.xlu0 %v2255, 48
      %v3078 = vpop.permute.xlu0 %3077
      %3079 = vrot.lane.b32.xlu0 %v2371, 48
      %v3080 = vpop.permute.xlu0 %3079
      %3081 = vrot.lane.b32.xlu0 %v2258, 48
      %v3082 = vpop.permute.xlu0 %3081
      %3083 = vrot.lane.b32.xlu0 %v2372, 48
      %v3084 = vpop.permute.xlu0 %3083
      %3085 = vrot.lane.b32.xlu0 %v2261, 48
      %v3086 = vpop.permute.xlu0 %3085
      %3087 = vrot.lane.b32.xlu0 %v2373, 48
      %v3088 = vpop.permute.xlu0 %3087
      %3089 = vrot.lane.b32.xlu0 %v2264, 48
      %v3090 = vpop.permute.xlu0 %3089
      %3091 = vrot.lane.b32.xlu0 %v2374, 48
      %v3092 = vpop.permute.xlu0 %3091
      %3093 = vrot.lane.b32.xlu0 %v2267, 48
      %v3094 = vpop.permute.xlu0 %3093
      %3095 = vrot.lane.b32.xlu0 %v2375, 48
      %v3096 = vpop.permute.xlu0 %3095
      %3097 = vrot.lane.b32.xlu0 %v2270, 48
      %v3098 = vpop.permute.xlu0 %3097
      %3099 = vrot.lane.b32.xlu0 %v2376, 48
      %v3100 = vpop.permute.xlu0 %3099
      %3101 = vrot.lane.b32.xlu0 %v2273, 48
      %v3102 = vpop.permute.xlu0 %3101
      %3103 = vrot.lane.b32.xlu0 %v2377, 48
      %v3104 = vpop.permute.xlu0 %3103
      %3105 = vrot.lane.b32.xlu0 %v2276, 48
      %v3106 = vpop.permute.xlu0 %3105
      %3107 = vrot.lane.b32.xlu0 %v2378, 48
      %v3108 = vpop.permute.xlu0 %3107
      %3109 = vrot.lane.b32.xlu0 %v2279, 48
      %v3110 = vpop.permute.xlu0 %3109
      %3111 = vrot.lane.b32.xlu0 %v2379, 48
      %v3112 = vpop.permute.xlu0 %3111
      %3113 = vrot.lane.b32.xlu0 %v2282, 48
      %v3114 = vpop.permute.xlu0 %3113
      %3115 = vrot.lane.b32.xlu0 %v2380, 48
      %v3116 = vpop.permute.xlu0 %3115
      %3117 = vrot.lane.b32.xlu0 %v2285, 48
      %v3118 = vpop.permute.xlu0 %3117
      %3149 = vrot.lane.b32.xlu0 %v2430, 56
      %v3150 = vpop.permute.xlu0 %3149
      %3151 = vrot.lane.b32.xlu0 %v2432, 56
      %v3152 = vpop.permute.xlu0 %3151
      %3153 = vrot.lane.b32.xlu0 %v2440, 56
      %v3154 = vpop.permute.xlu0 %3153
      %3155 = vrot.lane.b32.xlu0 %v2442, 56
      %v3156 = vpop.permute.xlu0 %3155
      %3157 = vrot.lane.b32.xlu0 %v2445, 56
      %v3158 = vpop.permute.xlu0 %3157
      %3159 = vrot.lane.b32.xlu0 %v2447, 56
      %v3160 = vpop.permute.xlu0 %3159
      %3161 = vrot.lane.b32.xlu0 %v2450, 56
      %v3162 = vpop.permute.xlu0 %3161
      %3163 = vrot.lane.b32.xlu0 %v2452, 56
      %v3164 = vpop.permute.xlu0 %3163
      %3165 = vrot.lane.b32.xlu0 %v2455, 56
      %v3166 = vpop.permute.xlu0 %3165
      %3167 = vrot.lane.b32.xlu0 %v2457, 56
      %v3168 = vpop.permute.xlu0 %3167
      %3169 = vrot.lane.b32.xlu0 %v2460, 56
      %v3170 = vpop.permute.xlu0 %3169
      %3171 = vrot.lane.b32.xlu0 %v2462, 56
      %v3172 = vpop.permute.xlu0 %3171
      %3173 = vrot.lane.b32.xlu0 %v2465, 56
      %v3174 = vpop.permute.xlu0 %3173
      %3175 = vrot.lane.b32.xlu0 %v2467, 56
      %v3176 = vpop.permute.xlu0 %3175
      %3177 = vrot.lane.b32.xlu0 %v2470, 56
      %v3178 = vpop.permute.xlu0 %3177
      %3179 = vrot.lane.b32.xlu0 %v2472, 56
      %v3180 = vpop.permute.xlu0 %3179
      %3181 = vrot.lane.b32.xlu0 %v2475, 56
      %v3182 = vpop.permute.xlu0 %3181
      %3183 = vrot.lane.b32.xlu0 %v2477, 56
      %v3184 = vpop.permute.xlu0 %3183
      %3185 = vrot.lane.b32.xlu0 %v2480, 56
      %v3186 = vpop.permute.xlu0 %3185
      %3187 = vrot.lane.b32.xlu0 %v2482, 56
      %v3188 = vpop.permute.xlu0 %3187
      %3189 = vrot.lane.b32.xlu0 %v2485, 56
      %v3190 = vpop.permute.xlu0 %3189
      %3191 = vrot.lane.b32.xlu0 %v2487, 56
      %v3192 = vpop.permute.xlu0 %3191
      %3193 = vrot.lane.b32.xlu0 %v2490, 56
      %v3194 = vpop.permute.xlu0 %3193
      %3195 = vrot.lane.b32.xlu0 %v2492, 56
      %v3196 = vpop.permute.xlu0 %3195
      %3197 = vrot.lane.b32.xlu0 %v2495, 56
      %v3198 = vpop.permute.xlu0 %3197
      %3199 = vrot.lane.b32.xlu0 %v2497, 56
      %v3200 = vpop.permute.xlu0 %3199
      %3201 = vrot.lane.b32.xlu0 %v2500, 56
      %v3202 = vpop.permute.xlu0 %3201
      %3203 = vrot.lane.b32.xlu0 %v2502, 56
      %v3204 = vpop.permute.xlu0 %3203
      %3205 = vrot.lane.b32.xlu0 %v2859, 56
      %v3206 = vpop.permute.xlu0 %3205
      %3207 = vrot.lane.b32.xlu0 %v2861, 56
      %v3208 = vpop.permute.xlu0 %3207
      %3239 = vrot.lane.b32.xlu0 %v2596, 64
      %v3240 = vpop.permute.xlu0 %3239
      %3241 = vrot.lane.b32.xlu0 %v2598, 64
      %v3242 = vpop.permute.xlu0 %3241
      %3243 = vrot.lane.b32.xlu0 %v2606, 64
      %v3244 = vpop.permute.xlu0 %3243
      %3245 = vrot.lane.b32.xlu0 %v2608, 64
      %v3246 = vpop.permute.xlu0 %3245
      %3247 = vrot.lane.b32.xlu0 %v2611, 64
      %v3248 = vpop.permute.xlu0 %3247
      %3249 = vrot.lane.b32.xlu0 %v2613, 64
      %v3250 = vpop.permute.xlu0 %3249
      %3251 = vrot.lane.b32.xlu0 %v2616, 64
      %v3252 = vpop.permute.xlu0 %3251
      %3253 = vrot.lane.b32.xlu0 %v2618, 64
      %v3254 = vpop.permute.xlu0 %3253
      %3255 = vrot.lane.b32.xlu0 %v2621, 64
      %v3256 = vpop.permute.xlu0 %3255
      %3257 = vrot.lane.b32.xlu0 %v2623, 64
      %v3258 = vpop.permute.xlu0 %3257
      %3259 = vrot.lane.b32.xlu0 %v2626, 64
      %v3260 = vpop.permute.xlu0 %3259
      %3261 = vrot.lane.b32.xlu0 %v2628, 64
      %v3262 = vpop.permute.xlu0 %3261
      %3263 = vrot.lane.b32.xlu0 %v2631, 64
      %v3264 = vpop.permute.xlu0 %3263
      %3265 = vrot.lane.b32.xlu0 %v2633, 64
      %v3266 = vpop.permute.xlu0 %3265
      %3267 = vrot.lane.b32.xlu0 %v2636, 64
      %v3268 = vpop.permute.xlu0 %3267
      %3269 = vrot.lane.b32.xlu0 %v2638, 64
      %v3270 = vpop.permute.xlu0 %3269
      %3271 = vrot.lane.b32.xlu0 %v2641, 64
      %v3272 = vpop.permute.xlu0 %3271
      %3273 = vrot.lane.b32.xlu0 %v2643, 64
      %v3274 = vpop.permute.xlu0 %3273
      %3275 = vrot.lane.b32.xlu0 %v2646, 64
      %v3276 = vpop.permute.xlu0 %3275
      %3277 = vrot.lane.b32.xlu0 %v2648, 64
      %v3278 = vpop.permute.xlu0 %3277
      %3279 = vrot.lane.b32.xlu0 %v2651, 64
      %v3280 = vpop.permute.xlu0 %3279
      %3281 = vrot.lane.b32.xlu0 %v2653, 64
      %v3282 = vpop.permute.xlu0 %3281
      %3283 = vrot.lane.b32.xlu0 %v2656, 64
      %v3284 = vpop.permute.xlu0 %3283
      %3285 = vrot.lane.b32.xlu0 %v2658, 64
      %v3286 = vpop.permute.xlu0 %3285
      %3287 = vrot.lane.b32.xlu0 %v2661, 64
      %v3288 = vpop.permute.xlu0 %3287
      %3289 = vrot.lane.b32.xlu0 %v2663, 64
      %v3290 = vpop.permute.xlu0 %3289
      %3291 = vrot.lane.b32.xlu0 %v2666, 64
      %v3292 = vpop.permute.xlu0 %3291
      %3293 = vrot.lane.b32.xlu0 %v2668, 64
      %v3294 = vpop.permute.xlu0 %3293
      %3295 = vrot.lane.b32.xlu0 %v2960, 64
      %v3296 = vpop.permute.xlu0 %3295
      %3297 = vrot.lane.b32.xlu0 %v2962, 64
      %v3298 = vpop.permute.xlu0 %3297
      %v3329 = vsel %vm1572, %v2365, %v2504
      %v3330 = vsel %vm1572, %v2240, %v2506
      %v3331 = vsel %vm1572, %v2366, %v2508
      %v3332 = vsel %vm1572, %v2243, %v2510
      %v3333 = vsel %vm1572, %v2367, %v2512
      %v3334 = vsel %vm1572, %v2246, %v2514
      %v3335 = vsel %vm1572, %v2368, %v2516
      %v3336 = vsel %vm1572, %v2249, %v2518
      %v3337 = vsel %vm1572, %v2369, %v2520
      %v3338 = vsel %vm1572, %v2252, %v2522
      %v3339 = vsel %vm1572, %v2370, %v2524
      %v3340 = vsel %vm1572, %v2255, %v2526
      %v3341 = vsel %vm1572, %v2371, %v2528
      %v3342 = vsel %vm1572, %v2258, %v2530
      %v3343 = vsel %vm1572, %v2372, %v2532
      %v3344 = vsel %vm1572, %v2261, %v2534
      %v3345 = vsel %vm1572, %v2373, %v2536
      %v3346 = vsel %vm1572, %v2264, %v2538
      %v3347 = vsel %vm1572, %v2374, %v2540
      %v3348 = vsel %vm1572, %v2267, %v2542
      %v3349 = vsel %vm1572, %v2375, %v2544
      %v3350 = vsel %vm1572, %v2270, %v2546
      %v3351 = vsel %vm1572, %v2376, %v2548
      %v3352 = vsel %vm1572, %v2273, %v2550
      %v3353 = vsel %vm1572, %v2377, %v2552
      %v3354 = vsel %vm1572, %v2276, %v2554
      %v3355 = vsel %vm1572, %v2378, %v2556
      %v3356 = vsel %vm1572, %v2279, %v2558
      %v3357 = vsel %vm1572, %v2379, %v2560
      %v3358 = vsel %vm1572, %v2282, %v2562
      %v3359 = vsel %vm1638, %v3329, %v2670
      %v3360 = vsel %vm1638, %v3330, %v2672
      %v3361 = vsel %vm1638, %v3331, %v2674
      %v3362 = vsel %vm1638, %v3332, %v2676
      %v3363 = vsel %vm1638, %v3333, %v2678
      %v3364 = vsel %vm1638, %v3334, %v2680
      %v3365 = vsel %vm1638, %v3335, %v2682
      %v3366 = vsel %vm1638, %v3336, %v2684
      %v3367 = vsel %vm1638, %v3337, %v2686
      %v3368 = vsel %vm1638, %v3338, %v2688
      %v3369 = vsel %vm1638, %v3339, %v2690
      %v3370 = vsel %vm1638, %v3340, %v2692
      %v3371 = vsel %vm1638, %v3341, %v2694
      %v3372 = vsel %vm1638, %v3342, %v2696
      %v3373 = vsel %vm1638, %v3343, %v2698
      %v3374 = vsel %vm1638, %v3344, %v2700
      %v3375 = vsel %vm1638, %v3345, %v2702
      %v3376 = vsel %vm1638, %v3346, %v2704
      %v3377 = vsel %vm1638, %v3347, %v2706
      %v3378 = vsel %vm1638, %v3348, %v2708
      %v3379 = vsel %vm1638, %v3349, %v2710
      %v3380 = vsel %vm1638, %v3350, %v2712
      %v3381 = vsel %vm1638, %v3351, %v2714
      %v3382 = vsel %vm1638, %v3352, %v2716
      %v3383 = vsel %vm1638, %v3353, %v2718
      %v3384 = vsel %vm1638, %v3354, %v2720
      %v3385 = vsel %vm1638, %v3355, %v2722
      %v3386 = vsel %vm1638, %v3356, %v2724
      %v3387 = vsel %vm1638, %v3357, %v2726
      %v3388 = vsel %vm1638, %v3358, %v2728
      %v3389 = vsel %vm1704, %v3359, %v2761
      %v3390 = vsel %vm1704, %v3360, %v2763
      %v3391 = vsel %vm1704, %v3361, %v2765
      %v3392 = vsel %vm1704, %v3362, %v2767
      %v3393 = vsel %vm1704, %v3359, %v2769
      %v3394 = vsel %vm1704, %v3360, %v2771
      %v3395 = vsel %vm1704, %v3363, %v2773
      %v3396 = vsel %vm1704, %v3364, %v2775
      %v3397 = vsel %vm1704, %v3365, %v2777
      %v3398 = vsel %vm1704, %v3366, %v2779
      %v3399 = vsel %vm1704, %v3367, %v2781
      %v3400 = vsel %vm1704, %v3368, %v2783
      %v3401 = vsel %vm1704, %v3369, %v2785
      %v3402 = vsel %vm1704, %v3370, %v2787
      %v3403 = vsel %vm1704, %v3371, %v2789
      %v3404 = vsel %vm1704, %v3372, %v2791
      %v3405 = vsel %vm1704, %v3373, %v2793
      %v3406 = vsel %vm1704, %v3374, %v2795
      %v3407 = vsel %vm1704, %v3375, %v2797
      %v3408 = vsel %vm1704, %v3376, %v2799
      %v3409 = vsel %vm1704, %v3377, %v2801
      %v3410 = vsel %vm1704, %v3378, %v2803
      %v3411 = vsel %vm1704, %v3379, %v2805
      %v3412 = vsel %vm1704, %v3380, %v2807
      %v3413 = vsel %vm1704, %v3381, %v2809
      %v3414 = vsel %vm1704, %v3382, %v2811
      %v3415 = vsel %vm1704, %v3383, %v2813
      %v3416 = vsel %vm1704, %v3384, %v2815
      %v3417 = vsel %vm1704, %v3385, %v2817
      %v3418 = vsel %vm1704, %v3386, %v2819
      %v3419 = vsel %vm1704, %v3387, %v2821
      %v3420 = vsel %vm1704, %v3388, %v2823
      %v3421 = vsel %vm1770, %v3389, %v2863
      %v3422 = vsel %vm1770, %v3390, %v2865
      %v3423 = vsel %vm1770, %v3391, %v2867
      %v3424 = vsel %vm1770, %v3392, %v2869
      %v3425 = vsel %vm1770, %v3393, %v2871
      %v3426 = vsel %vm1770, %v3394, %v2873
      %v3427 = vsel %vm1770, %v3395, %v2875
      %v3428 = vsel %vm1770, %v3396, %v2877
      %v3429 = vsel %vm1770, %v3397, %v2879
      %v3430 = vsel %vm1770, %v3398, %v2881
      %v3431 = vsel %vm1770, %v3399, %v2883
      %v3432 = vsel %vm1770, %v3400, %v2885
      %v3433 = vsel %vm1770, %v3401, %v2887
      %v3434 = vsel %vm1770, %v3402, %v2889
      %v3435 = vsel %vm1770, %v3403, %v2891
      %v3436 = vsel %vm1770, %v3404, %v2893
      %v3437 = vsel %vm1770, %v3405, %v2895
      %v3438 = vsel %vm1770, %v3406, %v2897
      %v3439 = vsel %vm1770, %v3407, %v2899
      %v3440 = vsel %vm1770, %v3408, %v2901
      %v3441 = vsel %vm1770, %v3409, %v2903
      %v3442 = vsel %vm1770, %v3410, %v2905
      %v3443 = vsel %vm1770, %v3411, %v2907
      %v3444 = vsel %vm1770, %v3412, %v2909
      %v3445 = vsel %vm1770, %v3413, %v2911
      %v3446 = vsel %vm1770, %v3414, %v2913
      %v3447 = vsel %vm1770, %v3415, %v2915
      %v3448 = vsel %vm1770, %v3416, %v2917
      %v3449 = vsel %vm1770, %v3417, %v2919
      %v3450 = vsel %vm1770, %v3418, %v2921
      %v3451 = vsel %vm1770, %v3419, %v2923
      %v3452 = vsel %vm1770, %v3420, %v2925
      %vm3453 = vcmask 326656
      %v3454 = vsel %vm3453, %v3421, %v2964
      %v3455 = vsel %vm3453, %v3422, %v2966
      %v3456 = vsel %vm3453, %v3423, %v2968
      %v3457 = vsel %vm3453, %v3424, %v2970
      %v3458 = vsel %vm3453, %v3425, %v2972
      %v3459 = vsel %vm3453, %v3426, %v2974
      %v3460 = vsel %vm3453, %v3427, %v2976
      %v3461 = vsel %vm3453, %v3428, %v2978
      %v3462 = vsel %vm3453, %v3429, %v2980
      %v3463 = vsel %vm3453, %v3430, %v2982
      %v3464 = vsel %vm3453, %v3431, %v2984
      %v3465 = vsel %vm3453, %v3432, %v2986
      %v3466 = vsel %vm3453, %v3433, %v2988
      %v3467 = vsel %vm3453, %v3434, %v2990
      %v3468 = vsel %vm3453, %v3435, %v2992
      %v3469 = vsel %vm3453, %v3436, %v2994
      %v3470 = vsel %vm3453, %v3437, %v2996
      %v3471 = vsel %vm3453, %v3438, %v2998
      %v3472 = vsel %vm3453, %v3439, %v3000
      %v3473 = vsel %vm3453, %v3440, %v3002
      %v3474 = vsel %vm3453, %v3441, %v3004
      %v3475 = vsel %vm3453, %v3442, %v3006
      %v3476 = vsel %vm3453, %v3443, %v3008
      %v3477 = vsel %vm3453, %v3444, %v3010
      %v3478 = vsel %vm3453, %v3445, %v3012
      %v3479 = vsel %vm3453, %v3446, %v3014
      %v3480 = vsel %vm3453, %v3447, %v3016
      %v3481 = vsel %vm3453, %v3448, %v3018
      %v3482 = vsel %vm3453, %v3449, %v3020
      %v3483 = vsel %vm3453, %v3450, %v3022
      %v3484 = vsel %vm3453, %v3451, %v3024
      %v3485 = vsel %vm3453, %v3452, %v3026
      %vm3486 = vcmask 392192
      %v3487 = vsel %vm3486, %v3454, %v3060
      %v3488 = vsel %vm3486, %v3455, %v3062
      %v3489 = vsel %vm3486, %v3456, %v3064
      %v3490 = vsel %vm3486, %v3457, %v3066
      %v3491 = vsel %vm3486, %v3458, %v3068
      %v3492 = vsel %vm3486, %v3459, %v3070
      %v3493 = vsel %vm3486, %v3460, %v3072
      %v3494 = vsel %vm3486, %v3461, %v3074
      %v3495 = vsel %vm3486, %v3462, %v3076
      %v3496 = vsel %vm3486, %v3463, %v3078
      %v3497 = vsel %vm3486, %v3464, %v3080
      %v3498 = vsel %vm3486, %v3465, %v3082
      %v3499 = vsel %vm3486, %v3466, %v3084
      %v3500 = vsel %vm3486, %v3467, %v3086
      %v3501 = vsel %vm3486, %v3468, %v3088
      %v3502 = vsel %vm3486, %v3469, %v3090
      %v3503 = vsel %vm3486, %v3470, %v3092
      %v3504 = vsel %vm3486, %v3471, %v3094
      %v3505 = vsel %vm3486, %v3472, %v3096
      %v3506 = vsel %vm3486, %v3473, %v3098
      %v3507 = vsel %vm3486, %v3474, %v3100
      %v3508 = vsel %vm3486, %v3475, %v3102
      %v3509 = vsel %vm3486, %v3476, %v3104
      %v3510 = vsel %vm3486, %v3477, %v3106
      %v3511 = vsel %vm3486, %v3478, %v3108
      %v3512 = vsel %vm3486, %v3479, %v3110
      %v3513 = vsel %vm3486, %v3480, %v3112
      %v3514 = vsel %vm3486, %v3481, %v3114
      %v3515 = vsel %vm3486, %v3482, %v3116
      %v3516 = vsel %vm3486, %v3483, %v3118
      %v3517 = vsel %vm3486, %v3484, %v3112
      %v3518 = vsel %vm3486, %v3485, %v3114
      %vm3519 = vcmask 457728
      %v3520 = vsel %vm3519, %v3487, %v3150
      %v3521 = vsel %vm3519, %v3488, %v3152
      %v3522 = vsel %vm3519, %v3489, %v3154
      %v3523 = vsel %vm3519, %v3490, %v3156
      %v3524 = vsel %vm3519, %v3491, %v3158
      %v3525 = vsel %vm3519, %v3492, %v3160
      %v3526 = vsel %vm3519, %v3493, %v3162
      %v3527 = vsel %vm3519, %v3494, %v3164
      %v3528 = vsel %vm3519, %v3495, %v3166
      %v3529 = vsel %vm3519, %v3496, %v3168
      %v3530 = vsel %vm3519, %v3497, %v3170
      %v3531 = vsel %vm3519, %v3498, %v3172
      %v3532 = vsel %vm3519, %v3499, %v3174
      %v3533 = vsel %vm3519, %v3500, %v3176
      %v3534 = vsel %vm3519, %v3501, %v3178
      %v3535 = vsel %vm3519, %v3502, %v3180
      %v3536 = vsel %vm3519, %v3503, %v3182
      %v3537 = vsel %vm3519, %v3504, %v3184
      %v3538 = vsel %vm3519, %v3505, %v3186
      %v3539 = vsel %vm3519, %v3506, %v3188
      %v3540 = vsel %vm3519, %v3507, %v3190
      %v3541 = vsel %vm3519, %v3508, %v3192
      %v3542 = vsel %vm3519, %v3509, %v3194
      %v3543 = vsel %vm3519, %v3510, %v3196
      %v3544 = vsel %vm3519, %v3511, %v3198
      %v3545 = vsel %vm3519, %v3512, %v3200
      %v3546 = vsel %vm3519, %v3513, %v3202
      %v3547 = vsel %vm3519, %v3514, %v3204
      %v3548 = vsel %vm3519, %v3515, %v3206
      %v3549 = vsel %vm3519, %v3516, %v3208
      %v3550 = vsel %vm3519, %v3517, %v3202
      %v3551 = vsel %vm3519, %v3518, %v3204
      %vm3552 = vcmask 523264
      %v3553 = vsel %vm3552, %v3520, %v3240
      %v3554 = vsel %vm3552, %v3521, %v3242
      %v3555 = vsel %vm3552, %v3522, %v3244
      %v3556 = vsel %vm3552, %v3523, %v3246
      %v3557 = vsel %vm3552, %v3524, %v3248
      %v3558 = vsel %vm3552, %v3525, %v3250
      %v3559 = vsel %vm3552, %v3526, %v3252
      %v3560 = vsel %vm3552, %v3527, %v3254
      %v3561 = vsel %vm3552, %v3528, %v3256
      %v3562 = vsel %vm3552, %v3529, %v3258
      %v3563 = vsel %vm3552, %v3530, %v3260
      %v3564 = vsel %vm3552, %v3531, %v3262
      %v3565 = vsel %vm3552, %v3532, %v3264
      %v3566 = vsel %vm3552, %v3533, %v3266
      %v3567 = vsel %vm3552, %v3534, %v3268
      %v3568 = vsel %vm3552, %v3535, %v3270
      %v3569 = vsel %vm3552, %v3536, %v3272
      %v3570 = vsel %vm3552, %v3537, %v3274
      %v3571 = vsel %vm3552, %v3538, %v3276
      %v3572 = vsel %vm3552, %v3539, %v3278
      %v3573 = vsel %vm3552, %v3540, %v3280
      %v3574 = vsel %vm3552, %v3541, %v3282
      %v3575 = vsel %vm3552, %v3542, %v3284
      %v3576 = vsel %vm3552, %v3543, %v3286
      %v3577 = vsel %vm3552, %v3544, %v3288
      %v3578 = vsel %vm3552, %v3545, %v3290
      %v3579 = vsel %vm3552, %v3546, %v3292
      %v3580 = vsel %vm3552, %v3547, %v3294
      %v3581 = vsel %vm3552, %v3548, %v3296
      %v3582 = vsel %vm3552, %v3549, %v3298
      %v3583 = vsel %vm3552, %v3550, %v3292
      %v3584 = vsel %vm3552, %v3551, %v3294
      %v3585 = vld [vmem:[%s3] sm:$0xff]
      %v3586 = vld [vmem:[%s3 + $0x8] sm:$0xff]
      %v3587 = vld [vmem:[%s3 + $0x10] sm:$0xff]
      %v3588 = vld [vmem:[%s3 + $0x18] sm:$0xff]
      %v3589 = vld [vmem:[%s3 + $0x20] sm:$0xff]
      %v3590 = vld [vmem:[%s3 + $0x28] sm:$0xff]
      %v3591 = vld [vmem:[%s3 + $0x30] sm:$0xff]
      %v3592 = vld [vmem:[%s3 + $0x38] sm:$0xff]
      %v3593 = vld [vmem:[%s3 + $0x40] sm:$0xff]
      %v3594 = vld [vmem:[%s4] sm:$0x1]
      %v3596 = vlaneseq
      %v3597 = vshrl.u32 %v3596, 7
      %v3598 = vsub.s32 0, %v3597
      %v3599 = vrot.slane %v3594, %v3598
      %vm3601 = vcmask 588800
      %v3603 = vsel %vm3601, %v3553, 0
      %v3606 = vsel %vm3601, %v3554, 0
      %v3609 = vsel %vm3601, %v3555, 0
      %v3612 = vsel %vm3601, %v3556, 0
      %v3615 = vsel %vm3601, %v3557, 0
      %v3618 = vsel %vm3601, %v3558, 0
      %v3621 = vsel %vm3601, %v3559, 0
      %v3624 = vsel %vm3601, %v3560, 0
      %v3627 = vsel %vm3601, %v3561, 0
      %v3630 = vsel %vm3601, %v3562, 0
      %v3633 = vsel %vm3601, %v3563, 0
      %v3636 = vsel %vm3601, %v3564, 0
      %v3639 = vsel %vm3601, %v3565, 0
      %v3642 = vsel %vm3601, %v3566, 0
      %v3645 = vsel %vm3601, %v3567, 0
      %v3648 = vsel %vm3601, %v3568, 0
      %v3651 = vsel %vm3601, %v3569, 0
      %v3654 = vsel %vm3601, %v3570, 0
      %v3657 = vsel %vm3601, %v3571, 0
      %v3660 = vsel %vm3601, %v3572, 0
      %v3663 = vsel %vm3601, %v3573, 0
      %v3666 = vsel %vm3601, %v3574, 0
      %v3669 = vsel %vm3601, %v3575, 0
      %v3672 = vsel %vm3601, %v3576, 0
      %v3675 = vsel %vm3601, %v3577, 0
      %v3678 = vsel %vm3601, %v3578, 0
      %v3681 = vsel %vm3601, %v3579, 0
      %v3684 = vsel %vm3601, %v3580, 0
      %v3687 = vsel %vm3601, %v3581, 0
      %v3690 = vsel %vm3601, %v3582, 0
      %v3693 = vsel %vm3601, %v3583, 0
      %v3696 = vsel %vm3601, %v3584, 0
      %3698 = vmatprep.subr.mxu0 0.0
      %3699 = vmatpush1.msra.mxu0 0.0
      %3700 = vmatprep.subr.mxu0 0.0
      %3701 = vmatpush1.msra.mxu0 0.0
      %3702 = vmatprep.subr.mxu0 0.0
      %3703 = vmatpush1.msra.mxu0 0.0
      %3704 = vmatprep.subr.mxu0 0.0
      %3705 = vmatpush1.msra.mxu0 0.0
      %3706 = vmatprep.subr.mxu0 0.0
      %3707 = vmatpush1.msra.mxu0 0.0
      %3708 = vmatprep.subr.mxu0 0.0
      %3709 = vmatpush1.msra.mxu0 0.0
      %3710 = vmatprep.subr.mxu0 0.0
      %3711 = vmatpush1.msra.mxu0 0.0
      %3712 = vmatprep.subr.mxu0 0.0
      %3713 = vmatpush1.msra.mxu0 %v3593
      %3714 = vmatprep.subr.mxu0 0.0
      %3715 = vmatpush1.msra.mxu0 %v3592
      %3716 = vmatprep.subr.mxu0 0.0
      %3717 = vmatpush1.msra.mxu0 %v3591
      %3718 = vmatprep.subr.mxu0 0.0
      %3719 = vmatpush1.msra.mxu0 %v3590
      %3720 = vmatprep.subr.mxu0 0.0
      %3721 = vmatpush1.msra.mxu0 %v3589
      %3722 = vmatprep.subr.mxu0 0.0
      %3723 = vmatpush1.msra.mxu0 %v3588
      %3724 = vmatprep.subr.mxu0 0.0
      %3725 = vmatpush1.msra.mxu0 %v3587
      %3726 = vmatprep.subr.mxu0 0.0
      %3727 = vmatpush1.msra.mxu0 %v3586
      %3728 = vmatprep.subr.mxu0 0.0
      %3729 = vmatpush1.msra.mxu0 %v3585
      %3730 = vmatprep.subr.mxu0 0.0
      %3731 = vmatpush2.msra.mxu0 0.0
      %3732 = vmatprep.subr.mxu0 0.0
      %3733 = vmatpush2.msra.mxu0 0.0
      %3734 = vmatprep.subr.mxu0 0.0
      %3735 = vmatpush2.msra.mxu0 0.0
      %3736 = vmatprep.subr.mxu0 0.0
      %3737 = vmatpush2.msra.mxu0 0.0
      %3738 = vmatprep.subr.mxu0 0.0
      %3739 = vmatpush2.msra.mxu0 0.0
      %3740 = vmatprep.subr.mxu0 0.0
      %3741 = vmatpush2.msra.mxu0 0.0
      %3742 = vmatprep.subr.mxu0 0.0
      %3743 = vmatpush2.msra.mxu0 0.0
      %3744 = vmatprep.subr.mxu0 0.0
      %3745 = vmatpush2.msra.mxu0 0.0
      %3746 = vmatprep.subr.mxu0 0.0
      %3747 = vmatpush2.msra.mxu0 0.0
      %3748 = vmatprep.subr.mxu0 0.0
      %3749 = vmatpush2.msra.mxu0 0.0
      %3750 = vmatprep.subr.mxu0 0.0
      %3751 = vmatpush2.msra.mxu0 0.0
      %3752 = vmatprep.subr.mxu0 0.0
      %3753 = vmatpush2.msra.mxu0 0.0
      %3754 = vmatprep.subr.mxu0 0.0
      %3755 = vmatpush2.msra.mxu0 0.0
      %3756 = vmatprep.subr.mxu0 0.0
      %3757 = vmatpush2.msra.mxu0 0.0
      %3758 = vmatprep.subr.mxu0 0.0
      %3759 = vmatpush2.msra.mxu0 0.0
      %3760 = vmatprep.subr.mxu0 0.0
      %3761 = vmatpush2.msra.mxu0 0.0
      %3762 = vmatprep.mubr.f32.mxu0 0.0
      %3763 = vmatmul.mubr.f32.gmra.mxu0 %v3603
      %v3764 = vpop.f32.mrf.mxu0
      %v3765 = vadd.f32 %v3599, %v3764
      %v3766 = vpop.f32.mrf.mxu0
      %3767 = vmatprep.mubr.f32.mxu0 0.0
      %3768 = vmatmul.mubr.f32.gmra.mxu0 %v3606
      %v3769 = vpop.f32.mrf.mxu0
      %v3770 = vadd.f32 %v3599, %v3769
      %v3771 = vpop.f32.mrf.mxu0
      %3772 = vmatprep.mubr.f32.mxu0 0.0
      %3773 = vmatmul.mubr.f32.gmra.mxu0 %v3609
      %v3774 = vpop.f32.mrf.mxu0
      %v3775 = vadd.f32 %v3599, %v3774
      %v3776 = vpop.f32.mrf.mxu0
      %3777 = vmatprep.mubr.f32.mxu0 0.0
      %3778 = vmatmul.mubr.f32.gmra.mxu0 %v3612
      %v3779 = vpop.f32.mrf.mxu0
      %v3780 = vadd.f32 %v3599, %v3779
      %v3781 = vpop.f32.mrf.mxu0
      %3782 = vmatprep.mubr.f32.mxu0 0.0
      %3783 = vmatmul.mubr.f32.gmra.mxu0 %v3615
      %v3784 = vpop.f32.mrf.mxu0
      %v3785 = vadd.f32 %v3599, %v3784
      %v3786 = vpop.f32.mrf.mxu0
      %3787 = vmatprep.mubr.f32.mxu0 0.0
      %3788 = vmatmul.mubr.f32.gmra.mxu0 %v3618
      %v3789 = vpop.f32.mrf.mxu0
      %v3790 = vadd.f32 %v3599, %v3789
      %v3791 = vpop.f32.mrf.mxu0
      %3792 = vmatprep.mubr.f32.mxu0 0.0
      %3793 = vmatmul.mubr.f32.gmra.mxu0 %v3621
      %v3794 = vpop.f32.mrf.mxu0
      %v3795 = vadd.f32 %v3599, %v3794
      %v3796 = vpop.f32.mrf.mxu0
      %3797 = vmatprep.mubr.f32.mxu0 0.0
      %3798 = vmatmul.mubr.f32.gmra.mxu0 %v3624
      %v3799 = vpop.f32.mrf.mxu0
      %v3800 = vadd.f32 %v3599, %v3799
      %v3801 = vpop.f32.mrf.mxu0
      %3802 = vmatprep.mubr.f32.mxu0 0.0
      %3803 = vmatmul.mubr.f32.gmra.mxu0 %v3627
      %v3804 = vpop.f32.mrf.mxu0
      %v3805 = vadd.f32 %v3599, %v3804
      %v3806 = vpop.f32.mrf.mxu0
      %3807 = vmatprep.mubr.f32.mxu0 0.0
      %3808 = vmatmul.mubr.f32.gmra.mxu0 %v3630
      %v3809 = vpop.f32.mrf.mxu0
      %v3810 = vadd.f32 %v3599, %v3809
      %v3811 = vpop.f32.mrf.mxu0
      %3812 = vmatprep.mubr.f32.mxu0 0.0
      %3813 = vmatmul.mubr.f32.gmra.mxu0 %v3633
      %v3814 = vpop.f32.mrf.mxu0
      %v3815 = vadd.f32 %v3599, %v3814
      %v3816 = vpop.f32.mrf.mxu0
      %3817 = vmatprep.mubr.f32.mxu0 0.0
      %3818 = vmatmul.mubr.f32.gmra.mxu0 %v3636
      %v3819 = vpop.f32.mrf.mxu0
      %v3820 = vadd.f32 %v3599, %v3819
      %v3821 = vpop.f32.mrf.mxu0
      %3822 = vmatprep.mubr.f32.mxu0 0.0
      %3823 = vmatmul.mubr.f32.gmra.mxu0 %v3639
      %v3824 = vpop.f32.mrf.mxu0
      %v3825 = vadd.f32 %v3599, %v3824
      %v3826 = vpop.f32.mrf.mxu0
      %3827 = vmatprep.mubr.f32.mxu0 0.0
      %3828 = vmatmul.mubr.f32.gmra.mxu0 %v3642
      %v3829 = vpop.f32.mrf.mxu0
      %v3830 = vadd.f32 %v3599, %v3829
      %v3831 = vpop.f32.mrf.mxu0
      %3832 = vmatprep.mubr.f32.mxu0 0.0
      %3833 = vmatmul.mubr.f32.gmra.mxu0 %v3645
      %v3834 = vpop.f32.mrf.mxu0
      %v3835 = vadd.f32 %v3599, %v3834
      %v3836 = vpop.f32.mrf.mxu0
      %3837 = vmatprep.mubr.f32.mxu0 0.0
      %3838 = vmatmul.mubr.f32.gmra.mxu0 %v3648
      %v3839 = vpop.f32.mrf.mxu0
      %v3840 = vadd.f32 %v3599, %v3839
      %v3841 = vpop.f32.mrf.mxu0
      %3842 = vmatprep.mubr.f32.mxu0 0.0
      %3843 = vmatmul.mubr.f32.gmra.mxu0 %v3651
      %v3844 = vpop.f32.mrf.mxu0
      %v3845 = vadd.f32 %v3599, %v3844
      %v3846 = vpop.f32.mrf.mxu0
      %3847 = vmatprep.mubr.f32.mxu0 0.0
      %3848 = vmatmul.mubr.f32.gmra.mxu0 %v3654
      %v3849 = vpop.f32.mrf.mxu0
      %v3850 = vadd.f32 %v3599, %v3849
      %v3851 = vpop.f32.mrf.mxu0
      %3852 = vmatprep.mubr.f32.mxu0 0.0
      %3853 = vmatmul.mubr.f32.gmra.mxu0 %v3657
      %v3854 = vpop.f32.mrf.mxu0
      %v3855 = vadd.f32 %v3599, %v3854
      %v3856 = vpop.f32.mrf.mxu0
      %3857 = vmatprep.mubr.f32.mxu0 0.0
      %3858 = vmatmul.mubr.f32.gmra.mxu0 %v3660
      %v3859 = vpop.f32.mrf.mxu0
      %v3860 = vadd.f32 %v3599, %v3859
      %v3861 = vpop.f32.mrf.mxu0
      %3862 = vmatprep.mubr.f32.mxu0 0.0
      %3863 = vmatmul.mubr.f32.gmra.mxu0 %v3663
      %v3864 = vpop.f32.mrf.mxu0
      %v3865 = vadd.f32 %v3599, %v3864
      %v3866 = vpop.f32.mrf.mxu0
      %3867 = vmatprep.mubr.f32.mxu0 0.0
      %3868 = vmatmul.mubr.f32.gmra.mxu0 %v3666
      %v3869 = vpop.f32.mrf.mxu0
      %v3870 = vadd.f32 %v3599, %v3869
      %v3871 = vpop.f32.mrf.mxu0
      %3872 = vmatprep.mubr.f32.mxu0 0.0
      %3873 = vmatmul.mubr.f32.gmra.mxu0 %v3669
      %v3874 = vpop.f32.mrf.mxu0
      %v3875 = vadd.f32 %v3599, %v3874
      %v3876 = vpop.f32.mrf.mxu0
      %3877 = vmatprep.mubr.f32.mxu0 0.0
      %3878 = vmatmul.mubr.f32.gmra.mxu0 %v3672
      %v3879 = vpop.f32.mrf.mxu0
      %v3880 = vadd.f32 %v3599, %v3879
      %v3881 = vpop.f32.mrf.mxu0
      %3882 = vmatprep.mubr.f32.mxu0 0.0
      %3883 = vmatmul.mubr.f32.gmra.mxu0 %v3675
      %v3884 = vpop.f32.mrf.mxu0
      %v3885 = vadd.f32 %v3599, %v3884
      %v3886 = vpop.f32.mrf.mxu0
      %3887 = vmatprep.mubr.f32.mxu0 0.0
      %3888 = vmatmul.mubr.f32.gmra.mxu0 %v3678
      %v3889 = vpop.f32.mrf.mxu0
      %v3890 = vadd.f32 %v3599, %v3889
      %v3891 = vpop.f32.mrf.mxu0
      %3892 = vmatprep.mubr.f32.mxu0 0.0
      %3893 = vmatmul.mubr.f32.gmra.mxu0 %v3681
      %v3894 = vpop.f32.mrf.mxu0
      %v3895 = vadd.f32 %v3599, %v3894
      %v3896 = vpop.f32.mrf.mxu0
      %3897 = vmatprep.mubr.f32.mxu0 0.0
      %3898 = vmatmul.mubr.f32.gmra.mxu0 %v3684
      %v3899 = vpop.f32.mrf.mxu0
      %v3900 = vadd.f32 %v3599, %v3899
      %v3901 = vpop.f32.mrf.mxu0
      %3902 = vmatprep.mubr.f32.mxu0 0.0
      %3903 = vmatmul.mubr.f32.gmra.mxu0 %v3687
      %v3904 = vpop.f32.mrf.mxu0
      %v3905 = vadd.f32 %v3599, %v3904
      %v3906 = vpop.f32.mrf.mxu0
      %3907 = vmatprep.mubr.f32.mxu0 0.0
      %3908 = vmatmul.mubr.f32.gmra.mxu0 %v3690
      %v3909 = vpop.f32.mrf.mxu0
      %v3910 = vadd.f32 %v3599, %v3909
      %v3911 = vpop.f32.mrf.mxu0
      %3912 = vmatprep.mubr.f32.mxu0 0.0
      %3913 = vmatmul.mubr.f32.gmra.mxu0 %v3693
      %v3914 = vpop.f32.mrf.mxu0
      %v3915 = vadd.f32 %v3599, %v3914
      %v3916 = vpop.f32.mrf.mxu0
      %3917 = vmatprep.mubr.f32.mxu0 0.0
      %3918 = vmatmul.mubr.f32.gmra.mxu0 %v3696
      %v3919 = vpop.f32.mrf.mxu0
      %v3920 = vadd.f32 %v3599, %v3919
      %v3921 = vpop.f32.mrf.mxu0
      %3922 = vdwg.mxu0
      %v3923 = vadd.f32 %v3765, %v354
      %v3924 = vadd.f32 %v3770, %v355
      %v3925 = vadd.f32 %v3775, %v356
      %v3926 = vadd.f32 %v3780, %v357
      %v3927 = vadd.f32 %v3785, %v358
      %v3928 = vadd.f32 %v3790, %v359
      %v3929 = vadd.f32 %v3795, %v360
      %v3930 = vadd.f32 %v3800, %v361
      %v3931 = vadd.f32 %v3805, %v362
      %v3932 = vadd.f32 %v3810, %v363
      %v3933 = vadd.f32 %v3815, %v364
      %v3934 = vadd.f32 %v3820, %v365
      %v3935 = vadd.f32 %v3825, %v366
      %v3936 = vadd.f32 %v3830, %v367
      %v3937 = vadd.f32 %v3835, %v368
      %v3938 = vadd.f32 %v3840, %v369
      %v3939 = vadd.f32 %v3845, %v370
      %v3940 = vadd.f32 %v3850, %v371
      %v3941 = vadd.f32 %v3855, %v372
      %v3942 = vadd.f32 %v3860, %v373
      %v3943 = vadd.f32 %v3865, %v374
      %v3944 = vadd.f32 %v3870, %v375
      %v3945 = vadd.f32 %v3875, %v376
      %v3946 = vadd.f32 %v3880, %v377
      %v3947 = vadd.f32 %v3885, %v378
      %v3948 = vadd.f32 %v3890, %v379
      %v3949 = vadd.f32 %v3895, %v380
      %v3950 = vadd.f32 %v3900, %v381
      %v3951 = vadd.f32 %v3905, %v382
      %v3952 = vadd.f32 %v3910, %v383
      %v3953 = vadd.f32 %v3915, %v384
      %v3954 = vadd.f32 %v3920, %v385
      %v3955 = vmax.f32 %v3923, 0.0
      %v3956 = vmax.f32 %v3924, 0.0
      %v3957 = vmax.f32 %v3925, 0.0
      %v3958 = vmax.f32 %v3926, 0.0
      %v3959 = vmax.f32 %v3927, 0.0
      %v3960 = vmax.f32 %v3928, 0.0
      %v3961 = vmax.f32 %v3929, 0.0
      %v3962 = vmax.f32 %v3930, 0.0
      %v3963 = vmax.f32 %v3931, 0.0
      %v3964 = vmax.f32 %v3932, 0.0
      %v3965 = vmax.f32 %v3933, 0.0
      %v3966 = vmax.f32 %v3934, 0.0
      %v3967 = vmax.f32 %v3935, 0.0
      %v3968 = vmax.f32 %v3936, 0.0
      %v3969 = vmax.f32 %v3937, 0.0
      %v3970 = vmax.f32 %v3938, 0.0
      %v3971 = vmax.f32 %v3939, 0.0
      %v3972 = vmax.f32 %v3940, 0.0
      %v3973 = vmax.f32 %v3941, 0.0
      %v3974 = vmax.f32 %v3942, 0.0
      %v3975 = vmax.f32 %v3943, 0.0
      %v3976 = vmax.f32 %v3944, 0.0
      %v3977 = vmax.f32 %v3945, 0.0
      %v3978 = vmax.f32 %v3946, 0.0
      %v3979 = vmax.f32 %v3947, 0.0
      %v3980 = vmax.f32 %v3948, 0.0
      %v3981 = vmax.f32 %v3949, 0.0
      %v3982 = vmax.f32 %v3950, 0.0
      %v3983 = vmax.f32 %v3951, 0.0
      %v3984 = vmax.f32 %v3952, 0.0
      %v3985 = vmax.f32 %v3953, 0.0
      %v3986 = vmax.f32 %v3954, 0.0
      %3987 = vst.msk [vmem:[%s224] sm:$0xff] %vm1539, %v3955
      %3988 = vst.msk [vmem:[%s224 + $0x8] sm:$0xff] %vm1539, %v3956
      %3989 = vst.msk [vmem:[%s224 + $0x10] sm:$0xff] %vm1539, %v3957
      %3990 = vst.msk [vmem:[%s224 + $0x18] sm:$0xff] %vm1539, %v3958
      %3991 = vst.msk [vmem:[%s224 + $0x20] sm:$0xff] %vm1539, %v3959
      %3992 = vst.msk [vmem:[%s224 + $0x28] sm:$0xff] %vm1539, %v3960
      %3993 = vst.msk [vmem:[%s224 + $0x30] sm:$0xff] %vm1539, %v3961
      %3994 = vst.msk [vmem:[%s224 + $0x38] sm:$0xff] %vm1539, %v3962
      %3995 = vst.msk [vmem:[%s224 + $0x40] sm:$0xff] %vm1539, %v3963
      %3996 = vst.msk [vmem:[%s224 + $0x48] sm:$0xff] %vm1539, %v3964
      %3997 = vst.msk [vmem:[%s224 + $0x50] sm:$0xff] %vm1539, %v3965
      %3998 = vst.msk [vmem:[%s224 + $0x58] sm:$0xff] %vm1539, %v3966
      %3999 = vst.msk [vmem:[%s224 + $0x60] sm:$0xff] %vm1539, %v3967
      %4000 = vst.msk [vmem:[%s224 + $0x68] sm:$0xff] %vm1539, %v3968
      %4001 = vst.msk [vmem:[%s224 + $0x70] sm:$0xff] %vm1539, %v3969
      %4002 = vst.msk [vmem:[%s224 + $0x78] sm:$0xff] %vm1539, %v3970
      %4003 = vst.msk [vmem:[%s224 + $0x80] sm:$0xff] %vm1539, %v3971
      %4004 = vst.msk [vmem:[%s224 + $0x88] sm:$0xff] %vm1539, %v3972
      %4005 = vst.msk [vmem:[%s224 + $0x90] sm:$0xff] %vm1539, %v3973
      %4006 = vst.msk [vmem:[%s224 + $0x98] sm:$0xff] %vm1539, %v3974
      %4007 = vst.msk [vmem:[%s224 + $0xa0] sm:$0xff] %vm1539, %v3975
      %4008 = vst.msk [vmem:[%s224 + $0xa8] sm:$0xff] %vm1539, %v3976
      %4009 = vst.msk [vmem:[%s224 + $0xb0] sm:$0xff] %vm1539, %v3977
      %4010 = vst.msk [vmem:[%s224 + $0xb8] sm:$0xff] %vm1539, %v3978
      %4011 = vst.msk [vmem:[%s224 + $0xc0] sm:$0xff] %vm1539, %v3979
      %4012 = vst.msk [vmem:[%s224 + $0xc8] sm:$0xff] %vm1539, %v3980
      %4013 = vst.msk [vmem:[%s224 + $0xd0] sm:$0xff] %vm1539, %v3981
      %4014 = vst.msk [vmem:[%s224 + $0xd8] sm:$0xff] %vm1539, %v3982
      %4015 = vst.msk [vmem:[%s224 + $0xe0] sm:$0xff] %vm1539, %v3983
      %4016 = vst.msk [vmem:[%s224 + $0xe8] sm:$0xff] %vm1539, %v3984
      %4017 = vst.msk [vmem:[%s224 + $0xf0] sm:$0xff] %vm1539, %v3985
      %4018 = vst.msk [vmem:[%s224 + $0xf8] sm:$0xff] %vm1539, %v3986
      %p4019 = scmp.lt.s32.totalorder %s16, 1
      %s4020 = scalar_select %p4019, %s16, 1
      %s4021 = smul.addr %s4020, 32
      %s4022 = smul.addr %s4021, 8
      %s4023 = scalar_lea.vmem %s5, %s4022
      // Predicated region
      $region41: #{tpu_custom_call.1} parent=39 // pred_check
        %p4024 = pneg %p144
      $region42: #{tpu_custom_call.1} parent=39 // pred_check_branch
        %4026 = sbr.rel (%p4024) target = $region44
      $region43: #{tpu_custom_call.1} parent=39 // pred_region
        _
      $region44: #{tpu_custom_call.1} parent=39 // pred_fallthru
        _
    $region40: #{tpu_custom_call.1} parent=5 // pred_fallthru
      _
    %p4027 = scmp.le.s32.totalorder 2, %s11
    // Predicated region
    $region45: #{tpu_custom_call.1} parent=5 // pred_check
      %p4028 = pneg %p4027
    $region46: #{tpu_custom_call.1} parent=5 // pred_check_branch
      %4030 = sbr.rel (%p4028) target = $region48
    $region47: #{tpu_custom_call.1} parent=5 // pred_region
      %s4031 = ssub.s32 %s11, 2
      // Predicated region
      $region49: #{tpu_custom_call.1} parent=47 // pred_check
        %p4032 = pneg %p150
      $region50: #{tpu_custom_call.1} parent=47 // pred_check_branch
        %4034 = sbr.rel (%p4032) target = $region52
      $region51: #{tpu_custom_call.1} parent=47 // pred_region
        %p4035 = scmp.lt.s32.totalorder %s17, 1
        %s4036 = scalar_select %p4035, %s17, 1
        %s4037 = smul.addr %s4036, 32
        %s4038 = smul.addr %s4037, 8
        %s4039 = scalar_lea.vmem %s5, %s4038
      $region52: #{tpu_custom_call.1} parent=47 // pred_fallthru
        _
    $region48: #{tpu_custom_call.1} parent=5 // pred_fallthru
      _
  $region6: #{tpu_custom_call.1} parent=0 // loop_footer
    %s15 = sadd.s32 1, %s11
  $region7: #{tpu_custom_call.1} parent=0 // loop_footer_branch
    %10 = sbr.rel target = $region3
  $region8: #{tpu_custom_call.1} parent=0 // loop_exit
    _

</llo_original>
